<compile_context>
chip_gen: v7x
topology: tpu7x:2x2x1
jax: 0.10.0
libtpu: 0.0.40
codegen_flags: <defaults>
</compile_context>

<pallas_src>
import functools

import jax
import jax.numpy as jnp
from jax import lax
from jax.experimental import pallas as pl
from jax.experimental.pallas import tpu as pltpu

EPS = 1e-3   # BatchNorm2d eps
KH = 7       # kernel height
PAD_H = 3    # padding = (3, 0)


def _conv_bn_kernel(x_ref, w_ref, gamma_ref, beta_ref, o_ref, xim_ref, *,
                    w_stride, sample_cols, valid_cols, n_valid):
    """One C_out block: fused (7,1) conv (single MXU matmul) + training-mode BN."""
    c_in = x_ref.shape[0]
    cols = o_ref.shape[1]

    # ---- build the fused-tap operand once: [KH*C_in, cols] bf16 -------------
    # Row block kh holds x shifted by kh*W lanes (the (7,1) conv receptive field).
    for kh in range(KH):
        xim_ref[pl.ds(kh * c_in, c_in), :] = x_ref[:, pl.ds(kh * w_stride, cols)]

    # ---- conv: one MXU matmul, K = 7*C_in, f32 accumulation ------------------
    acc = jnp.dot(w_ref[...], xim_ref[...],
                  preferred_element_type=jnp.float32)          # [C_out_blk, cols] f32

    # ---- BN validity mask generated in-kernel (no extra input) ---------------
    col = lax.broadcasted_iota(jnp.int32, (1, cols), 1)
    if sample_cols < cols:                                     # N > 1: per-sample layout
        col = col % sample_cols
    mask = (col < valid_cols).astype(jnp.float32)              # [1, cols]

    # ---- BatchNorm2d (training mode) over the valid columns only -------------
    ym = acc * mask
    s1 = jnp.sum(ym, axis=1, keepdims=True)                    # sum(y)    [C_out_blk, 1]
    s2 = jnp.sum(ym * acc, axis=1, keepdims=True)              # sum(y*y)  [C_out_blk, 1]
    inv_n = 1.0 / float(n_valid)
    mean = s1 * inv_n
    var = s2 * inv_n - mean * mean
    inv_std = lax.rsqrt(var + EPS)

    scale = gamma_ref[...] * inv_std                            # [C_out_blk, 1]
    shift = beta_ref[...] - mean * scale                        # [C_out_blk, 1]
    o_ref[...] = acc * scale + shift                            # lane-dense store


@jax.jit
def conv2d_batchnorm(x, weight, gamma, beta):
    """x: [N, C_in, H, W] f32 (NCHW). weight: [C_out, C_in, 7, 1]. Returns NCHW f32."""
    n, c_in, h, w = x.shape
    c_out = weight.shape[0]

    hp = h + 2 * PAD_H                                  # padded rows (18)
    sample_cols = pl.cdiv(hp * w, 128) * 128            # per-sample lane block (256)
    valid_cols = h * w                                  # valid output cols / sample (144)
    tail_pad = pl.cdiv((KH - 1) * w, 128) * 128         # covers max shift overhang (128)
    cols_out = n * sample_cols
    cols_in = cols_out + tail_pad
    assert tail_pad >= (KH - 1) * w                      # last sample's overhang stays in-bounds

    # --- activation slab: [C_in, cols_in] bf16 ------------------------------
    if n == 1:
        # transpose is a free reshape; H pad + lane pad + tail pad fold into ONE pad.
        flat = x.reshape(c_in, h * w).astype(jnp.bfloat16)
        x2 = jnp.pad(flat, ((0, 0), (PAD_H * w, cols_in - valid_cols - PAD_H * w)))
    else:
        xt = jnp.transpose(x.astype(jnp.bfloat16), (1, 0, 2, 3)).reshape(c_in, n, h * w)
        x2 = jnp.pad(xt, ((0, 0), (0, 0),
                          (PAD_H * w, sample_cols - valid_cols - PAD_H * w)))
        x2 = jnp.pad(x2.reshape(c_in, cols_out), ((0, 0), (0, tail_pad)))

    # --- weights fused over taps: [C_out, KH*C_in] bf16 ----------------------
    # Layout must match the scratch (row kh*C_in + ci  <->  tap kh, channel ci).
    w2 = weight[:, :, :, 0].transpose(0, 2, 1).reshape(c_out, KH * c_in).astype(jnp.bfloat16)

    gamma2 = gamma.reshape(c_out, 1).astype(jnp.float32)
    beta2 = beta.reshape(c_out, 1).astype(jnp.float32)

    # --- grid over C_out: 2 blocks (v7x 2-TC, weight-DMA pipelining elsewhere) ---
    n_blocks = 2 if (c_out % 2 == 0) else 1
    co_blk = c_out // n_blocks

    kernel = functools.partial(
        _conv_bn_kernel, w_stride=w, sample_cols=sample_cols,
        valid_cols=valid_cols, n_valid=n * h * w)

    out_flat = pl.pallas_call(
        kernel,
        out_shape=jax.ShapeDtypeStruct((c_out, cols_out), jnp.float32),
        grid=(n_blocks,),
        in_specs=[
            pl.BlockSpec((c_in, cols_in), lambda j: (0, 0)),        # x slab (resident)
            pl.BlockSpec((co_blk, KH * c_in), lambda j: (j, 0)),    # fused weights
            pl.BlockSpec((co_blk, 1), lambda j: (j, 0)),            # gamma
            pl.BlockSpec((co_blk, 1), lambda j: (j, 0)),            # beta
        ],
        out_specs=pl.BlockSpec((co_blk, cols_out), lambda j: (j, 0)),
        scratch_shapes=[pltpu.VMEM((KH * c_in, cols_out), jnp.bfloat16)],
        compiler_params=pltpu.CompilerParams(dimension_semantics=("parallel",)),
    )(x2, w2, gamma2, beta2)

    # [C_out, N*sample_cols] -> [N, C_out, H, W]
    out = out_flat.reshape(c_out, n, sample_cols)[:, :, :valid_cols]
    return out.reshape(c_out, n, h, w).transpose(1, 0, 2, 3)


def reference(x, weight, gamma, beta):
    """Pure-JAX reference (lax conv + training-mode BN) for sanity checking."""
    y = jax.lax.conv_general_dilated(
        x, weight, window_strides=(1, 1), padding=((PAD_H, PAD_H), (0, 0)),
        dimension_numbers=("NCHW", "OIHW", "NCHW"))
    mean = jnp.mean(y, axis=(0, 2, 3), keepdims=True)
    var = jnp.mean(jnp.square(y - mean), axis=(0, 2, 3), keepdims=True)
    inv = jax.lax.rsqrt(var + EPS)
    return (y - mean) * inv * gamma.reshape(1, -1, 1, 1) + beta.reshape(1, -1, 1, 1)


if __name__ == "__main__":
    key = jax.random.PRNGKey(0)
    kx, kw, kg, kb = jax.random.split(key, 4)

    N, C_IN, C_OUT, H, W = 1, 192, 192, 12, 12   # shapes implied by the module

    x = jax.random.normal(kx, (N, C_IN, H, W), dtype=jnp.float32)
    weight = 0.05 * jax.random.normal(kw, (C_OUT, C_IN, KH, 1), dtype=jnp.float32)
    gamma = 1.0 + 0.1 * jax.random.normal(kg, (C_OUT,), dtype=jnp.float32)
    beta = 0.1 * jax.random.normal(kb, (C_OUT,), dtype=jnp.float32)

    out = jax.block_until_ready(conv2d_batchnorm(x, weight, gamma, beta))
    ref = jax.block_until_ready(reference(x, weight, gamma, beta))

    assert out.shape == (N, C_OUT, H, W)
    max_err = float(jnp.max(jnp.abs(out - ref)))
    assert max_err < 5e-2, f"max abs error too large: {max_err}"

    print("KERNEL_OK")
</pallas_src>

<mosaic_0001>
module attributes {stable_mosaic.version = 11 : i64} {
  func.func @_conv_bn_kernel(%arg0: i32, %arg1: memref<192x384xbf16, #tpu.memory_space<vmem>>, %arg2: memref<96x1344xbf16, #tpu.memory_space<vmem>>, %arg3: memref<96x1xf32, #tpu.memory_space<vmem>>, %arg4: memref<96x1xf32, #tpu.memory_space<vmem>>, %arg5: memref<96x256xf32, #tpu.memory_space<vmem>>, %arg6: memref<1344x256xbf16, #tpu.memory_space<vmem>>) attributes {dimension_semantics = [#tpu.dimension_semantics<parallel>], iteration_bounds = array<i64: 2>, scalar_prefetch = 0 : i64, scratch_operands = 1 : i64, tpu.core_type = #tpu.core_type<tc>, window_params = [{pipeline_mode = #tpu.pipeline_mode<synchronous>, transform_indices = @transform_0, window_bounds = array<i64: 192, 384>}, {transform_indices = @transform_1, window_bounds = array<i64: 96, 1344>}, {transform_indices = @transform_2, window_bounds = array<i64: 96, 1>}, {transform_indices = @transform_3, window_bounds = array<i64: 96, 1>}, {transform_indices = @transform_4, window_bounds = array<i64: 96, 256>}]} {
    %c0 = arith.constant 0 : index
    %c0_0 = arith.constant 0 : index
    %0 = vector.load %arg1[%c0, %c0_0] : memref<192x384xbf16, #tpu.memory_space<vmem>>, vector<192x256xbf16>
    %c0_1 = arith.constant 0 : index
    %c0_2 = arith.constant 0 : index
    %1 = vector.load %arg6[%c0_1, %c0_2] : memref<1344x256xbf16, #tpu.memory_space<vmem>>, vector<192x256xbf16>
    tpu.vector_store %arg6[%c0_1, %c0_2], %0 {strides = array<i32>} : memref<1344x256xbf16, #tpu.memory_space<vmem>>, vector<192x256xbf16>,
    %c0_3 = arith.constant 0 : index
    %c12 = arith.constant 12 : index
    %2 = vector.load %arg1[%c0_3, %c12] : memref<192x384xbf16, #tpu.memory_space<vmem>>, vector<192x256xbf16>
    %c192 = arith.constant 192 : index
    %c0_4 = arith.constant 0 : index
    %3 = vector.load %arg6[%c192, %c0_4] : memref<1344x256xbf16, #tpu.memory_space<vmem>>, vector<192x256xbf16>
    tpu.vector_store %arg6[%c192, %c0_4], %2 {strides = array<i32>} : memref<1344x256xbf16, #tpu.memory_space<vmem>>, vector<192x256xbf16>,
    %c0_5 = arith.constant 0 : index
    %c24 = arith.constant 24 : index
    %4 = vector.load %arg1[%c0_5, %c24] : memref<192x384xbf16, #tpu.memory_space<vmem>>, vector<192x256xbf16>
    %c384 = arith.constant 384 : index
    %c0_6 = arith.constant 0 : index
    %5 = vector.load %arg6[%c384, %c0_6] : memref<1344x256xbf16, #tpu.memory_space<vmem>>, vector<192x256xbf16>
    tpu.vector_store %arg6[%c384, %c0_6], %4 {strides = array<i32>} : memref<1344x256xbf16, #tpu.memory_space<vmem>>, vector<192x256xbf16>,
    %c0_7 = arith.constant 0 : index
    %c36 = arith.constant 36 : index
    %6 = vector.load %arg1[%c0_7, %c36] : memref<192x384xbf16, #tpu.memory_space<vmem>>, vector<192x256xbf16>
    %c576 = arith.constant 576 : index
    %c0_8 = arith.constant 0 : index
    %7 = vector.load %arg6[%c576, %c0_8] : memref<1344x256xbf16, #tpu.memory_space<vmem>>, vector<192x256xbf16>
    tpu.vector_store %arg6[%c576, %c0_8], %6 {strides = array<i32>} : memref<1344x256xbf16, #tpu.memory_space<vmem>>, vector<192x256xbf16>,
    %c0_9 = arith.constant 0 : index
    %c48 = arith.constant 48 : index
    %8 = vector.load %arg1[%c0_9, %c48] : memref<192x384xbf16, #tpu.memory_space<vmem>>, vector<192x256xbf16>
    %c768 = arith.constant 768 : index
    %c0_10 = arith.constant 0 : index
    %9 = vector.load %arg6[%c768, %c0_10] : memref<1344x256xbf16, #tpu.memory_space<vmem>>, vector<192x256xbf16>
    tpu.vector_store %arg6[%c768, %c0_10], %8 {strides = array<i32>} : memref<1344x256xbf16, #tpu.memory_space<vmem>>, vector<192x256xbf16>,
    %c0_11 = arith.constant 0 : index
    %c60 = arith.constant 60 : index
    %10 = vector.load %arg1[%c0_11, %c60] : memref<192x384xbf16, #tpu.memory_space<vmem>>, vector<192x256xbf16>
    %c960 = arith.constant 960 : index
    %c0_12 = arith.constant 0 : index
    %11 = vector.load %arg6[%c960, %c0_12] : memref<1344x256xbf16, #tpu.memory_space<vmem>>, vector<192x256xbf16>
    tpu.vector_store %arg6[%c960, %c0_12], %10 {strides = array<i32>} : memref<1344x256xbf16, #tpu.memory_space<vmem>>, vector<192x256xbf16>,
    %c0_13 = arith.constant 0 : index
    %c72 = arith.constant 72 : index
    %12 = vector.load %arg1[%c0_13, %c72] : memref<192x384xbf16, #tpu.memory_space<vmem>>, vector<192x256xbf16>
    %c1152 = arith.constant 1152 : index
    %c0_14 = arith.constant 0 : index
    %13 = vector.load %arg6[%c1152, %c0_14] : memref<1344x256xbf16, #tpu.memory_space<vmem>>, vector<192x256xbf16>
    tpu.vector_store %arg6[%c1152, %c0_14], %12 {strides = array<i32>} : memref<1344x256xbf16, #tpu.memory_space<vmem>>, vector<192x256xbf16>,
    %c0_15 = arith.constant 0 : index
    %c0_16 = arith.constant 0 : index
    %14 = vector.load %arg2[%c0_15, %c0_16] : memref<96x1344xbf16, #tpu.memory_space<vmem>>, vector<96x1344xbf16>
    %c0_17 = arith.constant 0 : index
    %c0_18 = arith.constant 0 : index
    %15 = vector.load %arg6[%c0_17, %c0_18] : memref<1344x256xbf16, #tpu.memory_space<vmem>>, vector<1344x256xbf16>
    %cst = arith.constant dense<0.000000e+00> : vector<96x256xf32>
    %16 = tpu.matmul %14, %15, %cst {dimension_numbers = #tpu.dot_dimension_numbers<[1], [0], [0], [1], [0, 0, 1, 1], [], []>} : vector<96x1344xbf16>, vector<1344x256xbf16>, vector<96x256xf32> -> vector<96x256xf32>
    %17 = tpu.iota {dimensions = array<i32: 1>} : vector<1x256xi32>
    %c144_i32 = arith.constant 144 : i32
    %18 = vector.broadcast %c144_i32 : i32 to vector<1x256xi32>
    %19 = arith.cmpi slt, %17, %18 : vector<1x256xi32>
    %20 = arith.extui %19 : vector<1x256xi1> to vector<1x256xi32>
    %21 = arith.sitofp %20 : vector<1x256xi32> to vector<1x256xf32>
    %22 = vector.broadcast %21 : vector<1x256xf32> to vector<96x256xf32>
    %23 = arith.mulf %16, %22 : vector<96x256xf32>
    %cst_19 = arith.constant dense<0.000000e+00> : vector<96xf32>
    %24 = vector.multi_reduction <add>, %23, %cst_19 [1] : vector<96x256xf32> to vector<96xf32>
    %25 = vector.shape_cast %24 : vector<96xf32> to vector<96x1xf32>
    %26 = arith.mulf %23, %16 : vector<96x256xf32>
    %cst_20 = arith.constant dense<0.000000e+00> : vector<96xf32>
    %27 = vector.multi_reduction <add>, %26, %cst_20 [1] : vector<96x256xf32> to vector<96xf32>
    %28 = vector.shape_cast %27 : vector<96xf32> to vector<96x1xf32>
    %cst_21 = arith.constant 0.0069444445 : f32
    %29 = vector.broadcast %cst_21 : f32 to vector<96x1xf32>
    %30 = arith.mulf %25, %29 : vector<96x1xf32>
    %cst_22 = arith.constant 0.0069444445 : f32
    %31 = vector.broadcast %cst_22 : f32 to vector<96x1xf32>
    %32 = arith.mulf %28, %31 : vector<96x1xf32>
    %33 = arith.mulf %30, %30 : vector<96x1xf32>
    %34 = arith.subf %32, %33 : vector<96x1xf32>
    %cst_23 = arith.constant 1.000000e-03 : f32
    %35 = vector.broadcast %cst_23 : f32 to vector<96x1xf32>
    %36 = arith.addf %34, %35 : vector<96x1xf32>
    %37 = math.rsqrt %36 : vector<96x1xf32>
    %c0_24 = arith.constant 0 : index
    %c0_25 = arith.constant 0 : index
    %38 = vector.load %arg3[%c0_24, %c0_25] : memref<96x1xf32, #tpu.memory_space<vmem>>, vector<96x1xf32>
    %39 = arith.mulf %38, %37 : vector<96x1xf32>
    %c0_26 = arith.constant 0 : index
    %c0_27 = arith.constant 0 : index
    %40 = vector.load %arg4[%c0_26, %c0_27] : memref<96x1xf32, #tpu.memory_space<vmem>>, vector<96x1xf32>
    %41 = arith.mulf %30, %39 : vector<96x1xf32>
    %42 = arith.subf %40, %41 : vector<96x1xf32>
    %43 = vector.broadcast %39 : vector<96x1xf32> to vector<96x256xf32>
    %44 = arith.mulf %16, %43 : vector<96x256xf32>
    %45 = vector.broadcast %42 : vector<96x1xf32> to vector<96x256xf32>
    %46 = arith.addf %44, %45 : vector<96x256xf32>
    %c0_28 = arith.constant 0 : index
    %c0_29 = arith.constant 0 : index
    %47 = vector.load %arg5[%c0_28, %c0_29] : memref<96x256xf32, #tpu.memory_space<vmem>>, vector<96x256xf32>
    tpu.vector_store %arg5[%c0_28, %c0_29], %46 {strides = array<i32>} : memref<96x256xf32, #tpu.memory_space<vmem>>, vector<96x256xf32>,
    return
  }
  func.func @transform_0(%arg0: i32) -> (i32, i32) {
    %c0_i32 = arith.constant 0 : i32
    %c0_i32_0 = arith.constant 0 : i32
    %c0_i32_1 = arith.constant 0 : i32
    return %c0_i32, %c0_i32_0 : i32, i32
  }
  func.func @transform_1(%arg0: i32) -> (i32, i32) {
    %c0_i32 = arith.constant 0 : i32
    %c0_i32_0 = arith.constant 0 : i32
    return %arg0, %c0_i32 : i32, i32
  }
  func.func @transform_2(%arg0: i32) -> (i32, i32) {
    %c0_i32 = arith.constant 0 : i32
    %c0_i32_0 = arith.constant 0 : i32
    return %arg0, %c0_i32 : i32, i32
  }
  func.func @transform_3(%arg0: i32) -> (i32, i32) {
    %c0_i32 = arith.constant 0 : i32
    %c0_i32_0 = arith.constant 0 : i32
    return %arg0, %c0_i32 : i32, i32
  }
  func.func @transform_4(%arg0: i32) -> (i32, i32) {
    %c0_i32 = arith.constant 0 : i32
    %c0_i32_0 = arith.constant 0 : i32
    return %arg0, %c0_i32 : i32, i32
  }
}

</mosaic_0001>

<llo_original>
// kernel: conv2d_batchnorm.1
$region0: #{conv2d_batchnorm.1}
  #allocation0 [shape = 'u32[]', space=smem, size = 0x4, offset = 0x4, fixed_abs, tag = 'smem constant byte address 0x4 - core index']
  #allocation1 [shape = 'u32[144,128]{1,0:T(1,128)}', space=vmem, size = 0x12000, scoped, tag = 'internal scratch']
  #allocation2 [shape = 'bf16[1344,256]{1,0:T(16,128)(2,1)}', space=vmem, size = 0xa8000, scoped, tag = 'scratch operand']
  %s0 = inlined_call_operand.vmem [shape: bf16[192,384], index: 0, kind: input, shape index: {}]
  %s1 = inlined_call_operand.vmem [shape: bf16[192,1344], index: 1, kind: input, shape index: {}]
  %s2 = inlined_call_operand.vmem [shape: f32[192,1], index: 2, kind: input, shape index: {}]
  %s3 = inlined_call_operand.vmem [shape: f32[192,1], index: 3, kind: input, shape index: {}]
  %s4 = inlined_call_operand.vmem [shape: f32[192,256], index: 4, kind: output, shape index: {}]
  %s5 = sld [smem:[#allocation0]]
  $region49: #{conv2d_batchnorm.1} parent=0
    _
  %s7 = ssub.s32 1, %s5
  %s8 = scalar_select 0, %s7, %s5
  loop: start=0, step=1, limit=4
  $region2: #{conv2d_batchnorm.1} parent=0 // loop_pre_header
    _
  $region3: #{conv2d_batchnorm.1} parent=0 // loop_header
    %s10 = sphi 0, %s14
    %p11 = scmp.ge.s32.totalorder %s10, 4
    %s18 = sphi 0, %s18
    %s20 = sphi 0, %s18
    %s21 = sphi 0, %s20
    %s35 = sphi 0, %s21
    %s41 = sphi 0, %s43
    %s44 = sphi 0, %s41
    %s45 = sphi 0, %s44
    %s61 = sphi 0, %s45
    %s67 = sphi 0, %s69
    %s70 = sphi 0, %s67
    %s71 = sphi 0, %s70
    %s87 = sphi 0, %s71
    %s93 = sphi 0, %s95
    %s96 = sphi 0, %s93
    %s97 = sphi 0, %s96
    %s113 = sphi 0, %s97
    %s119 = sphi 0, %s121
    %s122 = sphi 0, %s119
    %s123 = sphi 0, %s122
    %s139 = sphi 0, %s123
  $region4: #{conv2d_batchnorm.1} parent=0 // loop_header_branch
    %13 = sbr.rel (%p11) target = $region8
  $region5: #{conv2d_batchnorm.1} parent=0 // loop_body
    %s15 = ssub.s32 %s10, 1
    %s16 = ssub.s32 %s10, 2
    %s17 = sadd.s32 %s10, 1
    %s19 = sadd.s32 %s18, 1
    %p22 = scmp.eq.s32.totalorder %s10, 1
    %p23 = scmp.ne.s32.totalorder %s18, %s20
    %p24 = scmp.eq.s32.totalorder %s10, 0
    %p25 = por %p23, %p24
    %p26 = scmp.ne.s32.totalorder %s18, %s20
    %p27 = scmp.eq.s32.totalorder %s15, 1
    %p28 = por %p26, %p27
    %p29 = scmp.ne.s32.totalorder %s20, %s21
    %p30 = scmp.eq.s32.totalorder %s15, 0
    %p31 = por %p29, %p30
    %p32 = scmp.ne.s32.totalorder %s20, %s21
    %p33 = scmp.eq.s32.totalorder %s16, 1
    %p34 = por %p32, %p33
    %p36 = scmp.ne.s32.totalorder %s21, %s35
    %p37 = scmp.eq.s32.totalorder %s16, 0
    %p38 = por %p36, %p37
    %s39 = ssub.s32 %s10, %s17
    %p40 = scmp.eq.s32.totalorder %s39, 0
    %s42 = sadd.s32 %s41, 1
    %s43 = scalar_select %p40, %s41, %s42
    %p46 = pneg %p40
    %p47 = scmp.eq.s32.totalorder %s10, 1
    %p48 = por %p46, %p47
    %p49 = scmp.ne.s32.totalorder %s41, %s44
    %p50 = scmp.eq.s32.totalorder %s10, 0
    %p51 = por %p49, %p50
    %p52 = scmp.ne.s32.totalorder %s41, %s44
    %p53 = scmp.eq.s32.totalorder %s15, 1
    %p54 = por %p52, %p53
    %p55 = scmp.ne.s32.totalorder %s44, %s45
    %p56 = scmp.eq.s32.totalorder %s15, 0
    %p57 = por %p55, %p56
    %p58 = scmp.ne.s32.totalorder %s44, %s45
    %p59 = scmp.eq.s32.totalorder %s16, 1
    %p60 = por %p58, %p59
    %p62 = scmp.ne.s32.totalorder %s45, %s61
    %p63 = scmp.eq.s32.totalorder %s16, 0
    %p64 = por %p62, %p63
    %s65 = ssub.s32 %s10, %s17
    %p66 = scmp.eq.s32.totalorder %s65, 0
    %s68 = sadd.s32 %s67, 1
    %s69 = scalar_select %p66, %s67, %s68
    %p72 = pneg %p66
    %p73 = scmp.eq.s32.totalorder %s10, 1
    %p74 = por %p72, %p73
    %p75 = scmp.ne.s32.totalorder %s67, %s70
    %p76 = scmp.eq.s32.totalorder %s10, 0
    %p77 = por %p75, %p76
    %p78 = scmp.ne.s32.totalorder %s67, %s70
    %p79 = scmp.eq.s32.totalorder %s15, 1
    %p80 = por %p78, %p79
    %p81 = scmp.ne.s32.totalorder %s70, %s71
    %p82 = scmp.eq.s32.totalorder %s15, 0
    %p83 = por %p81, %p82
    %p84 = scmp.ne.s32.totalorder %s70, %s71
    %p85 = scmp.eq.s32.totalorder %s16, 1
    %p86 = por %p84, %p85
    %p88 = scmp.ne.s32.totalorder %s71, %s87
    %p89 = scmp.eq.s32.totalorder %s16, 0
    %p90 = por %p88, %p89
    %s91 = ssub.s32 %s10, %s17
    %p92 = scmp.eq.s32.totalorder %s91, 0
    %s94 = sadd.s32 %s93, 1
    %s95 = scalar_select %p92, %s93, %s94
    %p98 = pneg %p92
    %p99 = scmp.eq.s32.totalorder %s10, 1
    %p100 = por %p98, %p99
    %p101 = scmp.ne.s32.totalorder %s93, %s96
    %p102 = scmp.eq.s32.totalorder %s10, 0
    %p103 = por %p101, %p102
    %p104 = scmp.ne.s32.totalorder %s93, %s96
    %p105 = scmp.eq.s32.totalorder %s15, 1
    %p106 = por %p104, %p105
    %p107 = scmp.ne.s32.totalorder %s96, %s97
    %p108 = scmp.eq.s32.totalorder %s15, 0
    %p109 = por %p107, %p108
    %p110 = scmp.ne.s32.totalorder %s96, %s97
    %p111 = scmp.eq.s32.totalorder %s16, 1
    %p112 = por %p110, %p111
    %p114 = scmp.ne.s32.totalorder %s97, %s113
    %p115 = scmp.eq.s32.totalorder %s16, 0
    %p116 = por %p114, %p115
    %s117 = ssub.s32 %s10, %s17
    %p118 = scmp.eq.s32.totalorder %s117, 0
    %s120 = sadd.s32 %s119, 1
    %s121 = scalar_select %p118, %s119, %s120
    %p124 = pneg %p118
    %p125 = scmp.eq.s32.totalorder %s10, 1
    %p126 = por %p124, %p125
    %p127 = scmp.ne.s32.totalorder %s119, %s122
    %p128 = scmp.eq.s32.totalorder %s10, 0
    %p129 = por %p127, %p128
    %p130 = scmp.ne.s32.totalorder %s119, %s122
    %p131 = scmp.eq.s32.totalorder %s15, 1
    %p132 = por %p130, %p131
    %p133 = scmp.ne.s32.totalorder %s122, %s123
    %p134 = scmp.eq.s32.totalorder %s15, 0
    %p135 = por %p133, %p134
    %p136 = scmp.ne.s32.totalorder %s122, %s123
    %p137 = scmp.eq.s32.totalorder %s16, 1
    %p138 = por %p136, %p137
    %p140 = scmp.ne.s32.totalorder %s123, %s139
    %p141 = scmp.eq.s32.totalorder %s16, 0
    %p142 = por %p140, %p141
    %p143 = scmp.le.s32.totalorder 1, %s10
    %p144 = scmp.lt.s32.totalorder %s10, 3
    %p145 = pnand %p143, %p144
    %p146 = pneg %p145
    // Predicated region
    $region9: #{conv2d_batchnorm.1} parent=5 // pred_check
      _
    $region10: #{conv2d_batchnorm.1} parent=5 // pred_check_branch
      %148 = sbr.rel (%p145) target = $region12
    $region11: #{conv2d_batchnorm.1} parent=5 // pred_region
      %s149 = ssub.s32 %s10, 1
      // Predicated region
      $region13: #{conv2d_batchnorm.1} parent=11 // pred_check
        %p150 = pneg %p31
      $region14: #{conv2d_batchnorm.1} parent=11 // pred_check_branch
        %152 = sbr.rel (%p150) target = $region16
      $region15: #{conv2d_batchnorm.1} parent=11 // pred_region
        _
      $region16: #{conv2d_batchnorm.1} parent=11 // pred_fallthru
        _
    $region12: #{conv2d_batchnorm.1} parent=5 // pred_fallthru
      _
    %p153 = scmp.lt.s32.totalorder %s10, 2
    // Predicated region
    $region17: #{conv2d_batchnorm.1} parent=5 // pred_check
      %p154 = pneg %p153
    $region18: #{conv2d_batchnorm.1} parent=5 // pred_check_branch
      %156 = sbr.rel (%p154) target = $region20
    $region19: #{conv2d_batchnorm.1} parent=5 // pred_region
      // Predicated region
      $region21: #{conv2d_batchnorm.1} parent=19 // pred_check
        %p157 = pneg %p51
      $region22: #{conv2d_batchnorm.1} parent=19 // pred_check_branch
        %159 = sbr.rel (%p157) target = $region24
      $region23: #{conv2d_batchnorm.1} parent=19 // pred_region
        %s160 = smul.u32 12, %s10
        %p161 = scmp.lt.s32.totalorder %s160, 23
        %s162 = scalar_select %p161, %s160, 23
        %s163 = smul.addr %s162, 11
        %s164 = smul.addr %s163, 4
        %s165 = scalar_lea.vmem %s1, %s164
        %s166 = smul.u32 12, %s10
      $region24: #{conv2d_batchnorm.1} parent=19 // pred_fallthru
        _
      // Predicated region
      $region25: #{conv2d_batchnorm.1} parent=19 // pred_check
        %p167 = pneg %p77
      $region26: #{conv2d_batchnorm.1} parent=19 // pred_check_branch
        %169 = sbr.rel (%p167) target = $region28
      $region27: #{conv2d_batchnorm.1} parent=19 // pred_region
        %s170 = smul.u32 12, %s10
        %p171 = scmp.lt.s32.totalorder %s170, 23
        %s172 = scalar_select %p171, %s170, 23
        %s173 = smul.addr %s172, 8
        %s174 = scalar_lea.vmem %s2, %s173
        %s175 = smul.u32 12, %s10
      $region28: #{conv2d_batchnorm.1} parent=19 // pred_fallthru
        _
      // Predicated region
      $region29: #{conv2d_batchnorm.1} parent=19 // pred_check
        %p176 = pneg %p103
      $region30: #{conv2d_batchnorm.1} parent=19 // pred_check_branch
        %178 = sbr.rel (%p176) target = $region32
      $region31: #{conv2d_batchnorm.1} parent=19 // pred_region
        %s179 = smul.u32 12, %s10
        %p180 = scmp.lt.s32.totalorder %s179, 23
        %s181 = scalar_select %p180, %s179, 23
        %s182 = smul.addr %s181, 8
        %s183 = scalar_lea.vmem %s3, %s182
        %s184 = smul.u32 12, %s10
      $region32: #{conv2d_batchnorm.1} parent=19 // pred_fallthru
        _
    $region20: #{conv2d_batchnorm.1} parent=5 // pred_fallthru
      _
    %p185 = scmp.le.s32.totalorder 1, %s10
    %p186 = scmp.lt.s32.totalorder %s10, 3
    %p187 = pnand %p185, %p186
    %p188 = pneg %p187
    // Predicated region
    $region33: #{conv2d_batchnorm.1} parent=5 // pred_check
      _
    $region34: #{conv2d_batchnorm.1} parent=5 // pred_check_branch
      %190 = sbr.rel (%p187) target = $region36
    $region35: #{conv2d_batchnorm.1} parent=5 // pred_region
      %s191 = ssub.s32 %s10, 1
      %p192 = pneg %p31
      %p193 = pneg %p28
      %s194 = smul.u32 12, %s15
      %p195 = scmp.lt.s32.totalorder %s194, 23
      %s196 = scalar_select %p195, %s194, 23
      %s197 = smul.addr %s196, 11
      %s198 = smul.addr %s197, 4
      %s199 = scalar_lea.vmem %s1, %s198
      %p200 = pneg %p57
      %p201 = pneg %p54
      %s202 = smul.u32 12, %s15
      %p203 = scmp.lt.s32.totalorder %s202, 23
      %s204 = scalar_select %p203, %s202, 23
      %s205 = smul.addr %s204, 8
      %s206 = scalar_lea.vmem %s2, %s205
      %p207 = pneg %p83
      %p208 = pneg %p80
      %s209 = smul.u32 12, %s15
      %p210 = scmp.lt.s32.totalorder %s209, 23
      %s211 = scalar_select %p210, %s209, 23
      %s212 = smul.addr %s211, 8
      %s213 = scalar_lea.vmem %s3, %s212
      %p214 = pneg %p109
      %p215 = pneg %p106
      %p216 = pneg %p135
      %p217 = pneg %p132
      %s218 = smul.u32 12, %s15
      %p219 = scmp.lt.s32.totalorder %s218, 23
      %s220 = scalar_select %p219, %s218, 23
      %s221 = smul.addr %s220, 2
      %s222 = smul.addr %s221, 8
      %s223 = scalar_lea.vmem %s4, %s222
      %s224 = smul.u32 12, %s15
      %p225 = scmp.lt.s32.totalorder %s224, 23
      %s226 = scalar_select %p225, %s224, 23
      %s227 = smul.addr %s226, 11
      %s228 = smul.addr %s227, 4
      %s229 = scalar_lea.vmem %s1, %s228
      %s230 = smul.u32 12, %s15
      %s231 = smul.u32 12, %s15
      %p232 = scmp.lt.s32.totalorder %s231, 23
      %s233 = scalar_select %p232, %s231, 23
      %s234 = smul.addr %s233, 8
      %s235 = scalar_lea.vmem %s2, %s234
      %s236 = smul.u32 12, %s15
      %s237 = smul.u32 12, %s15
      %p238 = scmp.lt.s32.totalorder %s237, 23
      %s239 = scalar_select %p238, %s237, 23
      %s240 = smul.addr %s239, 8
      %s241 = scalar_lea.vmem %s3, %s240
      %s242 = smul.u32 12, %s15
      %s243 = smul.u32 12, %s15
      %p244 = scmp.lt.s32.totalorder %s243, 23
      %s245 = scalar_select %p244, %s243, 23
      %s246 = smul.addr %s245, 2
      %s247 = smul.addr %s246, 8
      %s248 = scalar_lea.vmem %s4, %s247
      %s249 = smul.u32 12, %s15
      %v251 = vld [vmem:[%s0] sm:$0xff]
      %v252 = vld [vmem:[%s0 + $0xc] sm:$0xff]
      %v253 = vld [vmem:[%s0 + $0x18] sm:$0xff]
      %v254 = vld [vmem:[%s0 + $0x24] sm:$0xff]
      %v255 = vld [vmem:[%s0 + $0x30] sm:$0xff]
      %v256 = vld [vmem:[%s0 + $0x3c] sm:$0xff]
      %v257 = vld [vmem:[%s0 + $0x48] sm:$0xff]
      %v258 = vld [vmem:[%s0 + $0x54] sm:$0xff]
      %v259 = vld [vmem:[%s0 + $0x60] sm:$0xff]
      %v260 = vld [vmem:[%s0 + $0x6c] sm:$0xff]
      %v261 = vld [vmem:[%s0 + $0x78] sm:$0xff]
      %v262 = vld [vmem:[%s0 + $0x84] sm:$0xff]
      %v263 = vld [vmem:[%s0 + $0x90] sm:$0xff]
      %v264 = vld [vmem:[%s0 + $0x9c] sm:$0xff]
      %v265 = vld [vmem:[%s0 + $0xa8] sm:$0xff]
      %v266 = vld [vmem:[%s0 + $0xb4] sm:$0xff]
      %v267 = vld [vmem:[%s0 + $0xc0] sm:$0xff]
      %v268 = vld [vmem:[%s0 + $0xcc] sm:$0xff]
      %v269 = vld [vmem:[%s0 + $0xd8] sm:$0xff]
      %v270 = vld [vmem:[%s0 + $0xe4] sm:$0xff]
      %v271 = vld [vmem:[%s0 + $0xf0] sm:$0xff]
      %v272 = vld [vmem:[%s0 + $0xfc] sm:$0xff]
      %v273 = vld [vmem:[%s0 + $0x108] sm:$0xff]
      %v274 = vld [vmem:[%s0 + $0x114] sm:$0xff]
      %v299 = vunpack.c.l.b16 %v251
      %v300 = vunpack.c.h.b16 %v251
      %v301 = vunpack.c.l.b16 %v252
      %v302 = vunpack.c.h.b16 %v252
      %v303 = vunpack.c.l.b16 %v253
      %v304 = vunpack.c.h.b16 %v253
      %v305 = vunpack.c.l.b16 %v254
      %v306 = vunpack.c.h.b16 %v254
      %v307 = vunpack.c.l.b16 %v255
      %v308 = vunpack.c.h.b16 %v255
      %v309 = vunpack.c.l.b16 %v256
      %v310 = vunpack.c.h.b16 %v256
      %v311 = vunpack.c.l.b16 %v257
      %v312 = vunpack.c.h.b16 %v257
      %v313 = vunpack.c.l.b16 %v258
      %v314 = vunpack.c.h.b16 %v258
      %v315 = vunpack.c.l.b16 %v259
      %v316 = vunpack.c.h.b16 %v259
      %v317 = vunpack.c.l.b16 %v260
      %v318 = vunpack.c.h.b16 %v260
      %v319 = vunpack.c.l.b16 %v261
      %v320 = vunpack.c.h.b16 %v261
      %v321 = vunpack.c.l.b16 %v262
      %v322 = vunpack.c.h.b16 %v262
      %v323 = vunpack.c.l.b16 %v263
      %v324 = vunpack.c.h.b16 %v263
      %v325 = vunpack.c.l.b16 %v264
      %v326 = vunpack.c.h.b16 %v264
      %v327 = vunpack.c.l.b16 %v265
      %v328 = vunpack.c.h.b16 %v265
      %v329 = vunpack.c.l.b16 %v266
      %v330 = vunpack.c.h.b16 %v266
      %v331 = vunpack.c.l.b16 %v267
      %v332 = vunpack.c.h.b16 %v267
      %v333 = vunpack.c.l.b16 %v268
      %v334 = vunpack.c.h.b16 %v268
      %v335 = vunpack.c.l.b16 %v269
      %v336 = vunpack.c.h.b16 %v269
      %v337 = vunpack.c.l.b16 %v270
      %v338 = vunpack.c.h.b16 %v270
      %v339 = vunpack.c.l.b16 %v271
      %v340 = vunpack.c.h.b16 %v271
      %v341 = vunpack.c.l.b16 %v272
      %v342 = vunpack.c.h.b16 %v272
      %v343 = vunpack.c.l.b16 %v273
      %v344 = vunpack.c.h.b16 %v273
      %v345 = vunpack.c.l.b16 %v274
      %v346 = vunpack.c.h.b16 %v274
      %v347 = vpack.c.b16 %v301, %v299
      %v348 = vpack.c.b16 %v302, %v300
      %v349 = vpack.c.b16 %v305, %v303
      %v350 = vpack.c.b16 %v306, %v304
      %v351 = vpack.c.b16 %v309, %v307
      %v352 = vpack.c.b16 %v310, %v308
      %v353 = vpack.c.b16 %v313, %v311
      %v354 = vpack.c.b16 %v314, %v312
      %v355 = vpack.c.b16 %v317, %v315
      %v356 = vpack.c.b16 %v318, %v316
      %v357 = vpack.c.b16 %v321, %v319
      %v358 = vpack.c.b16 %v322, %v320
      %v359 = vpack.c.b16 %v325, %v323
      %v360 = vpack.c.b16 %v326, %v324
      %v361 = vpack.c.b16 %v329, %v327
      %v362 = vpack.c.b16 %v330, %v328
      %v363 = vpack.c.b16 %v333, %v331
      %v364 = vpack.c.b16 %v334, %v332
      %v365 = vpack.c.b16 %v337, %v335
      %v366 = vpack.c.b16 %v338, %v336
      %v367 = vpack.c.b16 %v341, %v339
      %v368 = vpack.c.b16 %v342, %v340
      %v369 = vpack.c.b16 %v345, %v343
      %v370 = vpack.c.b16 %v346, %v344
      %395 = vst [vmem:[#allocation2] sm:$0xff] %v347
      %396 = vst [vmem:[#allocation2 + $0x8] sm:$0xff] %v348
      %397 = vst [vmem:[#allocation2 + $0x10] sm:$0xff] %v349
      %398 = vst [vmem:[#allocation2 + $0x18] sm:$0xff] %v350
      %399 = vst [vmem:[#allocation2 + $0x20] sm:$0xff] %v351
      %400 = vst [vmem:[#allocation2 + $0x28] sm:$0xff] %v352
      %401 = vst [vmem:[#allocation2 + $0x30] sm:$0xff] %v353
      %402 = vst [vmem:[#allocation2 + $0x38] sm:$0xff] %v354
      %403 = vst [vmem:[#allocation2 + $0x40] sm:$0xff] %v355
      %404 = vst [vmem:[#allocation2 + $0x48] sm:$0xff] %v356
      %405 = vst [vmem:[#allocation2 + $0x50] sm:$0xff] %v357
      %406 = vst [vmem:[#allocation2 + $0x58] sm:$0xff] %v358
      %407 = vst [vmem:[#allocation2 + $0x60] sm:$0xff] %v359
      %408 = vst [vmem:[#allocation2 + $0x68] sm:$0xff] %v360
      %409 = vst [vmem:[#allocation2 + $0x70] sm:$0xff] %v361
      %410 = vst [vmem:[#allocation2 + $0x78] sm:$0xff] %v362
      %411 = vst [vmem:[#allocation2 + $0x80] sm:$0xff] %v363
      %412 = vst [vmem:[#allocation2 + $0x88] sm:$0xff] %v364
      %413 = vst [vmem:[#allocation2 + $0x90] sm:$0xff] %v365
      %414 = vst [vmem:[#allocation2 + $0x98] sm:$0xff] %v366
      %415 = vst [vmem:[#allocation2 + $0xa0] sm:$0xff] %v367
      %416 = vst [vmem:[#allocation2 + $0xa8] sm:$0xff] %v368
      %417 = vst [vmem:[#allocation2 + $0xb0] sm:$0xff] %v369
      %418 = vst [vmem:[#allocation2 + $0xb8] sm:$0xff] %v370
      %v419 = vld [vmem:[%s0] sm:$0xff]
      %v420 = vld [vmem:[%s0 + $0x8] sm:$0xf]
      %v421 = vld [vmem:[%s0 + $0xc] sm:$0xff]
      %v422 = vld [vmem:[%s0 + $0x14] sm:$0xf]
      %v423 = vld [vmem:[%s0 + $0x18] sm:$0xff]
      %v424 = vld [vmem:[%s0 + $0x20] sm:$0xf]
      %v425 = vld [vmem:[%s0 + $0x24] sm:$0xff]
      %v426 = vld [vmem:[%s0 + $0x2c] sm:$0xf]
      %v427 = vld [vmem:[%s0 + $0x30] sm:$0xff]
      %v428 = vld [vmem:[%s0 + $0x38] sm:$0xf]
      %v429 = vld [vmem:[%s0 + $0x3c] sm:$0xff]
      %v430 = vld [vmem:[%s0 + $0x44] sm:$0xf]
      %v431 = vld [vmem:[%s0 + $0x48] sm:$0xff]
      %v432 = vld [vmem:[%s0 + $0x50] sm:$0xf]
      %v433 = vld [vmem:[%s0 + $0x54] sm:$0xff]
      %v434 = vld [vmem:[%s0 + $0x5c] sm:$0xf]
      %v435 = vld [vmem:[%s0 + $0x60] sm:$0xff]
      %v436 = vld [vmem:[%s0 + $0x68] sm:$0xf]
      %v437 = vld [vmem:[%s0 + $0x6c] sm:$0xff]
      %v438 = vld [vmem:[%s0 + $0x74] sm:$0xf]
      %v439 = vld [vmem:[%s0 + $0x78] sm:$0xff]
      %v440 = vld [vmem:[%s0 + $0x80] sm:$0xf]
      %v441 = vld [vmem:[%s0 + $0x84] sm:$0xff]
      %v442 = vld [vmem:[%s0 + $0x8c] sm:$0xf]
      %v443 = vld [vmem:[%s0 + $0x90] sm:$0xff]
      %v444 = vld [vmem:[%s0 + $0x98] sm:$0xf]
      %v445 = vld [vmem:[%s0 + $0x9c] sm:$0xff]
      %v446 = vld [vmem:[%s0 + $0xa4] sm:$0xf]
      %v447 = vld [vmem:[%s0 + $0xa8] sm:$0xff]
      %v448 = vld [vmem:[%s0 + $0xb0] sm:$0xf]
      %v449 = vld [vmem:[%s0 + $0xb4] sm:$0xff]
      %v450 = vld [vmem:[%s0 + $0xbc] sm:$0xf]
      %v451 = vld [vmem:[%s0 + $0xc0] sm:$0xff]
      %v452 = vld [vmem:[%s0 + $0xc8] sm:$0xf]
      %v453 = vld [vmem:[%s0 + $0xcc] sm:$0xff]
      %v454 = vld [vmem:[%s0 + $0xd4] sm:$0xf]
      %v455 = vld [vmem:[%s0 + $0xd8] sm:$0xff]
      %v456 = vld [vmem:[%s0 + $0xe0] sm:$0xf]
      %v457 = vld [vmem:[%s0 + $0xe4] sm:$0xff]
      %v458 = vld [vmem:[%s0 + $0xec] sm:$0xf]
      %v459 = vld [vmem:[%s0 + $0xf0] sm:$0xff]
      %v460 = vld [vmem:[%s0 + $0xf8] sm:$0xf]
      %v461 = vld [vmem:[%s0 + $0xfc] sm:$0xff]
      %v462 = vld [vmem:[%s0 + $0x104] sm:$0xf]
      %v463 = vld [vmem:[%s0 + $0x108] sm:$0xff]
      %v464 = vld [vmem:[%s0 + $0x110] sm:$0xf]
      %v465 = vld [vmem:[%s0 + $0x114] sm:$0xff]
      %v466 = vld [vmem:[%s0 + $0x11c] sm:$0xf]
      %v515 = vunpack.c.l.b16 %v419
      %v516 = vunpack.c.h.b16 %v419
      %v517 = vunpack.c.l.b16 %v420
      %v518 = vunpack.c.l.b16 %v421
      %v519 = vunpack.c.h.b16 %v421
      %v520 = vunpack.c.l.b16 %v422
      %v521 = vunpack.c.l.b16 %v423
      %v522 = vunpack.c.h.b16 %v423
      %v523 = vunpack.c.l.b16 %v424
      %v524 = vunpack.c.l.b16 %v425
      %v525 = vunpack.c.h.b16 %v425
      %v526 = vunpack.c.l.b16 %v426
      %v527 = vunpack.c.l.b16 %v427
      %v528 = vunpack.c.h.b16 %v427
      %v529 = vunpack.c.l.b16 %v428
      %v530 = vunpack.c.l.b16 %v429
      %v531 = vunpack.c.h.b16 %v429
      %v532 = vunpack.c.l.b16 %v430
      %v533 = vunpack.c.l.b16 %v431
      %v534 = vunpack.c.h.b16 %v431
      %v535 = vunpack.c.l.b16 %v432
      %v536 = vunpack.c.l.b16 %v433
      %v537 = vunpack.c.h.b16 %v433
      %v538 = vunpack.c.l.b16 %v434
      %v539 = vunpack.c.l.b16 %v435
      %v540 = vunpack.c.h.b16 %v435
      %v541 = vunpack.c.l.b16 %v436
      %v542 = vunpack.c.l.b16 %v437
      %v543 = vunpack.c.h.b16 %v437
      %v544 = vunpack.c.l.b16 %v438
      %v545 = vunpack.c.l.b16 %v439
      %v546 = vunpack.c.h.b16 %v439
      %v547 = vunpack.c.l.b16 %v440
      %v548 = vunpack.c.l.b16 %v441
      %v549 = vunpack.c.h.b16 %v441
      %v550 = vunpack.c.l.b16 %v442
      %v551 = vunpack.c.l.b16 %v443
      %v552 = vunpack.c.h.b16 %v443
      %v553 = vunpack.c.l.b16 %v444
      %v554 = vunpack.c.l.b16 %v445
      %v555 = vunpack.c.h.b16 %v445
      %v556 = vunpack.c.l.b16 %v446
      %v557 = vunpack.c.l.b16 %v447
      %v558 = vunpack.c.h.b16 %v447
      %v559 = vunpack.c.l.b16 %v448
      %v560 = vunpack.c.l.b16 %v449
      %v561 = vunpack.c.h.b16 %v449
      %v562 = vunpack.c.l.b16 %v450
      %v563 = vunpack.c.l.b16 %v451
      %v564 = vunpack.c.h.b16 %v451
      %v565 = vunpack.c.l.b16 %v452
      %v566 = vunpack.c.l.b16 %v453
      %v567 = vunpack.c.h.b16 %v453
      %v568 = vunpack.c.l.b16 %v454
      %v569 = vunpack.c.l.b16 %v455
      %v570 = vunpack.c.h.b16 %v455
      %v571 = vunpack.c.l.b16 %v456
      %v572 = vunpack.c.l.b16 %v457
      %v573 = vunpack.c.h.b16 %v457
      %v574 = vunpack.c.l.b16 %v458
      %v575 = vunpack.c.l.b16 %v459
      %v576 = vunpack.c.h.b16 %v459
      %v577 = vunpack.c.l.b16 %v460
      %v578 = vunpack.c.l.b16 %v461
      %v579 = vunpack.c.h.b16 %v461
      %v580 = vunpack.c.l.b16 %v462
      %v581 = vunpack.c.l.b16 %v463
      %v582 = vunpack.c.h.b16 %v463
      %v583 = vunpack.c.l.b16 %v464
      %v584 = vunpack.c.l.b16 %v465
      %v585 = vunpack.c.h.b16 %v465
      %v586 = vunpack.c.l.b16 %v466
      %v587 = vpack.c.b16 %v518, %v515
      %v588 = vpack.c.b16 %v519, %v516
      %v589 = vpack.c.b16 %v520, %v517
      %v590 = vpack.c.b16 %v524, %v521
      %v591 = vpack.c.b16 %v525, %v522
      %v592 = vpack.c.b16 %v526, %v523
      %v593 = vpack.c.b16 %v530, %v527
      %v594 = vpack.c.b16 %v531, %v528
      %v595 = vpack.c.b16 %v532, %v529
      %v596 = vpack.c.b16 %v536, %v533
      %v597 = vpack.c.b16 %v537, %v534
      %v598 = vpack.c.b16 %v538, %v535
      %v599 = vpack.c.b16 %v542, %v539
      %v600 = vpack.c.b16 %v543, %v540
      %v601 = vpack.c.b16 %v544, %v541
      %v602 = vpack.c.b16 %v548, %v545
      %v603 = vpack.c.b16 %v549, %v546
      %v604 = vpack.c.b16 %v550, %v547
      %v605 = vpack.c.b16 %v554, %v551
      %v606 = vpack.c.b16 %v555, %v552
      %v607 = vpack.c.b16 %v556, %v553
      %v608 = vpack.c.b16 %v560, %v557
      %v609 = vpack.c.b16 %v561, %v558
      %v610 = vpack.c.b16 %v562, %v559
      %v611 = vpack.c.b16 %v566, %v563
      %v612 = vpack.c.b16 %v567, %v564
      %v613 = vpack.c.b16 %v568, %v565
      %v614 = vpack.c.b16 %v572, %v569
      %v615 = vpack.c.b16 %v573, %v570
      %v616 = vpack.c.b16 %v574, %v571
      %v617 = vpack.c.b16 %v578, %v575
      %v618 = vpack.c.b16 %v579, %v576
      %v619 = vpack.c.b16 %v580, %v577
      %v620 = vpack.c.b16 %v584, %v581
      %v621 = vpack.c.b16 %v585, %v582
      %v622 = vpack.c.b16 %v586, %v583
      %623 = vrot.lane.b32.xlu0 %v587, 116
      %v624 = vpop.permute.xlu0 %623
      %625 = vrot.lane.b32.xlu0 %v588, 116
      %v626 = vpop.permute.xlu0 %625
      %627 = vrot.lane.b32.xlu0 %v589, 116
      %v628 = vpop.permute.xlu0 %627
      %629 = vrot.lane.b32.xlu0 %v590, 116
      %v630 = vpop.permute.xlu0 %629
      %631 = vrot.lane.b32.xlu0 %v591, 116
      %v632 = vpop.permute.xlu0 %631
      %633 = vrot.lane.b32.xlu0 %v592, 116
      %v634 = vpop.permute.xlu0 %633
      %635 = vrot.lane.b32.xlu0 %v593, 116
      %v636 = vpop.permute.xlu0 %635
      %637 = vrot.lane.b32.xlu0 %v594, 116
      %v638 = vpop.permute.xlu0 %637
      %639 = vrot.lane.b32.xlu0 %v595, 116
      %v640 = vpop.permute.xlu0 %639
      %641 = vrot.lane.b32.xlu0 %v596, 116
      %v642 = vpop.permute.xlu0 %641
      %643 = vrot.lane.b32.xlu0 %v597, 116
      %v644 = vpop.permute.xlu0 %643
      %645 = vrot.lane.b32.xlu0 %v598, 116
      %v646 = vpop.permute.xlu0 %645
      %647 = vrot.lane.b32.xlu0 %v599, 116
      %v648 = vpop.permute.xlu0 %647
      %649 = vrot.lane.b32.xlu0 %v600, 116
      %v650 = vpop.permute.xlu0 %649
      %651 = vrot.lane.b32.xlu0 %v601, 116
      %v652 = vpop.permute.xlu0 %651
      %653 = vrot.lane.b32.xlu0 %v602, 116
      %v654 = vpop.permute.xlu0 %653
      %655 = vrot.lane.b32.xlu0 %v603, 116
      %v656 = vpop.permute.xlu0 %655
      %657 = vrot.lane.b32.xlu0 %v604, 116
      %v658 = vpop.permute.xlu0 %657
      %659 = vrot.lane.b32.xlu0 %v605, 116
      %v660 = vpop.permute.xlu0 %659
      %661 = vrot.lane.b32.xlu0 %v606, 116
      %v662 = vpop.permute.xlu0 %661
      %663 = vrot.lane.b32.xlu0 %v607, 116
      %v664 = vpop.permute.xlu0 %663
      %665 = vrot.lane.b32.xlu0 %v608, 116
      %v666 = vpop.permute.xlu0 %665
      %667 = vrot.lane.b32.xlu0 %v609, 116
      %v668 = vpop.permute.xlu0 %667
      %669 = vrot.lane.b32.xlu0 %v610, 116
      %v670 = vpop.permute.xlu0 %669
      %671 = vrot.lane.b32.xlu0 %v611, 116
      %v672 = vpop.permute.xlu0 %671
      %673 = vrot.lane.b32.xlu0 %v612, 116
      %v674 = vpop.permute.xlu0 %673
      %675 = vrot.lane.b32.xlu0 %v613, 116
      %v676 = vpop.permute.xlu0 %675
      %677 = vrot.lane.b32.xlu0 %v614, 116
      %v678 = vpop.permute.xlu0 %677
      %679 = vrot.lane.b32.xlu0 %v615, 116
      %v680 = vpop.permute.xlu0 %679
      %681 = vrot.lane.b32.xlu0 %v616, 116
      %v682 = vpop.permute.xlu0 %681
      %683 = vrot.lane.b32.xlu0 %v617, 116
      %v684 = vpop.permute.xlu0 %683
      %685 = vrot.lane.b32.xlu0 %v618, 116
      %v686 = vpop.permute.xlu0 %685
      %687 = vrot.lane.b32.xlu0 %v619, 116
      %v688 = vpop.permute.xlu0 %687
      %689 = vrot.lane.b32.xlu0 %v620, 116
      %v690 = vpop.permute.xlu0 %689
      %691 = vrot.lane.b32.xlu0 %v621, 116
      %v692 = vpop.permute.xlu0 %691
      %693 = vrot.lane.b32.xlu0 %v622, 116
      %v694 = vpop.permute.xlu0 %693
      %vm695 = vcmask 949248
      %v696 = vsel %vm695, %v624, %v626
      %v697 = vsel %vm695, %v626, %v628
      %v698 = vsel %vm695, %v630, %v632
      %v699 = vsel %vm695, %v632, %v634
      %v700 = vsel %vm695, %v636, %v638
      %v701 = vsel %vm695, %v638, %v640
      %v702 = vsel %vm695, %v642, %v644
      %v703 = vsel %vm695, %v644, %v646
      %v704 = vsel %vm695, %v648, %v650
      %v705 = vsel %vm695, %v650, %v652
      %v706 = vsel %vm695, %v654, %v656
      %v707 = vsel %vm695, %v656, %v658
      %v708 = vsel %vm695, %v660, %v662
      %v709 = vsel %vm695, %v662, %v664
      %v710 = vsel %vm695, %v666, %v668
      %v711 = vsel %vm695, %v668, %v670
      %v712 = vsel %vm695, %v672, %v674
      %v713 = vsel %vm695, %v674, %v676
      %v714 = vsel %vm695, %v678, %v680
      %v715 = vsel %vm695, %v680, %v682
      %v716 = vsel %vm695, %v684, %v686
      %v717 = vsel %vm695, %v686, %v688
      %v718 = vsel %vm695, %v690, %v692
      %v719 = vsel %vm695, %v692, %v694
      %744 = vst [vmem:[#allocation2 + $0xc0] sm:$0xff] %v696
      %745 = vst [vmem:[#allocation2 + $0xc8] sm:$0xff] %v697
      %746 = vst [vmem:[#allocation2 + $0xd0] sm:$0xff] %v698
      %747 = vst [vmem:[#allocation2 + $0xd8] sm:$0xff] %v699
      %748 = vst [vmem:[#allocation2 + $0xe0] sm:$0xff] %v700
      %749 = vst [vmem:[#allocation2 + $0xe8] sm:$0xff] %v701
      %750 = vst [vmem:[#allocation2 + $0xf0] sm:$0xff] %v702
      %751 = vst [vmem:[#allocation2 + $0xf8] sm:$0xff] %v703
      %752 = vst [vmem:[#allocation2 + $0x100] sm:$0xff] %v704
      %753 = vst [vmem:[#allocation2 + $0x108] sm:$0xff] %v705
      %754 = vst [vmem:[#allocation2 + $0x110] sm:$0xff] %v706
      %755 = vst [vmem:[#allocation2 + $0x118] sm:$0xff] %v707
      %756 = vst [vmem:[#allocation2 + $0x120] sm:$0xff] %v708
      %757 = vst [vmem:[#allocation2 + $0x128] sm:$0xff] %v709
      %758 = vst [vmem:[#allocation2 + $0x130] sm:$0xff] %v710
      %759 = vst [vmem:[#allocation2 + $0x138] sm:$0xff] %v711
      %760 = vst [vmem:[#allocation2 + $0x140] sm:$0xff] %v712
      %761 = vst [vmem:[#allocation2 + $0x148] sm:$0xff] %v713
      %762 = vst [vmem:[#allocation2 + $0x150] sm:$0xff] %v714
      %763 = vst [vmem:[#allocation2 + $0x158] sm:$0xff] %v715
      %764 = vst [vmem:[#allocation2 + $0x160] sm:$0xff] %v716
      %765 = vst [vmem:[#allocation2 + $0x168] sm:$0xff] %v717
      %766 = vst [vmem:[#allocation2 + $0x170] sm:$0xff] %v718
      %767 = vst [vmem:[#allocation2 + $0x178] sm:$0xff] %v719
      %v768 = vld [vmem:[%s0] sm:$0xff]
      %v769 = vld [vmem:[%s0 + $0x8] sm:$0xf]
      %v770 = vld [vmem:[%s0 + $0xc] sm:$0xff]
      %v771 = vld [vmem:[%s0 + $0x14] sm:$0xf]
      %v772 = vld [vmem:[%s0 + $0x18] sm:$0xff]
      %v773 = vld [vmem:[%s0 + $0x20] sm:$0xf]
      %v774 = vld [vmem:[%s0 + $0x24] sm:$0xff]
      %v775 = vld [vmem:[%s0 + $0x2c] sm:$0xf]
      %v776 = vld [vmem:[%s0 + $0x30] sm:$0xff]
      %v777 = vld [vmem:[%s0 + $0x38] sm:$0xf]
      %v778 = vld [vmem:[%s0 + $0x3c] sm:$0xff]
      %v779 = vld [vmem:[%s0 + $0x44] sm:$0xf]
      %v780 = vld [vmem:[%s0 + $0x48] sm:$0xff]
      %v781 = vld [vmem:[%s0 + $0x50] sm:$0xf]
      %v782 = vld [vmem:[%s0 + $0x54] sm:$0xff]
      %v783 = vld [vmem:[%s0 + $0x5c] sm:$0xf]
      %v784 = vld [vmem:[%s0 + $0x60] sm:$0xff]
      %v785 = vld [vmem:[%s0 + $0x68] sm:$0xf]
      %v786 = vld [vmem:[%s0 + $0x6c] sm:$0xff]
      %v787 = vld [vmem:[%s0 + $0x74] sm:$0xf]
      %v788 = vld [vmem:[%s0 + $0x78] sm:$0xff]
      %v789 = vld [vmem:[%s0 + $0x80] sm:$0xf]
      %v790 = vld [vmem:[%s0 + $0x84] sm:$0xff]
      %v791 = vld [vmem:[%s0 + $0x8c] sm:$0xf]
      %v792 = vld [vmem:[%s0 + $0x90] sm:$0xff]
      %v793 = vld [vmem:[%s0 + $0x98] sm:$0xf]
      %v794 = vld [vmem:[%s0 + $0x9c] sm:$0xff]
      %v795 = vld [vmem:[%s0 + $0xa4] sm:$0xf]
      %v796 = vld [vmem:[%s0 + $0xa8] sm:$0xff]
      %v797 = vld [vmem:[%s0 + $0xb0] sm:$0xf]
      %v798 = vld [vmem:[%s0 + $0xb4] sm:$0xff]
      %v799 = vld [vmem:[%s0 + $0xbc] sm:$0xf]
      %v800 = vld [vmem:[%s0 + $0xc0] sm:$0xff]
      %v801 = vld [vmem:[%s0 + $0xc8] sm:$0xf]
      %v802 = vld [vmem:[%s0 + $0xcc] sm:$0xff]
      %v803 = vld [vmem:[%s0 + $0xd4] sm:$0xf]
      %v804 = vld [vmem:[%s0 + $0xd8] sm:$0xff]
      %v805 = vld [vmem:[%s0 + $0xe0] sm:$0xf]
      %v806 = vld [vmem:[%s0 + $0xe4] sm:$0xff]
      %v807 = vld [vmem:[%s0 + $0xec] sm:$0xf]
      %v808 = vld [vmem:[%s0 + $0xf0] sm:$0xff]
      %v809 = vld [vmem:[%s0 + $0xf8] sm:$0xf]
      %v810 = vld [vmem:[%s0 + $0xfc] sm:$0xff]
      %v811 = vld [vmem:[%s0 + $0x104] sm:$0xf]
      %v812 = vld [vmem:[%s0 + $0x108] sm:$0xff]
      %v813 = vld [vmem:[%s0 + $0x110] sm:$0xf]
      %v814 = vld [vmem:[%s0 + $0x114] sm:$0xff]
      %v815 = vld [vmem:[%s0 + $0x11c] sm:$0xf]
      %v864 = vunpack.c.l.b16 %v768
      %v865 = vunpack.c.h.b16 %v768
      %v866 = vunpack.c.l.b16 %v769
      %v867 = vunpack.c.l.b16 %v770
      %v868 = vunpack.c.h.b16 %v770
      %v869 = vunpack.c.l.b16 %v771
      %v870 = vunpack.c.l.b16 %v772
      %v871 = vunpack.c.h.b16 %v772
      %v872 = vunpack.c.l.b16 %v773
      %v873 = vunpack.c.l.b16 %v774
      %v874 = vunpack.c.h.b16 %v774
      %v875 = vunpack.c.l.b16 %v775
      %v876 = vunpack.c.l.b16 %v776
      %v877 = vunpack.c.h.b16 %v776
      %v878 = vunpack.c.l.b16 %v777
      %v879 = vunpack.c.l.b16 %v778
      %v880 = vunpack.c.h.b16 %v778
      %v881 = vunpack.c.l.b16 %v779
      %v882 = vunpack.c.l.b16 %v780
      %v883 = vunpack.c.h.b16 %v780
      %v884 = vunpack.c.l.b16 %v781
      %v885 = vunpack.c.l.b16 %v782
      %v886 = vunpack.c.h.b16 %v782
      %v887 = vunpack.c.l.b16 %v783
      %v888 = vunpack.c.l.b16 %v784
      %v889 = vunpack.c.h.b16 %v784
      %v890 = vunpack.c.l.b16 %v785
      %v891 = vunpack.c.l.b16 %v786
      %v892 = vunpack.c.h.b16 %v786
      %v893 = vunpack.c.l.b16 %v787
      %v894 = vunpack.c.l.b16 %v788
      %v895 = vunpack.c.h.b16 %v788
      %v896 = vunpack.c.l.b16 %v789
      %v897 = vunpack.c.l.b16 %v790
      %v898 = vunpack.c.h.b16 %v790
      %v899 = vunpack.c.l.b16 %v791
      %v900 = vunpack.c.l.b16 %v792
      %v901 = vunpack.c.h.b16 %v792
      %v902 = vunpack.c.l.b16 %v793
      %v903 = vunpack.c.l.b16 %v794
      %v904 = vunpack.c.h.b16 %v794
      %v905 = vunpack.c.l.b16 %v795
      %v906 = vunpack.c.l.b16 %v796
      %v907 = vunpack.c.h.b16 %v796
      %v908 = vunpack.c.l.b16 %v797
      %v909 = vunpack.c.l.b16 %v798
      %v910 = vunpack.c.h.b16 %v798
      %v911 = vunpack.c.l.b16 %v799
      %v912 = vunpack.c.l.b16 %v800
      %v913 = vunpack.c.h.b16 %v800
      %v914 = vunpack.c.l.b16 %v801
      %v915 = vunpack.c.l.b16 %v802
      %v916 = vunpack.c.h.b16 %v802
      %v917 = vunpack.c.l.b16 %v803
      %v918 = vunpack.c.l.b16 %v804
      %v919 = vunpack.c.h.b16 %v804
      %v920 = vunpack.c.l.b16 %v805
      %v921 = vunpack.c.l.b16 %v806
      %v922 = vunpack.c.h.b16 %v806
      %v923 = vunpack.c.l.b16 %v807
      %v924 = vunpack.c.l.b16 %v808
      %v925 = vunpack.c.h.b16 %v808
      %v926 = vunpack.c.l.b16 %v809
      %v927 = vunpack.c.l.b16 %v810
      %v928 = vunpack.c.h.b16 %v810
      %v929 = vunpack.c.l.b16 %v811
      %v930 = vunpack.c.l.b16 %v812
      %v931 = vunpack.c.h.b16 %v812
      %v932 = vunpack.c.l.b16 %v813
      %v933 = vunpack.c.l.b16 %v814
      %v934 = vunpack.c.h.b16 %v814
      %v935 = vunpack.c.l.b16 %v815
      %v936 = vpack.c.b16 %v867, %v864
      %v937 = vpack.c.b16 %v868, %v865
      %v938 = vpack.c.b16 %v869, %v866
      %v939 = vpack.c.b16 %v873, %v870
      %v940 = vpack.c.b16 %v874, %v871
      %v941 = vpack.c.b16 %v875, %v872
      %v942 = vpack.c.b16 %v879, %v876
      %v943 = vpack.c.b16 %v880, %v877
      %v944 = vpack.c.b16 %v881, %v878
      %v945 = vpack.c.b16 %v885, %v882
      %v946 = vpack.c.b16 %v886, %v883
      %v947 = vpack.c.b16 %v887, %v884
      %v948 = vpack.c.b16 %v891, %v888
      %v949 = vpack.c.b16 %v892, %v889
      %v950 = vpack.c.b16 %v893, %v890
      %v951 = vpack.c.b16 %v897, %v894
      %v952 = vpack.c.b16 %v898, %v895
      %v953 = vpack.c.b16 %v899, %v896
      %v954 = vpack.c.b16 %v903, %v900
      %v955 = vpack.c.b16 %v904, %v901
      %v956 = vpack.c.b16 %v905, %v902
      %v957 = vpack.c.b16 %v909, %v906
      %v958 = vpack.c.b16 %v910, %v907
      %v959 = vpack.c.b16 %v911, %v908
      %v960 = vpack.c.b16 %v915, %v912
      %v961 = vpack.c.b16 %v916, %v913
      %v962 = vpack.c.b16 %v917, %v914
      %v963 = vpack.c.b16 %v921, %v918
      %v964 = vpack.c.b16 %v922, %v919
      %v965 = vpack.c.b16 %v923, %v920
      %v966 = vpack.c.b16 %v927, %v924
      %v967 = vpack.c.b16 %v928, %v925
      %v968 = vpack.c.b16 %v929, %v926
      %v969 = vpack.c.b16 %v933, %v930
      %v970 = vpack.c.b16 %v934, %v931
      %v971 = vpack.c.b16 %v935, %v932
      %972 = vrot.lane.b32.xlu0 %v936, 104
      %v973 = vpop.permute.xlu0 %972
      %974 = vrot.lane.b32.xlu0 %v937, 104
      %v975 = vpop.permute.xlu0 %974
      %976 = vrot.lane.b32.xlu0 %v938, 104
      %v977 = vpop.permute.xlu0 %976
      %978 = vrot.lane.b32.xlu0 %v939, 104
      %v979 = vpop.permute.xlu0 %978
      %980 = vrot.lane.b32.xlu0 %v940, 104
      %v981 = vpop.permute.xlu0 %980
      %982 = vrot.lane.b32.xlu0 %v941, 104
      %v983 = vpop.permute.xlu0 %982
      %984 = vrot.lane.b32.xlu0 %v942, 104
      %v985 = vpop.permute.xlu0 %984
      %986 = vrot.lane.b32.xlu0 %v943, 104
      %v987 = vpop.permute.xlu0 %986
      %988 = vrot.lane.b32.xlu0 %v944, 104
      %v989 = vpop.permute.xlu0 %988
      %990 = vrot.lane.b32.xlu0 %v945, 104
      %v991 = vpop.permute.xlu0 %990
      %992 = vrot.lane.b32.xlu0 %v946, 104
      %v993 = vpop.permute.xlu0 %992
      %994 = vrot.lane.b32.xlu0 %v947, 104
      %v995 = vpop.permute.xlu0 %994
      %996 = vrot.lane.b32.xlu0 %v948, 104
      %v997 = vpop.permute.xlu0 %996
      %998 = vrot.lane.b32.xlu0 %v949, 104
      %v999 = vpop.permute.xlu0 %998
      %1000 = vrot.lane.b32.xlu0 %v950, 104
      %v1001 = vpop.permute.xlu0 %1000
      %1002 = vrot.lane.b32.xlu0 %v951, 104
      %v1003 = vpop.permute.xlu0 %1002
      %1004 = vrot.lane.b32.xlu0 %v952, 104
      %v1005 = vpop.permute.xlu0 %1004
      %1006 = vrot.lane.b32.xlu0 %v953, 104
      %v1007 = vpop.permute.xlu0 %1006
      %1008 = vrot.lane.b32.xlu0 %v954, 104
      %v1009 = vpop.permute.xlu0 %1008
      %1010 = vrot.lane.b32.xlu0 %v955, 104
      %v1011 = vpop.permute.xlu0 %1010
      %1012 = vrot.lane.b32.xlu0 %v956, 104
      %v1013 = vpop.permute.xlu0 %1012
      %1014 = vrot.lane.b32.xlu0 %v957, 104
      %v1015 = vpop.permute.xlu0 %1014
      %1016 = vrot.lane.b32.xlu0 %v958, 104
      %v1017 = vpop.permute.xlu0 %1016
      %1018 = vrot.lane.b32.xlu0 %v959, 104
      %v1019 = vpop.permute.xlu0 %1018
      %1020 = vrot.lane.b32.xlu0 %v960, 104
      %v1021 = vpop.permute.xlu0 %1020
      %1022 = vrot.lane.b32.xlu0 %v961, 104
      %v1023 = vpop.permute.xlu0 %1022
      %1024 = vrot.lane.b32.xlu0 %v962, 104
      %v1025 = vpop.permute.xlu0 %1024
      %1026 = vrot.lane.b32.xlu0 %v963, 104
      %v1027 = vpop.permute.xlu0 %1026
      %1028 = vrot.lane.b32.xlu0 %v964, 104
      %v1029 = vpop.permute.xlu0 %1028
      %1030 = vrot.lane.b32.xlu0 %v965, 104
      %v1031 = vpop.permute.xlu0 %1030
      %1032 = vrot.lane.b32.xlu0 %v966, 104
      %v1033 = vpop.permute.xlu0 %1032
      %1034 = vrot.lane.b32.xlu0 %v967, 104
      %v1035 = vpop.permute.xlu0 %1034
      %1036 = vrot.lane.b32.xlu0 %v968, 104
      %v1037 = vpop.permute.xlu0 %1036
      %1038 = vrot.lane.b32.xlu0 %v969, 104
      %v1039 = vpop.permute.xlu0 %1038
      %1040 = vrot.lane.b32.xlu0 %v970, 104
      %v1041 = vpop.permute.xlu0 %1040
      %1042 = vrot.lane.b32.xlu0 %v971, 104
      %v1043 = vpop.permute.xlu0 %1042
      %vm1044 = vcmask 850944
      %v1045 = vsel %vm1044, %v973, %v975
      %v1046 = vsel %vm1044, %v975, %v977
      %v1047 = vsel %vm1044, %v979, %v981
      %v1048 = vsel %vm1044, %v981, %v983
      %v1049 = vsel %vm1044, %v985, %v987
      %v1050 = vsel %vm1044, %v987, %v989
      %v1051 = vsel %vm1044, %v991, %v993
      %v1052 = vsel %vm1044, %v993, %v995
      %v1053 = vsel %vm1044, %v997, %v999
      %v1054 = vsel %vm1044, %v999, %v1001
      %v1055 = vsel %vm1044, %v1003, %v1005
      %v1056 = vsel %vm1044, %v1005, %v1007
      %v1057 = vsel %vm1044, %v1009, %v1011
      %v1058 = vsel %vm1044, %v1011, %v1013
      %v1059 = vsel %vm1044, %v1015, %v1017
      %v1060 = vsel %vm1044, %v1017, %v1019
      %v1061 = vsel %vm1044, %v1021, %v1023
      %v1062 = vsel %vm1044, %v1023, %v1025
      %v1063 = vsel %vm1044, %v1027, %v1029
      %v1064 = vsel %vm1044, %v1029, %v1031
      %v1065 = vsel %vm1044, %v1033, %v1035
      %v1066 = vsel %vm1044, %v1035, %v1037
      %v1067 = vsel %vm1044, %v1039, %v1041
      %v1068 = vsel %vm1044, %v1041, %v1043
      %1093 = vst [vmem:[#allocation2 + $0x180] sm:$0xff] %v1045
      %1094 = vst [vmem:[#allocation2 + $0x188] sm:$0xff] %v1046
      %1095 = vst [vmem:[#allocation2 + $0x190] sm:$0xff] %v1047
      %1096 = vst [vmem:[#allocation2 + $0x198] sm:$0xff] %v1048
      %1097 = vst [vmem:[#allocation2 + $0x1a0] sm:$0xff] %v1049
      %1098 = vst [vmem:[#allocation2 + $0x1a8] sm:$0xff] %v1050
      %1099 = vst [vmem:[#allocation2 + $0x1b0] sm:$0xff] %v1051
      %1100 = vst [vmem:[#allocation2 + $0x1b8] sm:$0xff] %v1052
      %1101 = vst [vmem:[#allocation2 + $0x1c0] sm:$0xff] %v1053
      %1102 = vst [vmem:[#allocation2 + $0x1c8] sm:$0xff] %v1054
      %1103 = vst [vmem:[#allocation2 + $0x1d0] sm:$0xff] %v1055
      %1104 = vst [vmem:[#allocation2 + $0x1d8] sm:$0xff] %v1056
      %1105 = vst [vmem:[#allocation2 + $0x1e0] sm:$0xff] %v1057
      %1106 = vst [vmem:[#allocation2 + $0x1e8] sm:$0xff] %v1058
      %1107 = vst [vmem:[#allocation2 + $0x1f0] sm:$0xff] %v1059
      %1108 = vst [vmem:[#allocation2 + $0x1f8] sm:$0xff] %v1060
      %1109 = vst [vmem:[#allocation2 + $0x200] sm:$0xff] %v1061
      %1110 = vst [vmem:[#allocation2 + $0x208] sm:$0xff] %v1062
      %1111 = vst [vmem:[#allocation2 + $0x210] sm:$0xff] %v1063
      %1112 = vst [vmem:[#allocation2 + $0x218] sm:$0xff] %v1064
      %1113 = vst [vmem:[#allocation2 + $0x220] sm:$0xff] %v1065
      %1114 = vst [vmem:[#allocation2 + $0x228] sm:$0xff] %v1066
      %1115 = vst [vmem:[#allocation2 + $0x230] sm:$0xff] %v1067
      %1116 = vst [vmem:[#allocation2 + $0x238] sm:$0xff] %v1068
      %v1117 = vld [vmem:[%s0] sm:$0xff]
      %v1118 = vld [vmem:[%s0 + $0x8] sm:$0xf]
      %v1119 = vld [vmem:[%s0 + $0xc] sm:$0xff]
      %v1120 = vld [vmem:[%s0 + $0x14] sm:$0xf]
      %v1121 = vld [vmem:[%s0 + $0x18] sm:$0xff]
      %v1122 = vld [vmem:[%s0 + $0x20] sm:$0xf]
      %v1123 = vld [vmem:[%s0 + $0x24] sm:$0xff]
      %v1124 = vld [vmem:[%s0 + $0x2c] sm:$0xf]
      %v1125 = vld [vmem:[%s0 + $0x30] sm:$0xff]
      %v1126 = vld [vmem:[%s0 + $0x38] sm:$0xf]
      %v1127 = vld [vmem:[%s0 + $0x3c] sm:$0xff]
      %v1128 = vld [vmem:[%s0 + $0x44] sm:$0xf]
      %v1129 = vld [vmem:[%s0 + $0x48] sm:$0xff]
      %v1130 = vld [vmem:[%s0 + $0x50] sm:$0xf]
      %v1131 = vld [vmem:[%s0 + $0x54] sm:$0xff]
      %v1132 = vld [vmem:[%s0 + $0x5c] sm:$0xf]
      %v1133 = vld [vmem:[%s0 + $0x60] sm:$0xff]
      %v1134 = vld [vmem:[%s0 + $0x68] sm:$0xf]
      %v1135 = vld [vmem:[%s0 + $0x6c] sm:$0xff]
      %v1136 = vld [vmem:[%s0 + $0x74] sm:$0xf]
      %v1137 = vld [vmem:[%s0 + $0x78] sm:$0xff]
      %v1138 = vld [vmem:[%s0 + $0x80] sm:$0xf]
      %v1139 = vld [vmem:[%s0 + $0x84] sm:$0xff]
      %v1140 = vld [vmem:[%s0 + $0x8c] sm:$0xf]
      %v1141 = vld [vmem:[%s0 + $0x90] sm:$0xff]
      %v1142 = vld [vmem:[%s0 + $0x98] sm:$0xf]
      %v1143 = vld [vmem:[%s0 + $0x9c] sm:$0xff]
      %v1144 = vld [vmem:[%s0 + $0xa4] sm:$0xf]
      %v1145 = vld [vmem:[%s0 + $0xa8] sm:$0xff]
      %v1146 = vld [vmem:[%s0 + $0xb0] sm:$0xf]
      %v1147 = vld [vmem:[%s0 + $0xb4] sm:$0xff]
      %v1148 = vld [vmem:[%s0 + $0xbc] sm:$0xf]
      %v1149 = vld [vmem:[%s0 + $0xc0] sm:$0xff]
      %v1150 = vld [vmem:[%s0 + $0xc8] sm:$0xf]
      %v1151 = vld [vmem:[%s0 + $0xcc] sm:$0xff]
      %v1152 = vld [vmem:[%s0 + $0xd4] sm:$0xf]
      %v1153 = vld [vmem:[%s0 + $0xd8] sm:$0xff]
      %v1154 = vld [vmem:[%s0 + $0xe0] sm:$0xf]
      %v1155 = vld [vmem:[%s0 + $0xe4] sm:$0xff]
      %v1156 = vld [vmem:[%s0 + $0xec] sm:$0xf]
      %v1157 = vld [vmem:[%s0 + $0xf0] sm:$0xff]
      %v1158 = vld [vmem:[%s0 + $0xf8] sm:$0xf]
      %v1159 = vld [vmem:[%s0 + $0xfc] sm:$0xff]
      %v1160 = vld [vmem:[%s0 + $0x104] sm:$0xf]
      %v1161 = vld [vmem:[%s0 + $0x108] sm:$0xff]
      %v1162 = vld [vmem:[%s0 + $0x110] sm:$0xf]
      %v1163 = vld [vmem:[%s0 + $0x114] sm:$0xff]
      %v1164 = vld [vmem:[%s0 + $0x11c] sm:$0xf]
      %v1213 = vunpack.c.l.b16 %v1117
      %v1214 = vunpack.c.h.b16 %v1117
      %v1215 = vunpack.c.l.b16 %v1118
      %v1216 = vunpack.c.l.b16 %v1119
      %v1217 = vunpack.c.h.b16 %v1119
      %v1218 = vunpack.c.l.b16 %v1120
      %v1219 = vunpack.c.l.b16 %v1121
      %v1220 = vunpack.c.h.b16 %v1121
      %v1221 = vunpack.c.l.b16 %v1122
      %v1222 = vunpack.c.l.b16 %v1123
      %v1223 = vunpack.c.h.b16 %v1123
      %v1224 = vunpack.c.l.b16 %v1124
      %v1225 = vunpack.c.l.b16 %v1125
      %v1226 = vunpack.c.h.b16 %v1125
      %v1227 = vunpack.c.l.b16 %v1126
      %v1228 = vunpack.c.l.b16 %v1127
      %v1229 = vunpack.c.h.b16 %v1127
      %v1230 = vunpack.c.l.b16 %v1128
      %v1231 = vunpack.c.l.b16 %v1129
      %v1232 = vunpack.c.h.b16 %v1129
      %v1233 = vunpack.c.l.b16 %v1130
      %v1234 = vunpack.c.l.b16 %v1131
      %v1235 = vunpack.c.h.b16 %v1131
      %v1236 = vunpack.c.l.b16 %v1132
      %v1237 = vunpack.c.l.b16 %v1133
      %v1238 = vunpack.c.h.b16 %v1133
      %v1239 = vunpack.c.l.b16 %v1134
      %v1240 = vunpack.c.l.b16 %v1135
      %v1241 = vunpack.c.h.b16 %v1135
      %v1242 = vunpack.c.l.b16 %v1136
      %v1243 = vunpack.c.l.b16 %v1137
      %v1244 = vunpack.c.h.b16 %v1137
      %v1245 = vunpack.c.l.b16 %v1138
      %v1246 = vunpack.c.l.b16 %v1139
      %v1247 = vunpack.c.h.b16 %v1139
      %v1248 = vunpack.c.l.b16 %v1140
      %v1249 = vunpack.c.l.b16 %v1141
      %v1250 = vunpack.c.h.b16 %v1141
      %v1251 = vunpack.c.l.b16 %v1142
      %v1252 = vunpack.c.l.b16 %v1143
      %v1253 = vunpack.c.h.b16 %v1143
      %v1254 = vunpack.c.l.b16 %v1144
      %v1255 = vunpack.c.l.b16 %v1145
      %v1256 = vunpack.c.h.b16 %v1145
      %v1257 = vunpack.c.l.b16 %v1146
      %v1258 = vunpack.c.l.b16 %v1147
      %v1259 = vunpack.c.h.b16 %v1147
      %v1260 = vunpack.c.l.b16 %v1148
      %v1261 = vunpack.c.l.b16 %v1149
      %v1262 = vunpack.c.h.b16 %v1149
      %v1263 = vunpack.c.l.b16 %v1150
      %v1264 = vunpack.c.l.b16 %v1151
      %v1265 = vunpack.c.h.b16 %v1151
      %v1266 = vunpack.c.l.b16 %v1152
      %v1267 = vunpack.c.l.b16 %v1153
      %v1268 = vunpack.c.h.b16 %v1153
      %v1269 = vunpack.c.l.b16 %v1154
      %v1270 = vunpack.c.l.b16 %v1155
      %v1271 = vunpack.c.h.b16 %v1155
      %v1272 = vunpack.c.l.b16 %v1156
      %v1273 = vunpack.c.l.b16 %v1157
      %v1274 = vunpack.c.h.b16 %v1157
      %v1275 = vunpack.c.l.b16 %v1158
      %v1276 = vunpack.c.l.b16 %v1159
      %v1277 = vunpack.c.h.b16 %v1159
      %v1278 = vunpack.c.l.b16 %v1160
      %v1279 = vunpack.c.l.b16 %v1161
      %v1280 = vunpack.c.h.b16 %v1161
      %v1281 = vunpack.c.l.b16 %v1162
      %v1282 = vunpack.c.l.b16 %v1163
      %v1283 = vunpack.c.h.b16 %v1163
      %v1284 = vunpack.c.l.b16 %v1164
      %v1285 = vpack.c.b16 %v1216, %v1213
      %v1286 = vpack.c.b16 %v1217, %v1214
      %v1287 = vpack.c.b16 %v1218, %v1215
      %v1288 = vpack.c.b16 %v1222, %v1219
      %v1289 = vpack.c.b16 %v1223, %v1220
      %v1290 = vpack.c.b16 %v1224, %v1221
      %v1291 = vpack.c.b16 %v1228, %v1225
      %v1292 = vpack.c.b16 %v1229, %v1226
      %v1293 = vpack.c.b16 %v1230, %v1227
      %v1294 = vpack.c.b16 %v1234, %v1231
      %v1295 = vpack.c.b16 %v1235, %v1232
      %v1296 = vpack.c.b16 %v1236, %v1233
      %v1297 = vpack.c.b16 %v1240, %v1237
      %v1298 = vpack.c.b16 %v1241, %v1238
      %v1299 = vpack.c.b16 %v1242, %v1239
      %v1300 = vpack.c.b16 %v1246, %v1243
      %v1301 = vpack.c.b16 %v1247, %v1244
      %v1302 = vpack.c.b16 %v1248, %v1245
      %v1303 = vpack.c.b16 %v1252, %v1249
      %v1304 = vpack.c.b16 %v1253, %v1250
      %v1305 = vpack.c.b16 %v1254, %v1251
      %v1306 = vpack.c.b16 %v1258, %v1255
      %v1307 = vpack.c.b16 %v1259, %v1256
      %v1308 = vpack.c.b16 %v1260, %v1257
      %v1309 = vpack.c.b16 %v1264, %v1261
      %v1310 = vpack.c.b16 %v1265, %v1262
      %v1311 = vpack.c.b16 %v1266, %v1263
      %v1312 = vpack.c.b16 %v1270, %v1267
      %v1313 = vpack.c.b16 %v1271, %v1268
      %v1314 = vpack.c.b16 %v1272, %v1269
      %v1315 = vpack.c.b16 %v1276, %v1273
      %v1316 = vpack.c.b16 %v1277, %v1274
      %v1317 = vpack.c.b16 %v1278, %v1275
      %v1318 = vpack.c.b16 %v1282, %v1279
      %v1319 = vpack.c.b16 %v1283, %v1280
      %v1320 = vpack.c.b16 %v1284, %v1281
      %1321 = vrot.lane.b32.xlu0 %v1285, 92
      %v1322 = vpop.permute.xlu0 %1321
      %1323 = vrot.lane.b32.xlu0 %v1286, 92
      %v1324 = vpop.permute.xlu0 %1323
      %1325 = vrot.lane.b32.xlu0 %v1287, 92
      %v1326 = vpop.permute.xlu0 %1325
      %1327 = vrot.lane.b32.xlu0 %v1288, 92
      %v1328 = vpop.permute.xlu0 %1327
      %1329 = vrot.lane.b32.xlu0 %v1289, 92
      %v1330 = vpop.permute.xlu0 %1329
      %1331 = vrot.lane.b32.xlu0 %v1290, 92
      %v1332 = vpop.permute.xlu0 %1331
      %1333 = vrot.lane.b32.xlu0 %v1291, 92
      %v1334 = vpop.permute.xlu0 %1333
      %1335 = vrot.lane.b32.xlu0 %v1292, 92
      %v1336 = vpop.permute.xlu0 %1335
      %1337 = vrot.lane.b32.xlu0 %v1293, 92
      %v1338 = vpop.permute.xlu0 %1337
      %1339 = vrot.lane.b32.xlu0 %v1294, 92
      %v1340 = vpop.permute.xlu0 %1339
      %1341 = vrot.lane.b32.xlu0 %v1295, 92
      %v1342 = vpop.permute.xlu0 %1341
      %1343 = vrot.lane.b32.xlu0 %v1296, 92
      %v1344 = vpop.permute.xlu0 %1343
      %1345 = vrot.lane.b32.xlu0 %v1297, 92
      %v1346 = vpop.permute.xlu0 %1345
      %1347 = vrot.lane.b32.xlu0 %v1298, 92
      %v1348 = vpop.permute.xlu0 %1347
      %1349 = vrot.lane.b32.xlu0 %v1299, 92
      %v1350 = vpop.permute.xlu0 %1349
      %1351 = vrot.lane.b32.xlu0 %v1300, 92
      %v1352 = vpop.permute.xlu0 %1351
      %1353 = vrot.lane.b32.xlu0 %v1301, 92
      %v1354 = vpop.permute.xlu0 %1353
      %1355 = vrot.lane.b32.xlu0 %v1302, 92
      %v1356 = vpop.permute.xlu0 %1355
      %1357 = vrot.lane.b32.xlu0 %v1303, 92
      %v1358 = vpop.permute.xlu0 %1357
      %1359 = vrot.lane.b32.xlu0 %v1304, 92
      %v1360 = vpop.permute.xlu0 %1359
      %1361 = vrot.lane.b32.xlu0 %v1305, 92
      %v1362 = vpop.permute.xlu0 %1361
      %1363 = vrot.lane.b32.xlu0 %v1306, 92
      %v1364 = vpop.permute.xlu0 %1363
      %1365 = vrot.lane.b32.xlu0 %v1307, 92
      %v1366 = vpop.permute.xlu0 %1365
      %1367 = vrot.lane.b32.xlu0 %v1308, 92
      %v1368 = vpop.permute.xlu0 %1367
      %1369 = vrot.lane.b32.xlu0 %v1309, 92
      %v1370 = vpop.permute.xlu0 %1369
      %1371 = vrot.lane.b32.xlu0 %v1310, 92
      %v1372 = vpop.permute.xlu0 %1371
      %1373 = vrot.lane.b32.xlu0 %v1311, 92
      %v1374 = vpop.permute.xlu0 %1373
      %1375 = vrot.lane.b32.xlu0 %v1312, 92
      %v1376 = vpop.permute.xlu0 %1375
      %1377 = vrot.lane.b32.xlu0 %v1313, 92
      %v1378 = vpop.permute.xlu0 %1377
      %1379 = vrot.lane.b32.xlu0 %v1314, 92
      %v1380 = vpop.permute.xlu0 %1379
      %1381 = vrot.lane.b32.xlu0 %v1315, 92
      %v1382 = vpop.permute.xlu0 %1381
      %1383 = vrot.lane.b32.xlu0 %v1316, 92
      %v1384 = vpop.permute.xlu0 %1383
      %1385 = vrot.lane.b32.xlu0 %v1317, 92
      %v1386 = vpop.permute.xlu0 %1385
      %1387 = vrot.lane.b32.xlu0 %v1318, 92
      %v1388 = vpop.permute.xlu0 %1387
      %1389 = vrot.lane.b32.xlu0 %v1319, 92
      %v1390 = vpop.permute.xlu0 %1389
      %1391 = vrot.lane.b32.xlu0 %v1320, 92
      %v1392 = vpop.permute.xlu0 %1391
      %vm1393 = vcmask 752640
      %v1394 = vsel %vm1393, %v1322, %v1324
      %v1395 = vsel %vm1393, %v1324, %v1326
      %v1396 = vsel %vm1393, %v1328, %v1330
      %v1397 = vsel %vm1393, %v1330, %v1332
      %v1398 = vsel %vm1393, %v1334, %v1336
      %v1399 = vsel %vm1393, %v1336, %v1338
      %v1400 = vsel %vm1393, %v1340, %v1342
      %v1401 = vsel %vm1393, %v1342, %v1344
      %v1402 = vsel %vm1393, %v1346, %v1348
      %v1403 = vsel %vm1393, %v1348, %v1350
      %v1404 = vsel %vm1393, %v1352, %v1354
      %v1405 = vsel %vm1393, %v1354, %v1356
      %v1406 = vsel %vm1393, %v1358, %v1360
      %v1407 = vsel %vm1393, %v1360, %v1362
      %v1408 = vsel %vm1393, %v1364, %v1366
      %v1409 = vsel %vm1393, %v1366, %v1368
      %v1410 = vsel %vm1393, %v1370, %v1372
      %v1411 = vsel %vm1393, %v1372, %v1374
      %v1412 = vsel %vm1393, %v1376, %v1378
      %v1413 = vsel %vm1393, %v1378, %v1380
      %v1414 = vsel %vm1393, %v1382, %v1384
      %v1415 = vsel %vm1393, %v1384, %v1386
      %v1416 = vsel %vm1393, %v1388, %v1390
      %v1417 = vsel %vm1393, %v1390, %v1392
      %1442 = vst [vmem:[#allocation2 + $0x240] sm:$0xff] %v1394
      %1443 = vst [vmem:[#allocation2 + $0x248] sm:$0xff] %v1395
      %1444 = vst [vmem:[#allocation2 + $0x250] sm:$0xff] %v1396
      %1445 = vst [vmem:[#allocation2 + $0x258] sm:$0xff] %v1397
      %1446 = vst [vmem:[#allocation2 + $0x260] sm:$0xff] %v1398
      %1447 = vst [vmem:[#allocation2 + $0x268] sm:$0xff] %v1399
      %1448 = vst [vmem:[#allocation2 + $0x270] sm:$0xff] %v1400
      %1449 = vst [vmem:[#allocation2 + $0x278] sm:$0xff] %v1401
      %1450 = vst [vmem:[#allocation2 + $0x280] sm:$0xff] %v1402
      %1451 = vst [vmem:[#allocation2 + $0x288] sm:$0xff] %v1403
      %1452 = vst [vmem:[#allocation2 + $0x290] sm:$0xff] %v1404
      %1453 = vst [vmem:[#allocation2 + $0x298] sm:$0xff] %v1405
      %1454 = vst [vmem:[#allocation2 + $0x2a0] sm:$0xff] %v1406
      %1455 = vst [vmem:[#allocation2 + $0x2a8] sm:$0xff] %v1407
      %1456 = vst [vmem:[#allocation2 + $0x2b0] sm:$0xff] %v1408
      %1457 = vst [vmem:[#allocation2 + $0x2b8] sm:$0xff] %v1409
      %1458 = vst [vmem:[#allocation2 + $0x2c0] sm:$0xff] %v1410
      %1459 = vst [vmem:[#allocation2 + $0x2c8] sm:$0xff] %v1411
      %1460 = vst [vmem:[#allocation2 + $0x2d0] sm:$0xff] %v1412
      %1461 = vst [vmem:[#allocation2 + $0x2d8] sm:$0xff] %v1413
      %1462 = vst [vmem:[#allocation2 + $0x2e0] sm:$0xff] %v1414
      %1463 = vst [vmem:[#allocation2 + $0x2e8] sm:$0xff] %v1415
      %1464 = vst [vmem:[#allocation2 + $0x2f0] sm:$0xff] %v1416
      %1465 = vst [vmem:[#allocation2 + $0x2f8] sm:$0xff] %v1417
      %v1466 = vld [vmem:[%s0] sm:$0xff]
      %v1467 = vld [vmem:[%s0 + $0x8] sm:$0xf]
      %v1468 = vld [vmem:[%s0 + $0xc] sm:$0xff]
      %v1469 = vld [vmem:[%s0 + $0x14] sm:$0xf]
      %v1470 = vld [vmem:[%s0 + $0x18] sm:$0xff]
      %v1471 = vld [vmem:[%s0 + $0x20] sm:$0xf]
      %v1472 = vld [vmem:[%s0 + $0x24] sm:$0xff]
      %v1473 = vld [vmem:[%s0 + $0x2c] sm:$0xf]
      %v1474 = vld [vmem:[%s0 + $0x30] sm:$0xff]
      %v1475 = vld [vmem:[%s0 + $0x38] sm:$0xf]
      %v1476 = vld [vmem:[%s0 + $0x3c] sm:$0xff]
      %v1477 = vld [vmem:[%s0 + $0x44] sm:$0xf]
      %v1478 = vld [vmem:[%s0 + $0x48] sm:$0xff]
      %v1479 = vld [vmem:[%s0 + $0x50] sm:$0xf]
      %v1480 = vld [vmem:[%s0 + $0x54] sm:$0xff]
      %v1481 = vld [vmem:[%s0 + $0x5c] sm:$0xf]
      %v1482 = vld [vmem:[%s0 + $0x60] sm:$0xff]
      %v1483 = vld [vmem:[%s0 + $0x68] sm:$0xf]
      %v1484 = vld [vmem:[%s0 + $0x6c] sm:$0xff]
      %v1485 = vld [vmem:[%s0 + $0x74] sm:$0xf]
      %v1486 = vld [vmem:[%s0 + $0x78] sm:$0xff]
      %v1487 = vld [vmem:[%s0 + $0x80] sm:$0xf]
      %v1488 = vld [vmem:[%s0 + $0x84] sm:$0xff]
      %v1489 = vld [vmem:[%s0 + $0x8c] sm:$0xf]
      %v1490 = vld [vmem:[%s0 + $0x90] sm:$0xff]
      %v1491 = vld [vmem:[%s0 + $0x98] sm:$0xf]
      %v1492 = vld [vmem:[%s0 + $0x9c] sm:$0xff]
      %v1493 = vld [vmem:[%s0 + $0xa4] sm:$0xf]
      %v1494 = vld [vmem:[%s0 + $0xa8] sm:$0xff]
      %v1495 = vld [vmem:[%s0 + $0xb0] sm:$0xf]
      %v1496 = vld [vmem:[%s0 + $0xb4] sm:$0xff]
      %v1497 = vld [vmem:[%s0 + $0xbc] sm:$0xf]
      %v1498 = vld [vmem:[%s0 + $0xc0] sm:$0xff]
      %v1499 = vld [vmem:[%s0 + $0xc8] sm:$0xf]
      %v1500 = vld [vmem:[%s0 + $0xcc] sm:$0xff]
      %v1501 = vld [vmem:[%s0 + $0xd4] sm:$0xf]
      %v1502 = vld [vmem:[%s0 + $0xd8] sm:$0xff]
      %v1503 = vld [vmem:[%s0 + $0xe0] sm:$0xf]
      %v1504 = vld [vmem:[%s0 + $0xe4] sm:$0xff]
      %v1505 = vld [vmem:[%s0 + $0xec] sm:$0xf]
      %v1506 = vld [vmem:[%s0 + $0xf0] sm:$0xff]
      %v1507 = vld [vmem:[%s0 + $0xf8] sm:$0xf]
      %v1508 = vld [vmem:[%s0 + $0xfc] sm:$0xff]
      %v1509 = vld [vmem:[%s0 + $0x104] sm:$0xf]
      %v1510 = vld [vmem:[%s0 + $0x108] sm:$0xff]
      %v1511 = vld [vmem:[%s0 + $0x110] sm:$0xf]
      %v1512 = vld [vmem:[%s0 + $0x114] sm:$0xff]
      %v1513 = vld [vmem:[%s0 + $0x11c] sm:$0xf]
      %v1562 = vunpack.c.l.b16 %v1466
      %v1563 = vunpack.c.h.b16 %v1466
      %v1564 = vunpack.c.l.b16 %v1467
      %v1565 = vunpack.c.l.b16 %v1468
      %v1566 = vunpack.c.h.b16 %v1468
      %v1567 = vunpack.c.l.b16 %v1469
      %v1568 = vunpack.c.l.b16 %v1470
      %v1569 = vunpack.c.h.b16 %v1470
      %v1570 = vunpack.c.l.b16 %v1471
      %v1571 = vunpack.c.l.b16 %v1472
      %v1572 = vunpack.c.h.b16 %v1472
      %v1573 = vunpack.c.l.b16 %v1473
      %v1574 = vunpack.c.l.b16 %v1474
      %v1575 = vunpack.c.h.b16 %v1474
      %v1576 = vunpack.c.l.b16 %v1475
      %v1577 = vunpack.c.l.b16 %v1476
      %v1578 = vunpack.c.h.b16 %v1476
      %v1579 = vunpack.c.l.b16 %v1477
      %v1580 = vunpack.c.l.b16 %v1478
      %v1581 = vunpack.c.h.b16 %v1478
      %v1582 = vunpack.c.l.b16 %v1479
      %v1583 = vunpack.c.l.b16 %v1480
      %v1584 = vunpack.c.h.b16 %v1480
      %v1585 = vunpack.c.l.b16 %v1481
      %v1586 = vunpack.c.l.b16 %v1482
      %v1587 = vunpack.c.h.b16 %v1482
      %v1588 = vunpack.c.l.b16 %v1483
      %v1589 = vunpack.c.l.b16 %v1484
      %v1590 = vunpack.c.h.b16 %v1484
      %v1591 = vunpack.c.l.b16 %v1485
      %v1592 = vunpack.c.l.b16 %v1486
      %v1593 = vunpack.c.h.b16 %v1486
      %v1594 = vunpack.c.l.b16 %v1487
      %v1595 = vunpack.c.l.b16 %v1488
      %v1596 = vunpack.c.h.b16 %v1488
      %v1597 = vunpack.c.l.b16 %v1489
      %v1598 = vunpack.c.l.b16 %v1490
      %v1599 = vunpack.c.h.b16 %v1490
      %v1600 = vunpack.c.l.b16 %v1491
      %v1601 = vunpack.c.l.b16 %v1492
      %v1602 = vunpack.c.h.b16 %v1492
      %v1603 = vunpack.c.l.b16 %v1493
      %v1604 = vunpack.c.l.b16 %v1494
      %v1605 = vunpack.c.h.b16 %v1494
      %v1606 = vunpack.c.l.b16 %v1495
      %v1607 = vunpack.c.l.b16 %v1496
      %v1608 = vunpack.c.h.b16 %v1496
      %v1609 = vunpack.c.l.b16 %v1497
      %v1610 = vunpack.c.l.b16 %v1498
      %v1611 = vunpack.c.h.b16 %v1498
      %v1612 = vunpack.c.l.b16 %v1499
      %v1613 = vunpack.c.l.b16 %v1500
      %v1614 = vunpack.c.h.b16 %v1500
      %v1615 = vunpack.c.l.b16 %v1501
      %v1616 = vunpack.c.l.b16 %v1502
      %v1617 = vunpack.c.h.b16 %v1502
      %v1618 = vunpack.c.l.b16 %v1503
      %v1619 = vunpack.c.l.b16 %v1504
      %v1620 = vunpack.c.h.b16 %v1504
      %v1621 = vunpack.c.l.b16 %v1505
      %v1622 = vunpack.c.l.b16 %v1506
      %v1623 = vunpack.c.h.b16 %v1506
      %v1624 = vunpack.c.l.b16 %v1507
      %v1625 = vunpack.c.l.b16 %v1508
      %v1626 = vunpack.c.h.b16 %v1508
      %v1627 = vunpack.c.l.b16 %v1509
      %v1628 = vunpack.c.l.b16 %v1510
      %v1629 = vunpack.c.h.b16 %v1510
      %v1630 = vunpack.c.l.b16 %v1511
      %v1631 = vunpack.c.l.b16 %v1512
      %v1632 = vunpack.c.h.b16 %v1512
      %v1633 = vunpack.c.l.b16 %v1513
      %v1634 = vpack.c.b16 %v1565, %v1562
      %v1635 = vpack.c.b16 %v1566, %v1563
      %v1636 = vpack.c.b16 %v1567, %v1564
      %v1637 = vpack.c.b16 %v1571, %v1568
      %v1638 = vpack.c.b16 %v1572, %v1569
      %v1639 = vpack.c.b16 %v1573, %v1570
      %v1640 = vpack.c.b16 %v1577, %v1574
      %v1641 = vpack.c.b16 %v1578, %v1575
      %v1642 = vpack.c.b16 %v1579, %v1576
      %v1643 = vpack.c.b16 %v1583, %v1580
      %v1644 = vpack.c.b16 %v1584, %v1581
      %v1645 = vpack.c.b16 %v1585, %v1582
      %v1646 = vpack.c.b16 %v1589, %v1586
      %v1647 = vpack.c.b16 %v1590, %v1587
      %v1648 = vpack.c.b16 %v1591, %v1588
      %v1649 = vpack.c.b16 %v1595, %v1592
      %v1650 = vpack.c.b16 %v1596, %v1593
      %v1651 = vpack.c.b16 %v1597, %v1594
      %v1652 = vpack.c.b16 %v1601, %v1598
      %v1653 = vpack.c.b16 %v1602, %v1599
      %v1654 = vpack.c.b16 %v1603, %v1600
      %v1655 = vpack.c.b16 %v1607, %v1604
      %v1656 = vpack.c.b16 %v1608, %v1605
      %v1657 = vpack.c.b16 %v1609, %v1606
      %v1658 = vpack.c.b16 %v1613, %v1610
      %v1659 = vpack.c.b16 %v1614, %v1611
      %v1660 = vpack.c.b16 %v1615, %v1612
      %v1661 = vpack.c.b16 %v1619, %v1616
      %v1662 = vpack.c.b16 %v1620, %v1617
      %v1663 = vpack.c.b16 %v1621, %v1618
      %v1664 = vpack.c.b16 %v1625, %v1622
      %v1665 = vpack.c.b16 %v1626, %v1623
      %v1666 = vpack.c.b16 %v1627, %v1624
      %v1667 = vpack.c.b16 %v1631, %v1628
      %v1668 = vpack.c.b16 %v1632, %v1629
      %v1669 = vpack.c.b16 %v1633, %v1630
      %1670 = vrot.lane.b32.xlu0 %v1634, 80
      %v1671 = vpop.permute.xlu0 %1670
      %1672 = vrot.lane.b32.xlu0 %v1635, 80
      %v1673 = vpop.permute.xlu0 %1672
      %1674 = vrot.lane.b32.xlu0 %v1636, 80
      %v1675 = vpop.permute.xlu0 %1674
      %1676 = vrot.lane.b32.xlu0 %v1637, 80
      %v1677 = vpop.permute.xlu0 %1676
      %1678 = vrot.lane.b32.xlu0 %v1638, 80
      %v1679 = vpop.permute.xlu0 %1678
      %1680 = vrot.lane.b32.xlu0 %v1639, 80
      %v1681 = vpop.permute.xlu0 %1680
      %1682 = vrot.lane.b32.xlu0 %v1640, 80
      %v1683 = vpop.permute.xlu0 %1682
      %1684 = vrot.lane.b32.xlu0 %v1641, 80
      %v1685 = vpop.permute.xlu0 %1684
      %1686 = vrot.lane.b32.xlu0 %v1642, 80
      %v1687 = vpop.permute.xlu0 %1686
      %1688 = vrot.lane.b32.xlu0 %v1643, 80
      %v1689 = vpop.permute.xlu0 %1688
      %1690 = vrot.lane.b32.xlu0 %v1644, 80
      %v1691 = vpop.permute.xlu0 %1690
      %1692 = vrot.lane.b32.xlu0 %v1645, 80
      %v1693 = vpop.permute.xlu0 %1692
      %1694 = vrot.lane.b32.xlu0 %v1646, 80
      %v1695 = vpop.permute.xlu0 %1694
      %1696 = vrot.lane.b32.xlu0 %v1647, 80
      %v1697 = vpop.permute.xlu0 %1696
      %1698 = vrot.lane.b32.xlu0 %v1648, 80
      %v1699 = vpop.permute.xlu0 %1698
      %1700 = vrot.lane.b32.xlu0 %v1649, 80
      %v1701 = vpop.permute.xlu0 %1700
      %1702 = vrot.lane.b32.xlu0 %v1650, 80
      %v1703 = vpop.permute.xlu0 %1702
      %1704 = vrot.lane.b32.xlu0 %v1651, 80
      %v1705 = vpop.permute.xlu0 %1704
      %1706 = vrot.lane.b32.xlu0 %v1652, 80
      %v1707 = vpop.permute.xlu0 %1706
      %1708 = vrot.lane.b32.xlu0 %v1653, 80
      %v1709 = vpop.permute.xlu0 %1708
      %1710 = vrot.lane.b32.xlu0 %v1654, 80
      %v1711 = vpop.permute.xlu0 %1710
      %1712 = vrot.lane.b32.xlu0 %v1655, 80
      %v1713 = vpop.permute.xlu0 %1712
      %1714 = vrot.lane.b32.xlu0 %v1656, 80
      %v1715 = vpop.permute.xlu0 %1714
      %1716 = vrot.lane.b32.xlu0 %v1657, 80
      %v1717 = vpop.permute.xlu0 %1716
      %1718 = vrot.lane.b32.xlu0 %v1658, 80
      %v1719 = vpop.permute.xlu0 %1718
      %1720 = vrot.lane.b32.xlu0 %v1659, 80
      %v1721 = vpop.permute.xlu0 %1720
      %1722 = vrot.lane.b32.xlu0 %v1660, 80
      %v1723 = vpop.permute.xlu0 %1722
      %1724 = vrot.lane.b32.xlu0 %v1661, 80
      %v1725 = vpop.permute.xlu0 %1724
      %1726 = vrot.lane.b32.xlu0 %v1662, 80
      %v1727 = vpop.permute.xlu0 %1726
      %1728 = vrot.lane.b32.xlu0 %v1663, 80
      %v1729 = vpop.permute.xlu0 %1728
      %1730 = vrot.lane.b32.xlu0 %v1664, 80
      %v1731 = vpop.permute.xlu0 %1730
      %1732 = vrot.lane.b32.xlu0 %v1665, 80
      %v1733 = vpop.permute.xlu0 %1732
      %1734 = vrot.lane.b32.xlu0 %v1666, 80
      %v1735 = vpop.permute.xlu0 %1734
      %1736 = vrot.lane.b32.xlu0 %v1667, 80
      %v1737 = vpop.permute.xlu0 %1736
      %1738 = vrot.lane.b32.xlu0 %v1668, 80
      %v1739 = vpop.permute.xlu0 %1738
      %1740 = vrot.lane.b32.xlu0 %v1669, 80
      %v1741 = vpop.permute.xlu0 %1740
      %vm1742 = vcmask 654336
      %v1743 = vsel %vm1742, %v1671, %v1673
      %v1744 = vsel %vm1742, %v1673, %v1675
      %v1745 = vsel %vm1742, %v1677, %v1679
      %v1746 = vsel %vm1742, %v1679, %v1681
      %v1747 = vsel %vm1742, %v1683, %v1685
      %v1748 = vsel %vm1742, %v1685, %v1687
      %v1749 = vsel %vm1742, %v1689, %v1691
      %v1750 = vsel %vm1742, %v1691, %v1693
      %v1751 = vsel %vm1742, %v1695, %v1697
      %v1752 = vsel %vm1742, %v1697, %v1699
      %v1753 = vsel %vm1742, %v1701, %v1703
      %v1754 = vsel %vm1742, %v1703, %v1705
      %v1755 = vsel %vm1742, %v1707, %v1709
      %v1756 = vsel %vm1742, %v1709, %v1711
      %v1757 = vsel %vm1742, %v1713, %v1715
      %v1758 = vsel %vm1742, %v1715, %v1717
      %v1759 = vsel %vm1742, %v1719, %v1721
      %v1760 = vsel %vm1742, %v1721, %v1723
      %v1761 = vsel %vm1742, %v1725, %v1727
      %v1762 = vsel %vm1742, %v1727, %v1729
      %v1763 = vsel %vm1742, %v1731, %v1733
      %v1764 = vsel %vm1742, %v1733, %v1735
      %v1765 = vsel %vm1742, %v1737, %v1739
      %v1766 = vsel %vm1742, %v1739, %v1741
      %1791 = vst [vmem:[#allocation2 + $0x300] sm:$0xff] %v1743
      %1792 = vst [vmem:[#allocation2 + $0x308] sm:$0xff] %v1744
      %1793 = vst [vmem:[#allocation2 + $0x310] sm:$0xff] %v1745
      %1794 = vst [vmem:[#allocation2 + $0x318] sm:$0xff] %v1746
      %1795 = vst [vmem:[#allocation2 + $0x320] sm:$0xff] %v1747
      %1796 = vst [vmem:[#allocation2 + $0x328] sm:$0xff] %v1748
      %1797 = vst [vmem:[#allocation2 + $0x330] sm:$0xff] %v1749
      %1798 = vst [vmem:[#allocation2 + $0x338] sm:$0xff] %v1750
      %1799 = vst [vmem:[#allocation2 + $0x340] sm:$0xff] %v1751
      %1800 = vst [vmem:[#allocation2 + $0x348] sm:$0xff] %v1752
      %1801 = vst [vmem:[#allocation2 + $0x350] sm:$0xff] %v1753
      %1802 = vst [vmem:[#allocation2 + $0x358] sm:$0xff] %v1754
      %1803 = vst [vmem:[#allocation2 + $0x360] sm:$0xff] %v1755
      %1804 = vst [vmem:[#allocation2 + $0x368] sm:$0xff] %v1756
      %1805 = vst [vmem:[#allocation2 + $0x370] sm:$0xff] %v1757
      %1806 = vst [vmem:[#allocation2 + $0x378] sm:$0xff] %v1758
      %1807 = vst [vmem:[#allocation2 + $0x380] sm:$0xff] %v1759
      %1808 = vst [vmem:[#allocation2 + $0x388] sm:$0xff] %v1760
      %1809 = vst [vmem:[#allocation2 + $0x390] sm:$0xff] %v1761
      %1810 = vst [vmem:[#allocation2 + $0x398] sm:$0xff] %v1762
      %1811 = vst [vmem:[#allocation2 + $0x3a0] sm:$0xff] %v1763
      %1812 = vst [vmem:[#allocation2 + $0x3a8] sm:$0xff] %v1764
      %1813 = vst [vmem:[#allocation2 + $0x3b0] sm:$0xff] %v1765
      %1814 = vst [vmem:[#allocation2 + $0x3b8] sm:$0xff] %v1766
      %v1815 = vld [vmem:[%s0] sm:$0xff]
      %v1816 = vld [vmem:[%s0 + $0x8] sm:$0xf]
      %v1817 = vld [vmem:[%s0 + $0xc] sm:$0xff]
      %v1818 = vld [vmem:[%s0 + $0x14] sm:$0xf]
      %v1819 = vld [vmem:[%s0 + $0x18] sm:$0xff]
      %v1820 = vld [vmem:[%s0 + $0x20] sm:$0xf]
      %v1821 = vld [vmem:[%s0 + $0x24] sm:$0xff]
      %v1822 = vld [vmem:[%s0 + $0x2c] sm:$0xf]
      %v1823 = vld [vmem:[%s0 + $0x30] sm:$0xff]
      %v1824 = vld [vmem:[%s0 + $0x38] sm:$0xf]
      %v1825 = vld [vmem:[%s0 + $0x3c] sm:$0xff]
      %v1826 = vld [vmem:[%s0 + $0x44] sm:$0xf]
      %v1827 = vld [vmem:[%s0 + $0x48] sm:$0xff]
      %v1828 = vld [vmem:[%s0 + $0x50] sm:$0xf]
      %v1829 = vld [vmem:[%s0 + $0x54] sm:$0xff]
      %v1830 = vld [vmem:[%s0 + $0x5c] sm:$0xf]
      %v1831 = vld [vmem:[%s0 + $0x60] sm:$0xff]
      %v1832 = vld [vmem:[%s0 + $0x68] sm:$0xf]
      %v1833 = vld [vmem:[%s0 + $0x6c] sm:$0xff]
      %v1834 = vld [vmem:[%s0 + $0x74] sm:$0xf]
      %v1835 = vld [vmem:[%s0 + $0x78] sm:$0xff]
      %v1836 = vld [vmem:[%s0 + $0x80] sm:$0xf]
      %v1837 = vld [vmem:[%s0 + $0x84] sm:$0xff]
      %v1838 = vld [vmem:[%s0 + $0x8c] sm:$0xf]
      %v1839 = vld [vmem:[%s0 + $0x90] sm:$0xff]
      %v1840 = vld [vmem:[%s0 + $0x98] sm:$0xf]
      %v1841 = vld [vmem:[%s0 + $0x9c] sm:$0xff]
      %v1842 = vld [vmem:[%s0 + $0xa4] sm:$0xf]
      %v1843 = vld [vmem:[%s0 + $0xa8] sm:$0xff]
      %v1844 = vld [vmem:[%s0 + $0xb0] sm:$0xf]
      %v1845 = vld [vmem:[%s0 + $0xb4] sm:$0xff]
      %v1846 = vld [vmem:[%s0 + $0xbc] sm:$0xf]
      %v1847 = vld [vmem:[%s0 + $0xc0] sm:$0xff]
      %v1848 = vld [vmem:[%s0 + $0xc8] sm:$0xf]
      %v1849 = vld [vmem:[%s0 + $0xcc] sm:$0xff]
      %v1850 = vld [vmem:[%s0 + $0xd4] sm:$0xf]
      %v1851 = vld [vmem:[%s0 + $0xd8] sm:$0xff]
      %v1852 = vld [vmem:[%s0 + $0xe0] sm:$0xf]
      %v1853 = vld [vmem:[%s0 + $0xe4] sm:$0xff]
      %v1854 = vld [vmem:[%s0 + $0xec] sm:$0xf]
      %v1855 = vld [vmem:[%s0 + $0xf0] sm:$0xff]
      %v1856 = vld [vmem:[%s0 + $0xf8] sm:$0xf]
      %v1857 = vld [vmem:[%s0 + $0xfc] sm:$0xff]
      %v1858 = vld [vmem:[%s0 + $0x104] sm:$0xf]
      %v1859 = vld [vmem:[%s0 + $0x108] sm:$0xff]
      %v1860 = vld [vmem:[%s0 + $0x110] sm:$0xf]
      %v1861 = vld [vmem:[%s0 + $0x114] sm:$0xff]
      %v1862 = vld [vmem:[%s0 + $0x11c] sm:$0xf]
      %v1911 = vunpack.c.l.b16 %v1815
      %v1912 = vunpack.c.h.b16 %v1815
      %v1913 = vunpack.c.l.b16 %v1816
      %v1914 = vunpack.c.l.b16 %v1817
      %v1915 = vunpack.c.h.b16 %v1817
      %v1916 = vunpack.c.l.b16 %v1818
      %v1917 = vunpack.c.l.b16 %v1819
      %v1918 = vunpack.c.h.b16 %v1819
      %v1919 = vunpack.c.l.b16 %v1820
      %v1920 = vunpack.c.l.b16 %v1821
      %v1921 = vunpack.c.h.b16 %v1821
      %v1922 = vunpack.c.l.b16 %v1822
      %v1923 = vunpack.c.l.b16 %v1823
      %v1924 = vunpack.c.h.b16 %v1823
      %v1925 = vunpack.c.l.b16 %v1824
      %v1926 = vunpack.c.l.b16 %v1825
      %v1927 = vunpack.c.h.b16 %v1825
      %v1928 = vunpack.c.l.b16 %v1826
      %v1929 = vunpack.c.l.b16 %v1827
      %v1930 = vunpack.c.h.b16 %v1827
      %v1931 = vunpack.c.l.b16 %v1828
      %v1932 = vunpack.c.l.b16 %v1829
      %v1933 = vunpack.c.h.b16 %v1829
      %v1934 = vunpack.c.l.b16 %v1830
      %v1935 = vunpack.c.l.b16 %v1831
      %v1936 = vunpack.c.h.b16 %v1831
      %v1937 = vunpack.c.l.b16 %v1832
      %v1938 = vunpack.c.l.b16 %v1833
      %v1939 = vunpack.c.h.b16 %v1833
      %v1940 = vunpack.c.l.b16 %v1834
      %v1941 = vunpack.c.l.b16 %v1835
      %v1942 = vunpack.c.h.b16 %v1835
      %v1943 = vunpack.c.l.b16 %v1836
      %v1944 = vunpack.c.l.b16 %v1837
      %v1945 = vunpack.c.h.b16 %v1837
      %v1946 = vunpack.c.l.b16 %v1838
      %v1947 = vunpack.c.l.b16 %v1839
      %v1948 = vunpack.c.h.b16 %v1839
      %v1949 = vunpack.c.l.b16 %v1840
      %v1950 = vunpack.c.l.b16 %v1841
      %v1951 = vunpack.c.h.b16 %v1841
      %v1952 = vunpack.c.l.b16 %v1842
      %v1953 = vunpack.c.l.b16 %v1843
      %v1954 = vunpack.c.h.b16 %v1843
      %v1955 = vunpack.c.l.b16 %v1844
      %v1956 = vunpack.c.l.b16 %v1845
      %v1957 = vunpack.c.h.b16 %v1845
      %v1958 = vunpack.c.l.b16 %v1846
      %v1959 = vunpack.c.l.b16 %v1847
      %v1960 = vunpack.c.h.b16 %v1847
      %v1961 = vunpack.c.l.b16 %v1848
      %v1962 = vunpack.c.l.b16 %v1849
      %v1963 = vunpack.c.h.b16 %v1849
      %v1964 = vunpack.c.l.b16 %v1850
      %v1965 = vunpack.c.l.b16 %v1851
      %v1966 = vunpack.c.h.b16 %v1851
      %v1967 = vunpack.c.l.b16 %v1852
      %v1968 = vunpack.c.l.b16 %v1853
      %v1969 = vunpack.c.h.b16 %v1853
      %v1970 = vunpack.c.l.b16 %v1854
      %v1971 = vunpack.c.l.b16 %v1855
      %v1972 = vunpack.c.h.b16 %v1855
      %v1973 = vunpack.c.l.b16 %v1856
      %v1974 = vunpack.c.l.b16 %v1857
      %v1975 = vunpack.c.h.b16 %v1857
      %v1976 = vunpack.c.l.b16 %v1858
      %v1977 = vunpack.c.l.b16 %v1859
      %v1978 = vunpack.c.h.b16 %v1859
      %v1979 = vunpack.c.l.b16 %v1860
      %v1980 = vunpack.c.l.b16 %v1861
      %v1981 = vunpack.c.h.b16 %v1861
      %v1982 = vunpack.c.l.b16 %v1862
      %v1983 = vpack.c.b16 %v1914, %v1911
      %v1984 = vpack.c.b16 %v1915, %v1912
      %v1985 = vpack.c.b16 %v1916, %v1913
      %v1986 = vpack.c.b16 %v1920, %v1917
      %v1987 = vpack.c.b16 %v1921, %v1918
      %v1988 = vpack.c.b16 %v1922, %v1919
      %v1989 = vpack.c.b16 %v1926, %v1923
      %v1990 = vpack.c.b16 %v1927, %v1924
      %v1991 = vpack.c.b16 %v1928, %v1925
      %v1992 = vpack.c.b16 %v1932, %v1929
      %v1993 = vpack.c.b16 %v1933, %v1930
      %v1994 = vpack.c.b16 %v1934, %v1931
      %v1995 = vpack.c.b16 %v1938, %v1935
      %v1996 = vpack.c.b16 %v1939, %v1936
      %v1997 = vpack.c.b16 %v1940, %v1937
      %v1998 = vpack.c.b16 %v1944, %v1941
      %v1999 = vpack.c.b16 %v1945, %v1942
      %v2000 = vpack.c.b16 %v1946, %v1943
      %v2001 = vpack.c.b16 %v1950, %v1947
      %v2002 = vpack.c.b16 %v1951, %v1948
      %v2003 = vpack.c.b16 %v1952, %v1949
      %v2004 = vpack.c.b16 %v1956, %v1953
      %v2005 = vpack.c.b16 %v1957, %v1954
      %v2006 = vpack.c.b16 %v1958, %v1955
      %v2007 = vpack.c.b16 %v1962, %v1959
      %v2008 = vpack.c.b16 %v1963, %v1960
      %v2009 = vpack.c.b16 %v1964, %v1961
      %v2010 = vpack.c.b16 %v1968, %v1965
      %v2011 = vpack.c.b16 %v1969, %v1966
      %v2012 = vpack.c.b16 %v1970, %v1967
      %v2013 = vpack.c.b16 %v1974, %v1971
      %v2014 = vpack.c.b16 %v1975, %v1972
      %v2015 = vpack.c.b16 %v1976, %v1973
      %v2016 = vpack.c.b16 %v1980, %v1977
      %v2017 = vpack.c.b16 %v1981, %v1978
      %v2018 = vpack.c.b16 %v1982, %v1979
      %2019 = vrot.lane.b32.xlu0 %v1983, 68
      %v2020 = vpop.permute.xlu0 %2019
      %2021 = vrot.lane.b32.xlu0 %v1984, 68
      %v2022 = vpop.permute.xlu0 %2021
      %2023 = vrot.lane.b32.xlu0 %v1985, 68
      %v2024 = vpop.permute.xlu0 %2023
      %2025 = vrot.lane.b32.xlu0 %v1986, 68
      %v2026 = vpop.permute.xlu0 %2025
      %2027 = vrot.lane.b32.xlu0 %v1987, 68
      %v2028 = vpop.permute.xlu0 %2027
      %2029 = vrot.lane.b32.xlu0 %v1988, 68
      %v2030 = vpop.permute.xlu0 %2029
      %2031 = vrot.lane.b32.xlu0 %v1989, 68
      %v2032 = vpop.permute.xlu0 %2031
      %2033 = vrot.lane.b32.xlu0 %v1990, 68
      %v2034 = vpop.permute.xlu0 %2033
      %2035 = vrot.lane.b32.xlu0 %v1991, 68
      %v2036 = vpop.permute.xlu0 %2035
      %2037 = vrot.lane.b32.xlu0 %v1992, 68
      %v2038 = vpop.permute.xlu0 %2037
      %2039 = vrot.lane.b32.xlu0 %v1993, 68
      %v2040 = vpop.permute.xlu0 %2039
      %2041 = vrot.lane.b32.xlu0 %v1994, 68
      %v2042 = vpop.permute.xlu0 %2041
      %2043 = vrot.lane.b32.xlu0 %v1995, 68
      %v2044 = vpop.permute.xlu0 %2043
      %2045 = vrot.lane.b32.xlu0 %v1996, 68
      %v2046 = vpop.permute.xlu0 %2045
      %2047 = vrot.lane.b32.xlu0 %v1997, 68
      %v2048 = vpop.permute.xlu0 %2047
      %2049 = vrot.lane.b32.xlu0 %v1998, 68
      %v2050 = vpop.permute.xlu0 %2049
      %2051 = vrot.lane.b32.xlu0 %v1999, 68
      %v2052 = vpop.permute.xlu0 %2051
      %2053 = vrot.lane.b32.xlu0 %v2000, 68
      %v2054 = vpop.permute.xlu0 %2053
      %2055 = vrot.lane.b32.xlu0 %v2001, 68
      %v2056 = vpop.permute.xlu0 %2055
      %2057 = vrot.lane.b32.xlu0 %v2002, 68
      %v2058 = vpop.permute.xlu0 %2057
      %2059 = vrot.lane.b32.xlu0 %v2003, 68
      %v2060 = vpop.permute.xlu0 %2059
      %2061 = vrot.lane.b32.xlu0 %v2004, 68
      %v2062 = vpop.permute.xlu0 %2061
      %2063 = vrot.lane.b32.xlu0 %v2005, 68
      %v2064 = vpop.permute.xlu0 %2063
      %2065 = vrot.lane.b32.xlu0 %v2006, 68
      %v2066 = vpop.permute.xlu0 %2065
      %2067 = vrot.lane.b32.xlu0 %v2007, 68
      %v2068 = vpop.permute.xlu0 %2067
      %2069 = vrot.lane.b32.xlu0 %v2008, 68
      %v2070 = vpop.permute.xlu0 %2069
      %2071 = vrot.lane.b32.xlu0 %v2009, 68
      %v2072 = vpop.permute.xlu0 %2071
      %2073 = vrot.lane.b32.xlu0 %v2010, 68
      %v2074 = vpop.permute.xlu0 %2073
      %2075 = vrot.lane.b32.xlu0 %v2011, 68
      %v2076 = vpop.permute.xlu0 %2075
      %2077 = vrot.lane.b32.xlu0 %v2012, 68
      %v2078 = vpop.permute.xlu0 %2077
      %2079 = vrot.lane.b32.xlu0 %v2013, 68
      %v2080 = vpop.permute.xlu0 %2079
      %2081 = vrot.lane.b32.xlu0 %v2014, 68
      %v2082 = vpop.permute.xlu0 %2081
      %2083 = vrot.lane.b32.xlu0 %v2015, 68
      %v2084 = vpop.permute.xlu0 %2083
      %2085 = vrot.lane.b32.xlu0 %v2016, 68
      %v2086 = vpop.permute.xlu0 %2085
      %2087 = vrot.lane.b32.xlu0 %v2017, 68
      %v2088 = vpop.permute.xlu0 %2087
      %2089 = vrot.lane.b32.xlu0 %v2018, 68
      %v2090 = vpop.permute.xlu0 %2089
      %vm2091 = vcmask 556032
      %v2092 = vsel %vm2091, %v2020, %v2022
      %v2093 = vsel %vm2091, %v2022, %v2024
      %v2094 = vsel %vm2091, %v2026, %v2028
      %v2095 = vsel %vm2091, %v2028, %v2030
      %v2096 = vsel %vm2091, %v2032, %v2034
      %v2097 = vsel %vm2091, %v2034, %v2036
      %v2098 = vsel %vm2091, %v2038, %v2040
      %v2099 = vsel %vm2091, %v2040, %v2042
      %v2100 = vsel %vm2091, %v2044, %v2046
      %v2101 = vsel %vm2091, %v2046, %v2048
      %v2102 = vsel %vm2091, %v2050, %v2052
      %v2103 = vsel %vm2091, %v2052, %v2054
      %v2104 = vsel %vm2091, %v2056, %v2058
      %v2105 = vsel %vm2091, %v2058, %v2060
      %v2106 = vsel %vm2091, %v2062, %v2064
      %v2107 = vsel %vm2091, %v2064, %v2066
      %v2108 = vsel %vm2091, %v2068, %v2070
      %v2109 = vsel %vm2091, %v2070, %v2072
      %v2110 = vsel %vm2091, %v2074, %v2076
      %v2111 = vsel %vm2091, %v2076, %v2078
      %v2112 = vsel %vm2091, %v2080, %v2082
      %v2113 = vsel %vm2091, %v2082, %v2084
      %v2114 = vsel %vm2091, %v2086, %v2088
      %v2115 = vsel %vm2091, %v2088, %v2090
      %2140 = vst [vmem:[#allocation2 + $0x3c0] sm:$0xff] %v2092
      %2141 = vst [vmem:[#allocation2 + $0x3c8] sm:$0xff] %v2093
      %2142 = vst [vmem:[#allocation2 + $0x3d0] sm:$0xff] %v2094
      %2143 = vst [vmem:[#allocation2 + $0x3d8] sm:$0xff] %v2095
      %2144 = vst [vmem:[#allocation2 + $0x3e0] sm:$0xff] %v2096
      %2145 = vst [vmem:[#allocation2 + $0x3e8] sm:$0xff] %v2097
      %2146 = vst [vmem:[#allocation2 + $0x3f0] sm:$0xff] %v2098
      %2147 = vst [vmem:[#allocation2 + $0x3f8] sm:$0xff] %v2099
      %2148 = vst [vmem:[#allocation2 + $0x400] sm:$0xff] %v2100
      %2149 = vst [vmem:[#allocation2 + $0x408] sm:$0xff] %v2101
      %2150 = vst [vmem:[#allocation2 + $0x410] sm:$0xff] %v2102
      %2151 = vst [vmem:[#allocation2 + $0x418] sm:$0xff] %v2103
      %2152 = vst [vmem:[#allocation2 + $0x420] sm:$0xff] %v2104
      %2153 = vst [vmem:[#allocation2 + $0x428] sm:$0xff] %v2105
      %2154 = vst [vmem:[#allocation2 + $0x430] sm:$0xff] %v2106
      %2155 = vst [vmem:[#allocation2 + $0x438] sm:$0xff] %v2107
      %2156 = vst [vmem:[#allocation2 + $0x440] sm:$0xff] %v2108
      %2157 = vst [vmem:[#allocation2 + $0x448] sm:$0xff] %v2109
      %2158 = vst [vmem:[#allocation2 + $0x450] sm:$0xff] %v2110
      %2159 = vst [vmem:[#allocation2 + $0x458] sm:$0xff] %v2111
      %2160 = vst [vmem:[#allocation2 + $0x460] sm:$0xff] %v2112
      %2161 = vst [vmem:[#allocation2 + $0x468] sm:$0xff] %v2113
      %2162 = vst [vmem:[#allocation2 + $0x470] sm:$0xff] %v2114
      %2163 = vst [vmem:[#allocation2 + $0x478] sm:$0xff] %v2115
      %v2164 = vld [vmem:[%s0] sm:$0xff]
      %v2165 = vld [vmem:[%s0 + $0x8] sm:$0xf]
      %v2166 = vld [vmem:[%s0 + $0xc] sm:$0xff]
      %v2167 = vld [vmem:[%s0 + $0x14] sm:$0xf]
      %v2168 = vld [vmem:[%s0 + $0x18] sm:$0xff]
      %v2169 = vld [vmem:[%s0 + $0x20] sm:$0xf]
      %v2170 = vld [vmem:[%s0 + $0x24] sm:$0xff]
      %v2171 = vld [vmem:[%s0 + $0x2c] sm:$0xf]
      %v2172 = vld [vmem:[%s0 + $0x30] sm:$0xff]
      %v2173 = vld [vmem:[%s0 + $0x38] sm:$0xf]
      %v2174 = vld [vmem:[%s0 + $0x3c] sm:$0xff]
      %v2175 = vld [vmem:[%s0 + $0x44] sm:$0xf]
      %v2176 = vld [vmem:[%s0 + $0x48] sm:$0xff]
      %v2177 = vld [vmem:[%s0 + $0x50] sm:$0xf]
      %v2178 = vld [vmem:[%s0 + $0x54] sm:$0xff]
      %v2179 = vld [vmem:[%s0 + $0x5c] sm:$0xf]
      %v2180 = vld [vmem:[%s0 + $0x60] sm:$0xff]
      %v2181 = vld [vmem:[%s0 + $0x68] sm:$0xf]
      %v2182 = vld [vmem:[%s0 + $0x6c] sm:$0xff]
      %v2183 = vld [vmem:[%s0 + $0x74] sm:$0xf]
      %v2184 = vld [vmem:[%s0 + $0x78] sm:$0xff]
      %v2185 = vld [vmem:[%s0 + $0x80] sm:$0xf]
      %v2186 = vld [vmem:[%s0 + $0x84] sm:$0xff]
      %v2187 = vld [vmem:[%s0 + $0x8c] sm:$0xf]
      %v2188 = vld [vmem:[%s0 + $0x90] sm:$0xff]
      %v2189 = vld [vmem:[%s0 + $0x98] sm:$0xf]
      %v2190 = vld [vmem:[%s0 + $0x9c] sm:$0xff]
      %v2191 = vld [vmem:[%s0 + $0xa4] sm:$0xf]
      %v2192 = vld [vmem:[%s0 + $0xa8] sm:$0xff]
      %v2193 = vld [vmem:[%s0 + $0xb0] sm:$0xf]
      %v2194 = vld [vmem:[%s0 + $0xb4] sm:$0xff]
      %v2195 = vld [vmem:[%s0 + $0xbc] sm:$0xf]
      %v2196 = vld [vmem:[%s0 + $0xc0] sm:$0xff]
      %v2197 = vld [vmem:[%s0 + $0xc8] sm:$0xf]
      %v2198 = vld [vmem:[%s0 + $0xcc] sm:$0xff]
      %v2199 = vld [vmem:[%s0 + $0xd4] sm:$0xf]
      %v2200 = vld [vmem:[%s0 + $0xd8] sm:$0xff]
      %v2201 = vld [vmem:[%s0 + $0xe0] sm:$0xf]
      %v2202 = vld [vmem:[%s0 + $0xe4] sm:$0xff]
      %v2203 = vld [vmem:[%s0 + $0xec] sm:$0xf]
      %v2204 = vld [vmem:[%s0 + $0xf0] sm:$0xff]
      %v2205 = vld [vmem:[%s0 + $0xf8] sm:$0xf]
      %v2206 = vld [vmem:[%s0 + $0xfc] sm:$0xff]
      %v2207 = vld [vmem:[%s0 + $0x104] sm:$0xf]
      %v2208 = vld [vmem:[%s0 + $0x108] sm:$0xff]
      %v2209 = vld [vmem:[%s0 + $0x110] sm:$0xf]
      %v2210 = vld [vmem:[%s0 + $0x114] sm:$0xff]
      %v2211 = vld [vmem:[%s0 + $0x11c] sm:$0xf]
      %v2260 = vunpack.c.l.b16 %v2164
      %v2261 = vunpack.c.h.b16 %v2164
      %v2262 = vunpack.c.l.b16 %v2165
      %v2263 = vunpack.c.l.b16 %v2166
      %v2264 = vunpack.c.h.b16 %v2166
      %v2265 = vunpack.c.l.b16 %v2167
      %v2266 = vunpack.c.l.b16 %v2168
      %v2267 = vunpack.c.h.b16 %v2168
      %v2268 = vunpack.c.l.b16 %v2169
      %v2269 = vunpack.c.l.b16 %v2170
      %v2270 = vunpack.c.h.b16 %v2170
      %v2271 = vunpack.c.l.b16 %v2171
      %v2272 = vunpack.c.l.b16 %v2172
      %v2273 = vunpack.c.h.b16 %v2172
      %v2274 = vunpack.c.l.b16 %v2173
      %v2275 = vunpack.c.l.b16 %v2174
      %v2276 = vunpack.c.h.b16 %v2174
      %v2277 = vunpack.c.l.b16 %v2175
      %v2278 = vunpack.c.l.b16 %v2176
      %v2279 = vunpack.c.h.b16 %v2176
      %v2280 = vunpack.c.l.b16 %v2177
      %v2281 = vunpack.c.l.b16 %v2178
      %v2282 = vunpack.c.h.b16 %v2178
      %v2283 = vunpack.c.l.b16 %v2179
      %v2284 = vunpack.c.l.b16 %v2180
      %v2285 = vunpack.c.h.b16 %v2180
      %v2286 = vunpack.c.l.b16 %v2181
      %v2287 = vunpack.c.l.b16 %v2182
      %v2288 = vunpack.c.h.b16 %v2182
      %v2289 = vunpack.c.l.b16 %v2183
      %v2290 = vunpack.c.l.b16 %v2184
      %v2291 = vunpack.c.h.b16 %v2184
      %v2292 = vunpack.c.l.b16 %v2185
      %v2293 = vunpack.c.l.b16 %v2186
      %v2294 = vunpack.c.h.b16 %v2186
      %v2295 = vunpack.c.l.b16 %v2187
      %v2296 = vunpack.c.l.b16 %v2188
      %v2297 = vunpack.c.h.b16 %v2188
      %v2298 = vunpack.c.l.b16 %v2189
      %v2299 = vunpack.c.l.b16 %v2190
      %v2300 = vunpack.c.h.b16 %v2190
      %v2301 = vunpack.c.l.b16 %v2191
      %v2302 = vunpack.c.l.b16 %v2192
      %v2303 = vunpack.c.h.b16 %v2192
      %v2304 = vunpack.c.l.b16 %v2193
      %v2305 = vunpack.c.l.b16 %v2194
      %v2306 = vunpack.c.h.b16 %v2194
      %v2307 = vunpack.c.l.b16 %v2195
      %v2308 = vunpack.c.l.b16 %v2196
      %v2309 = vunpack.c.h.b16 %v2196
      %v2310 = vunpack.c.l.b16 %v2197
      %v2311 = vunpack.c.l.b16 %v2198
      %v2312 = vunpack.c.h.b16 %v2198
      %v2313 = vunpack.c.l.b16 %v2199
      %v2314 = vunpack.c.l.b16 %v2200
      %v2315 = vunpack.c.h.b16 %v2200
      %v2316 = vunpack.c.l.b16 %v2201
      %v2317 = vunpack.c.l.b16 %v2202
      %v2318 = vunpack.c.h.b16 %v2202
      %v2319 = vunpack.c.l.b16 %v2203
      %v2320 = vunpack.c.l.b16 %v2204
      %v2321 = vunpack.c.h.b16 %v2204
      %v2322 = vunpack.c.l.b16 %v2205
      %v2323 = vunpack.c.l.b16 %v2206
      %v2324 = vunpack.c.h.b16 %v2206
      %v2325 = vunpack.c.l.b16 %v2207
      %v2326 = vunpack.c.l.b16 %v2208
      %v2327 = vunpack.c.h.b16 %v2208
      %v2328 = vunpack.c.l.b16 %v2209
      %v2329 = vunpack.c.l.b16 %v2210
      %v2330 = vunpack.c.h.b16 %v2210
      %v2331 = vunpack.c.l.b16 %v2211
      %v2332 = vpack.c.b16 %v2263, %v2260
      %v2333 = vpack.c.b16 %v2264, %v2261
      %v2334 = vpack.c.b16 %v2265, %v2262
      %v2335 = vpack.c.b16 %v2269, %v2266
      %v2336 = vpack.c.b16 %v2270, %v2267
      %v2337 = vpack.c.b16 %v2271, %v2268
      %v2338 = vpack.c.b16 %v2275, %v2272
      %v2339 = vpack.c.b16 %v2276, %v2273
      %v2340 = vpack.c.b16 %v2277, %v2274
      %v2341 = vpack.c.b16 %v2281, %v2278
      %v2342 = vpack.c.b16 %v2282, %v2279
      %v2343 = vpack.c.b16 %v2283, %v2280
      %v2344 = vpack.c.b16 %v2287, %v2284
      %v2345 = vpack.c.b16 %v2288, %v2285
      %v2346 = vpack.c.b16 %v2289, %v2286
      %v2347 = vpack.c.b16 %v2293, %v2290
      %v2348 = vpack.c.b16 %v2294, %v2291
      %v2349 = vpack.c.b16 %v2295, %v2292
      %v2350 = vpack.c.b16 %v2299, %v2296
      %v2351 = vpack.c.b16 %v2300, %v2297
      %v2352 = vpack.c.b16 %v2301, %v2298
      %v2353 = vpack.c.b16 %v2305, %v2302
      %v2354 = vpack.c.b16 %v2306, %v2303
      %v2355 = vpack.c.b16 %v2307, %v2304
      %v2356 = vpack.c.b16 %v2311, %v2308
      %v2357 = vpack.c.b16 %v2312, %v2309
      %v2358 = vpack.c.b16 %v2313, %v2310
      %v2359 = vpack.c.b16 %v2317, %v2314
      %v2360 = vpack.c.b16 %v2318, %v2315
      %v2361 = vpack.c.b16 %v2319, %v2316
      %v2362 = vpack.c.b16 %v2323, %v2320
      %v2363 = vpack.c.b16 %v2324, %v2321
      %v2364 = vpack.c.b16 %v2325, %v2322
      %v2365 = vpack.c.b16 %v2329, %v2326
      %v2366 = vpack.c.b16 %v2330, %v2327
      %v2367 = vpack.c.b16 %v2331, %v2328
      %2368 = vrot.lane.b32.xlu0 %v2332, 56
      %v2369 = vpop.permute.xlu0 %2368
      %2370 = vrot.lane.b32.xlu0 %v2333, 56
      %v2371 = vpop.permute.xlu0 %2370
      %2372 = vrot.lane.b32.xlu0 %v2334, 56
      %v2373 = vpop.permute.xlu0 %2372
      %2374 = vrot.lane.b32.xlu0 %v2335, 56
      %v2375 = vpop.permute.xlu0 %2374
      %2376 = vrot.lane.b32.xlu0 %v2336, 56
      %v2377 = vpop.permute.xlu0 %2376
      %2378 = vrot.lane.b32.xlu0 %v2337, 56
      %v2379 = vpop.permute.xlu0 %2378
      %2380 = vrot.lane.b32.xlu0 %v2338, 56
      %v2381 = vpop.permute.xlu0 %2380
      %2382 = vrot.lane.b32.xlu0 %v2339, 56
      %v2383 = vpop.permute.xlu0 %2382
      %2384 = vrot.lane.b32.xlu0 %v2340, 56
      %v2385 = vpop.permute.xlu0 %2384
      %2386 = vrot.lane.b32.xlu0 %v2341, 56
      %v2387 = vpop.permute.xlu0 %2386
      %2388 = vrot.lane.b32.xlu0 %v2342, 56
      %v2389 = vpop.permute.xlu0 %2388
      %2390 = vrot.lane.b32.xlu0 %v2343, 56
      %v2391 = vpop.permute.xlu0 %2390
      %2392 = vrot.lane.b32.xlu0 %v2344, 56
      %v2393 = vpop.permute.xlu0 %2392
      %2394 = vrot.lane.b32.xlu0 %v2345, 56
      %v2395 = vpop.permute.xlu0 %2394
      %2396 = vrot.lane.b32.xlu0 %v2346, 56
      %v2397 = vpop.permute.xlu0 %2396
      %2398 = vrot.lane.b32.xlu0 %v2347, 56
      %v2399 = vpop.permute.xlu0 %2398
      %2400 = vrot.lane.b32.xlu0 %v2348, 56
      %v2401 = vpop.permute.xlu0 %2400
      %2402 = vrot.lane.b32.xlu0 %v2349, 56
      %v2403 = vpop.permute.xlu0 %2402
      %2404 = vrot.lane.b32.xlu0 %v2350, 56
      %v2405 = vpop.permute.xlu0 %2404
      %2406 = vrot.lane.b32.xlu0 %v2351, 56
      %v2407 = vpop.permute.xlu0 %2406
      %2408 = vrot.lane.b32.xlu0 %v2352, 56
      %v2409 = vpop.permute.xlu0 %2408
      %2410 = vrot.lane.b32.xlu0 %v2353, 56
      %v2411 = vpop.permute.xlu0 %2410
      %2412 = vrot.lane.b32.xlu0 %v2354, 56
      %v2413 = vpop.permute.xlu0 %2412
      %2414 = vrot.lane.b32.xlu0 %v2355, 56
      %v2415 = vpop.permute.xlu0 %2414
      %2416 = vrot.lane.b32.xlu0 %v2356, 56
      %v2417 = vpop.permute.xlu0 %2416
      %2418 = vrot.lane.b32.xlu0 %v2357, 56
      %v2419 = vpop.permute.xlu0 %2418
      %2420 = vrot.lane.b32.xlu0 %v2358, 56
      %v2421 = vpop.permute.xlu0 %2420
      %2422 = vrot.lane.b32.xlu0 %v2359, 56
      %v2423 = vpop.permute.xlu0 %2422
      %2424 = vrot.lane.b32.xlu0 %v2360, 56
      %v2425 = vpop.permute.xlu0 %2424
      %2426 = vrot.lane.b32.xlu0 %v2361, 56
      %v2427 = vpop.permute.xlu0 %2426
      %2428 = vrot.lane.b32.xlu0 %v2362, 56
      %v2429 = vpop.permute.xlu0 %2428
      %2430 = vrot.lane.b32.xlu0 %v2363, 56
      %v2431 = vpop.permute.xlu0 %2430
      %2432 = vrot.lane.b32.xlu0 %v2364, 56
      %v2433 = vpop.permute.xlu0 %2432
      %2434 = vrot.lane.b32.xlu0 %v2365, 56
      %v2435 = vpop.permute.xlu0 %2434
      %2436 = vrot.lane.b32.xlu0 %v2366, 56
      %v2437 = vpop.permute.xlu0 %2436
      %2438 = vrot.lane.b32.xlu0 %v2367, 56
      %v2439 = vpop.permute.xlu0 %2438
      %vm2440 = vcmask 457728
      %v2441 = vsel %vm2440, %v2369, %v2371
      %v2442 = vsel %vm2440, %v2371, %v2373
      %v2443 = vsel %vm2440, %v2375, %v2377
      %v2444 = vsel %vm2440, %v2377, %v2379
      %v2445 = vsel %vm2440, %v2381, %v2383
      %v2446 = vsel %vm2440, %v2383, %v2385
      %v2447 = vsel %vm2440, %v2387, %v2389
      %v2448 = vsel %vm2440, %v2389, %v2391
      %v2449 = vsel %vm2440, %v2393, %v2395
      %v2450 = vsel %vm2440, %v2395, %v2397
      %v2451 = vsel %vm2440, %v2399, %v2401
      %v2452 = vsel %vm2440, %v2401, %v2403
      %v2453 = vsel %vm2440, %v2405, %v2407
      %v2454 = vsel %vm2440, %v2407, %v2409
      %v2455 = vsel %vm2440, %v2411, %v2413
      %v2456 = vsel %vm2440, %v2413, %v2415
      %v2457 = vsel %vm2440, %v2417, %v2419
      %v2458 = vsel %vm2440, %v2419, %v2421
      %v2459 = vsel %vm2440, %v2423, %v2425
      %v2460 = vsel %vm2440, %v2425, %v2427
      %v2461 = vsel %vm2440, %v2429, %v2431
      %v2462 = vsel %vm2440, %v2431, %v2433
      %v2463 = vsel %vm2440, %v2435, %v2437
      %v2464 = vsel %vm2440, %v2437, %v2439
      %2489 = vst [vmem:[#allocation2 + $0x480] sm:$0xff] %v2441
      %2490 = vst [vmem:[#allocation2 + $0x488] sm:$0xff] %v2442
      %2491 = vst [vmem:[#allocation2 + $0x490] sm:$0xff] %v2443
      %2492 = vst [vmem:[#allocation2 + $0x498] sm:$0xff] %v2444
      %2493 = vst [vmem:[#allocation2 + $0x4a0] sm:$0xff] %v2445
      %2494 = vst [vmem:[#allocation2 + $0x4a8] sm:$0xff] %v2446
      %2495 = vst [vmem:[#allocation2 + $0x4b0] sm:$0xff] %v2447
      %2496 = vst [vmem:[#allocation2 + $0x4b8] sm:$0xff] %v2448
      %2497 = vst [vmem:[#allocation2 + $0x4c0] sm:$0xff] %v2449
      %2498 = vst [vmem:[#allocation2 + $0x4c8] sm:$0xff] %v2450
      %2499 = vst [vmem:[#allocation2 + $0x4d0] sm:$0xff] %v2451
      %2500 = vst [vmem:[#allocation2 + $0x4d8] sm:$0xff] %v2452
      %2501 = vst [vmem:[#allocation2 + $0x4e0] sm:$0xff] %v2453
      %2502 = vst [vmem:[#allocation2 + $0x4e8] sm:$0xff] %v2454
      %2503 = vst [vmem:[#allocation2 + $0x4f0] sm:$0xff] %v2455
      %2504 = vst [vmem:[#allocation2 + $0x4f8] sm:$0xff] %v2456
      %2505 = vst [vmem:[#allocation2 + $0x500] sm:$0xff] %v2457
      %2506 = vst [vmem:[#allocation2 + $0x508] sm:$0xff] %v2458
      %2507 = vst [vmem:[#allocation2 + $0x510] sm:$0xff] %v2459
      %2508 = vst [vmem:[#allocation2 + $0x518] sm:$0xff] %v2460
      %2509 = vst [vmem:[#allocation2 + $0x520] sm:$0xff] %v2461
      %2510 = vst [vmem:[#allocation2 + $0x528] sm:$0xff] %v2462
      %2511 = vst [vmem:[#allocation2 + $0x530] sm:$0xff] %v2463
      %2512 = vst [vmem:[#allocation2 + $0x538] sm:$0xff] %v2464
      %v2513 = vld [vmem:[%s229] sm:$0xff]
      %v2514 = vld [vmem:[%s229 + $0x8] sm:$0xff]
      %v2515 = vld [vmem:[%s229 + $0x10] sm:$0xff]
      %v2516 = vld [vmem:[%s229 + $0x18] sm:$0xff]
      %v2517 = vld [vmem:[%s229 + $0x20] sm:$0xff]
      %v2518 = vld [vmem:[%s229 + $0x28] sm:$0xf]
      %v2519 = vld [vmem:[%s229 + $0x2c] sm:$0xff]
      %v2520 = vld [vmem:[%s229 + $0x34] sm:$0xff]
      %v2521 = vld [vmem:[%s229 + $0x3c] sm:$0xff]
      %v2522 = vld [vmem:[%s229 + $0x44] sm:$0xff]
      %v2523 = vld [vmem:[%s229 + $0x4c] sm:$0xff]
      %v2524 = vld [vmem:[%s229 + $0x54] sm:$0xf]
      %v2525 = vld [vmem:[%s229 + $0x58] sm:$0xff]
      %v2526 = vld [vmem:[%s229 + $0x60] sm:$0xff]
      %v2527 = vld [vmem:[%s229 + $0x68] sm:$0xff]
      %v2528 = vld [vmem:[%s229 + $0x70] sm:$0xff]
      %v2529 = vld [vmem:[%s229 + $0x78] sm:$0xff]
      %v2530 = vld [vmem:[%s229 + $0x80] sm:$0xf]
      %v2531 = vld [vmem:[%s229 + $0x84] sm:$0xff]
      %v2532 = vld [vmem:[%s229 + $0x8c] sm:$0xff]
      %v2533 = vld [vmem:[%s229 + $0x94] sm:$0xff]
      %v2534 = vld [vmem:[%s229 + $0x9c] sm:$0xff]
      %v2535 = vld [vmem:[%s229 + $0xa4] sm:$0xff]
      %v2536 = vld [vmem:[%s229 + $0xac] sm:$0xf]
      %v2537 = vld [vmem:[%s229 + $0xb0] sm:$0xff]
      %v2538 = vld [vmem:[%s229 + $0xb8] sm:$0xff]
      %v2539 = vld [vmem:[%s229 + $0xc0] sm:$0xff]
      %v2540 = vld [vmem:[%s229 + $0xc8] sm:$0xff]
      %v2541 = vld [vmem:[%s229 + $0xd0] sm:$0xff]
      %v2542 = vld [vmem:[%s229 + $0xd8] sm:$0xf]
      %v2543 = vld [vmem:[%s229 + $0xdc] sm:$0xff]
      %v2544 = vld [vmem:[%s229 + $0xe4] sm:$0xff]
      %v2545 = vld [vmem:[%s229 + $0xec] sm:$0xff]
      %v2546 = vld [vmem:[%s229 + $0xf4] sm:$0xff]
      %v2547 = vld [vmem:[%s229 + $0xfc] sm:$0xff]
      %v2548 = vld [vmem:[%s229 + $0x104] sm:$0xf]
      %v2549 = vld [vmem:[%s229 + $0x108] sm:$0xff]
      %v2550 = vld [vmem:[%s229 + $0x110] sm:$0xff]
      %v2551 = vld [vmem:[%s229 + $0x118] sm:$0xff]
      %v2552 = vld [vmem:[%s229 + $0x120] sm:$0xff]
      %v2553 = vld [vmem:[%s229 + $0x128] sm:$0xff]
      %v2554 = vld [vmem:[%s229 + $0x130] sm:$0xf]
      %v2555 = vld [vmem:[%s229 + $0x134] sm:$0xff]
      %v2556 = vld [vmem:[%s229 + $0x13c] sm:$0xff]
      %v2557 = vld [vmem:[%s229 + $0x144] sm:$0xff]
      %v2558 = vld [vmem:[%s229 + $0x14c] sm:$0xff]
      %v2559 = vld [vmem:[%s229 + $0x154] sm:$0xff]
      %v2560 = vld [vmem:[%s229 + $0x15c] sm:$0xf]
      %v2561 = vld [vmem:[%s229 + $0x160] sm:$0xff]
      %v2562 = vld [vmem:[%s229 + $0x168] sm:$0xff]
      %v2563 = vld [vmem:[%s229 + $0x170] sm:$0xff]
      %v2564 = vld [vmem:[%s229 + $0x178] sm:$0xff]
      %v2565 = vld [vmem:[%s229 + $0x180] sm:$0xff]
      %v2566 = vld [vmem:[%s229 + $0x188] sm:$0xf]
      %v2567 = vld [vmem:[%s229 + $0x18c] sm:$0xff]
      %v2568 = vld [vmem:[%s229 + $0x194] sm:$0xff]
      %v2569 = vld [vmem:[%s229 + $0x19c] sm:$0xff]
      %v2570 = vld [vmem:[%s229 + $0x1a4] sm:$0xff]
      %v2571 = vld [vmem:[%s229 + $0x1ac] sm:$0xff]
      %v2572 = vld [vmem:[%s229 + $0x1b4] sm:$0xf]
      %v2573 = vld [vmem:[%s229 + $0x1b8] sm:$0xff]
      %v2574 = vld [vmem:[%s229 + $0x1c0] sm:$0xff]
      %v2575 = vld [vmem:[%s229 + $0x1c8] sm:$0xff]
      %v2576 = vld [vmem:[%s229 + $0x1d0] sm:$0xff]
      %v2577 = vld [vmem:[%s229 + $0x1d8] sm:$0xff]
      %v2578 = vld [vmem:[%s229 + $0x1e0] sm:$0xf]
      %v2579 = vld [vmem:[%s229 + $0x1e4] sm:$0xff]
      %v2580 = vld [vmem:[%s229 + $0x1ec] sm:$0xff]
      %v2581 = vld [vmem:[%s229 + $0x1f4] sm:$0xff]
      %v2582 = vld [vmem:[%s229 + $0x1fc] sm:$0xff]
      %v2583 = vld [vmem:[%s229 + $0x204] sm:$0xff]
      %v2584 = vld [vmem:[%s229 + $0x20c] sm:$0xf]
      %v2585 = vld [vmem:[#allocation2] sm:$0xff]
      %v2586 = vld [vmem:[#allocation2 + $0x8] sm:$0xff]
      %v2587 = vld [vmem:[#allocation2 + $0x10] sm:$0xff]
      %v2588 = vld [vmem:[#allocation2 + $0x18] sm:$0xff]
      %v2589 = vld [vmem:[#allocation2 + $0x20] sm:$0xff]
      %v2590 = vld [vmem:[#allocation2 + $0x28] sm:$0xff]
      %v2591 = vld [vmem:[#allocation2 + $0x30] sm:$0xff]
      %v2592 = vld [vmem:[#allocation2 + $0x38] sm:$0xff]
      %v2593 = vld [vmem:[#allocation2 + $0x40] sm:$0xff]
      %v2594 = vld [vmem:[#allocation2 + $0x48] sm:$0xff]
      %v2595 = vld [vmem:[#allocation2 + $0x50] sm:$0xff]
      %v2596 = vld [vmem:[#allocation2 + $0x58] sm:$0xff]
      %v2597 = vld [vmem:[#allocation2 + $0x60] sm:$0xff]
      %v2598 = vld [vmem:[#allocation2 + $0x68] sm:$0xff]
      %v2599 = vld [vmem:[#allocation2 + $0x70] sm:$0xff]
      %v2600 = vld [vmem:[#allocation2 + $0x78] sm:$0xff]
      %v2601 = vld [vmem:[#allocation2 + $0x80] sm:$0xff]
      %v2602 = vld [vmem:[#allocation2 + $0x88] sm:$0xff]
      %v2603 = vld [vmem:[#allocation2 + $0x90] sm:$0xff]
      %v2604 = vld [vmem:[#allocation2 + $0x98] sm:$0xff]
      %v2605 = vld [vmem:[#allocation2 + $0xa0] sm:$0xff]
      %v2606 = vld [vmem:[#allocation2 + $0xa8] sm:$0xff]
      %v2607 = vld [vmem:[#allocation2 + $0xb0] sm:$0xff]
      %v2608 = vld [vmem:[#allocation2 + $0xb8] sm:$0xff]
      %v2609 = vld [vmem:[#allocation2 + $0xc0] sm:$0xff]
      %v2610 = vld [vmem:[#allocation2 + $0xc8] sm:$0xff]
      %v2611 = vld [vmem:[#allocation2 + $0xd0] sm:$0xff]
      %v2612 = vld [vmem:[#allocation2 + $0xd8] sm:$0xff]
      %v2613 = vld [vmem:[#allocation2 + $0xe0] sm:$0xff]
      %v2614 = vld [vmem:[#allocation2 + $0xe8] sm:$0xff]
      %v2615 = vld [vmem:[#allocation2 + $0xf0] sm:$0xff]
      %v2616 = vld [vmem:[#allocation2 + $0xf8] sm:$0xff]
      %v2617 = vld [vmem:[#allocation2 + $0x100] sm:$0xff]
      %v2618 = vld [vmem:[#allocation2 + $0x108] sm:$0xff]
      %v2619 = vld [vmem:[#allocation2 + $0x110] sm:$0xff]
      %v2620 = vld [vmem:[#allocation2 + $0x118] sm:$0xff]
      %v2621 = vld [vmem:[#allocation2 + $0x120] sm:$0xff]
      %v2622 = vld [vmem:[#allocation2 + $0x128] sm:$0xff]
      %v2623 = vld [vmem:[#allocation2 + $0x130] sm:$0xff]
      %v2624 = vld [vmem:[#allocation2 + $0x138] sm:$0xff]
      %v2625 = vld [vmem:[#allocation2 + $0x140] sm:$0xff]
      %v2626 = vld [vmem:[#allocation2 + $0x148] sm:$0xff]
      %v2627 = vld [vmem:[#allocation2 + $0x150] sm:$0xff]
      %v2628 = vld [vmem:[#allocation2 + $0x158] sm:$0xff]
      %v2629 = vld [vmem:[#allocation2 + $0x160] sm:$0xff]
      %v2630 = vld [vmem:[#allocation2 + $0x168] sm:$0xff]
      %v2631 = vld [vmem:[#allocation2 + $0x170] sm:$0xff]
      %v2632 = vld [vmem:[#allocation2 + $0x178] sm:$0xff]
      %v2633 = vld [vmem:[#allocation2 + $0x180] sm:$0xff]
      %v2634 = vld [vmem:[#allocation2 + $0x188] sm:$0xff]
      %v2635 = vld [vmem:[#allocation2 + $0x190] sm:$0xff]
      %v2636 = vld [vmem:[#allocation2 + $0x198] sm:$0xff]
      %v2637 = vld [vmem:[#allocation2 + $0x1a0] sm:$0xff]
      %v2638 = vld [vmem:[#allocation2 + $0x1a8] sm:$0xff]
      %v2639 = vld [vmem:[#allocation2 + $0x1b0] sm:$0xff]
      %v2640 = vld [vmem:[#allocation2 + $0x1b8] sm:$0xff]
      %v2641 = vld [vmem:[#allocation2 + $0x1c0] sm:$0xff]
      %v2642 = vld [vmem:[#allocation2 + $0x1c8] sm:$0xff]
      %v2643 = vld [vmem:[#allocation2 + $0x1d0] sm:$0xff]
      %v2644 = vld [vmem:[#allocation2 + $0x1d8] sm:$0xff]
      %v2645 = vld [vmem:[#allocation2 + $0x1e0] sm:$0xff]
      %v2646 = vld [vmem:[#allocation2 + $0x1e8] sm:$0xff]
      %v2647 = vld [vmem:[#allocation2 + $0x1f0] sm:$0xff]
      %v2648 = vld [vmem:[#allocation2 + $0x1f8] sm:$0xff]
      %v2649 = vld [vmem:[#allocation2 + $0x200] sm:$0xff]
      %v2650 = vld [vmem:[#allocation2 + $0x208] sm:$0xff]
      %v2651 = vld [vmem:[#allocation2 + $0x210] sm:$0xff]
      %v2652 = vld [vmem:[#allocation2 + $0x218] sm:$0xff]
      %v2653 = vld [vmem:[#allocation2 + $0x220] sm:$0xff]
      %v2654 = vld [vmem:[#allocation2 + $0x228] sm:$0xff]
      %v2655 = vld [vmem:[#allocation2 + $0x230] sm:$0xff]
      %v2656 = vld [vmem:[#allocation2 + $0x238] sm:$0xff]
      %v2657 = vld [vmem:[#allocation2 + $0x240] sm:$0xff]
      %v2658 = vld [vmem:[#allocation2 + $0x248] sm:$0xff]
      %v2659 = vld [vmem:[#allocation2 + $0x250] sm:$0xff]
      %v2660 = vld [vmem:[#allocation2 + $0x258] sm:$0xff]
      %v2661 = vld [vmem:[#allocation2 + $0x260] sm:$0xff]
      %v2662 = vld [vmem:[#allocation2 + $0x268] sm:$0xff]
      %v2663 = vld [vmem:[#allocation2 + $0x270] sm:$0xff]
      %v2664 = vld [vmem:[#allocation2 + $0x278] sm:$0xff]
      %v2665 = vld [vmem:[#allocation2 + $0x280] sm:$0xff]
      %v2666 = vld [vmem:[#allocation2 + $0x288] sm:$0xff]
      %v2667 = vld [vmem:[#allocation2 + $0x290] sm:$0xff]
      %v2668 = vld [vmem:[#allocation2 + $0x298] sm:$0xff]
      %v2669 = vld [vmem:[#allocation2 + $0x2a0] sm:$0xff]
      %v2670 = vld [vmem:[#allocation2 + $0x2a8] sm:$0xff]
      %v2671 = vld [vmem:[#allocation2 + $0x2b0] sm:$0xff]
      %v2672 = vld [vmem:[#allocation2 + $0x2b8] sm:$0xff]
      %v2673 = vld [vmem:[#allocation2 + $0x2c0] sm:$0xff]
      %v2674 = vld [vmem:[#allocation2 + $0x2c8] sm:$0xff]
      %v2675 = vld [vmem:[#allocation2 + $0x2d0] sm:$0xff]
      %v2676 = vld [vmem:[#allocation2 + $0x2d8] sm:$0xff]
      %v2677 = vld [vmem:[#allocation2 + $0x2e0] sm:$0xff]
      %v2678 = vld [vmem:[#allocation2 + $0x2e8] sm:$0xff]
      %v2679 = vld [vmem:[#allocation2 + $0x2f0] sm:$0xff]
      %v2680 = vld [vmem:[#allocation2 + $0x2f8] sm:$0xff]
      %v2681 = vld [vmem:[#allocation2 + $0x300] sm:$0xff]
      %v2682 = vld [vmem:[#allocation2 + $0x308] sm:$0xff]
      %v2683 = vld [vmem:[#allocation2 + $0x310] sm:$0xff]
      %v2684 = vld [vmem:[#allocation2 + $0x318] sm:$0xff]
      %v2685 = vld [vmem:[#allocation2 + $0x320] sm:$0xff]
      %v2686 = vld [vmem:[#allocation2 + $0x328] sm:$0xff]
      %v2687 = vld [vmem:[#allocation2 + $0x330] sm:$0xff]
      %v2688 = vld [vmem:[#allocation2 + $0x338] sm:$0xff]
      %v2689 = vld [vmem:[#allocation2 + $0x340] sm:$0xff]
      %v2690 = vld [vmem:[#allocation2 + $0x348] sm:$0xff]
      %v2691 = vld [vmem:[#allocation2 + $0x350] sm:$0xff]
      %v2692 = vld [vmem:[#allocation2 + $0x358] sm:$0xff]
      %v2693 = vld [vmem:[#allocation2 + $0x360] sm:$0xff]
      %v2694 = vld [vmem:[#allocation2 + $0x368] sm:$0xff]
      %v2695 = vld [vmem:[#allocation2 + $0x370] sm:$0xff]
      %v2696 = vld [vmem:[#allocation2 + $0x378] sm:$0xff]
      %v2697 = vld [vmem:[#allocation2 + $0x380] sm:$0xff]
      %v2698 = vld [vmem:[#allocation2 + $0x388] sm:$0xff]
      %v2699 = vld [vmem:[#allocation2 + $0x390] sm:$0xff]
      %v2700 = vld [vmem:[#allocation2 + $0x398] sm:$0xff]
      %v2701 = vld [vmem:[#allocation2 + $0x3a0] sm:$0xff]
      %v2702 = vld [vmem:[#allocation2 + $0x3a8] sm:$0xff]
      %v2703 = vld [vmem:[#allocation2 + $0x3b0] sm:$0xff]
      %v2704 = vld [vmem:[#allocation2 + $0x3b8] sm:$0xff]
      %v2705 = vld [vmem:[#allocation2 + $0x3c0] sm:$0xff]
      %v2706 = vld [vmem:[#allocation2 + $0x3c8] sm:$0xff]
      %v2707 = vld [vmem:[#allocation2 + $0x3d0] sm:$0xff]
      %v2708 = vld [vmem:[#allocation2 + $0x3d8] sm:$0xff]
      %v2709 = vld [vmem:[#allocation2 + $0x3e0] sm:$0xff]
      %v2710 = vld [vmem:[#allocation2 + $0x3e8] sm:$0xff]
      %v2711 = vld [vmem:[#allocation2 + $0x3f0] sm:$0xff]
      %v2712 = vld [vmem:[#allocation2 + $0x3f8] sm:$0xff]
      %v2713 = vld [vmem:[#allocation2 + $0x400] sm:$0xff]
      %v2714 = vld [vmem:[#allocation2 + $0x408] sm:$0xff]
      %v2715 = vld [vmem:[#allocation2 + $0x410] sm:$0xff]
      %v2716 = vld [vmem:[#allocation2 + $0x418] sm:$0xff]
      %v2717 = vld [vmem:[#allocation2 + $0x420] sm:$0xff]
      %v2718 = vld [vmem:[#allocation2 + $0x428] sm:$0xff]
      %v2719 = vld [vmem:[#allocation2 + $0x430] sm:$0xff]
      %v2720 = vld [vmem:[#allocation2 + $0x438] sm:$0xff]
      %v2721 = vld [vmem:[#allocation2 + $0x440] sm:$0xff]
      %v2722 = vld [vmem:[#allocation2 + $0x448] sm:$0xff]
      %v2723 = vld [vmem:[#allocation2 + $0x450] sm:$0xff]
      %v2724 = vld [vmem:[#allocation2 + $0x458] sm:$0xff]
      %v2725 = vld [vmem:[#allocation2 + $0x460] sm:$0xff]
      %v2726 = vld [vmem:[#allocation2 + $0x468] sm:$0xff]
      %v2727 = vld [vmem:[#allocation2 + $0x470] sm:$0xff]
      %v2728 = vld [vmem:[#allocation2 + $0x478] sm:$0xff]
      %v2729 = vld [vmem:[#allocation2 + $0x480] sm:$0xff]
      %v2730 = vld [vmem:[#allocation2 + $0x488] sm:$0xff]
      %v2731 = vld [vmem:[#allocation2 + $0x490] sm:$0xff]
      %v2732 = vld [vmem:[#allocation2 + $0x498] sm:$0xff]
      %v2733 = vld [vmem:[#allocation2 + $0x4a0] sm:$0xff]
      %v2734 = vld [vmem:[#allocation2 + $0x4a8] sm:$0xff]
      %v2735 = vld [vmem:[#allocation2 + $0x4b0] sm:$0xff]
      %v2736 = vld [vmem:[#allocation2 + $0x4b8] sm:$0xff]
      %v2737 = vld [vmem:[#allocation2 + $0x4c0] sm:$0xff]
      %v2738 = vld [vmem:[#allocation2 + $0x4c8] sm:$0xff]
      %v2739 = vld [vmem:[#allocation2 + $0x4d0] sm:$0xff]
      %v2740 = vld [vmem:[#allocation2 + $0x4d8] sm:$0xff]
      %v2741 = vld [vmem:[#allocation2 + $0x4e0] sm:$0xff]
      %v2742 = vld [vmem:[#allocation2 + $0x4e8] sm:$0xff]
      %v2743 = vld [vmem:[#allocation2 + $0x4f0] sm:$0xff]
      %v2744 = vld [vmem:[#allocation2 + $0x4f8] sm:$0xff]
      %v2745 = vld [vmem:[#allocation2 + $0x500] sm:$0xff]
      %v2746 = vld [vmem:[#allocation2 + $0x508] sm:$0xff]
      %v2747 = vld [vmem:[#allocation2 + $0x510] sm:$0xff]
      %v2748 = vld [vmem:[#allocation2 + $0x518] sm:$0xff]
      %v2749 = vld [vmem:[#allocation2 + $0x520] sm:$0xff]
      %v2750 = vld [vmem:[#allocation2 + $0x528] sm:$0xff]
      %v2751 = vld [vmem:[#allocation2 + $0x530] sm:$0xff]
      %v2752 = vld [vmem:[#allocation2 + $0x538] sm:$0xff]
      %v2825 = vunpack.c.l.b16 %v2513
      %v2826 = vunpack.c.h.b16 %v2513
      %v2827 = vunpack.c.l.b16 %v2514
      %v2828 = vunpack.c.h.b16 %v2514
      %v2829 = vunpack.c.l.b16 %v2515
      %v2830 = vunpack.c.h.b16 %v2515
      %v2831 = vunpack.c.l.b16 %v2516
      %v2832 = vunpack.c.h.b16 %v2516
      %v2833 = vunpack.c.l.b16 %v2517
      %v2834 = vunpack.c.h.b16 %v2517
      %v2835 = vunpack.c.l.b16 %v2518
      %v2836 = vunpack.c.l.b16 %v2519
      %v2837 = vunpack.c.h.b16 %v2519
      %v2838 = vunpack.c.l.b16 %v2520
      %v2839 = vunpack.c.h.b16 %v2520
      %v2840 = vunpack.c.l.b16 %v2521
      %v2841 = vunpack.c.h.b16 %v2521
      %v2842 = vunpack.c.l.b16 %v2522
      %v2843 = vunpack.c.h.b16 %v2522
      %v2844 = vunpack.c.l.b16 %v2523
      %v2845 = vunpack.c.h.b16 %v2523
      %v2846 = vunpack.c.l.b16 %v2524
      %v2847 = vunpack.c.l.b16 %v2525
      %v2848 = vunpack.c.h.b16 %v2525
      %v2849 = vunpack.c.l.b16 %v2526
      %v2850 = vunpack.c.h.b16 %v2526
      %v2851 = vunpack.c.l.b16 %v2527
      %v2852 = vunpack.c.h.b16 %v2527
      %v2853 = vunpack.c.l.b16 %v2528
      %v2854 = vunpack.c.h.b16 %v2528
      %v2855 = vunpack.c.l.b16 %v2529
      %v2856 = vunpack.c.h.b16 %v2529
      %v2857 = vunpack.c.l.b16 %v2530
      %v2858 = vunpack.c.l.b16 %v2531
      %v2859 = vunpack.c.h.b16 %v2531
      %v2860 = vunpack.c.l.b16 %v2532
      %v2861 = vunpack.c.h.b16 %v2532
      %v2862 = vunpack.c.l.b16 %v2533
      %v2863 = vunpack.c.h.b16 %v2533
      %v2864 = vunpack.c.l.b16 %v2534
      %v2865 = vunpack.c.h.b16 %v2534
      %v2866 = vunpack.c.l.b16 %v2535
      %v2867 = vunpack.c.h.b16 %v2535
      %v2868 = vunpack.c.l.b16 %v2536
      %v2869 = vunpack.c.l.b16 %v2537
      %v2870 = vunpack.c.h.b16 %v2537
      %v2871 = vunpack.c.l.b16 %v2538
      %v2872 = vunpack.c.h.b16 %v2538
      %v2873 = vunpack.c.l.b16 %v2539
      %v2874 = vunpack.c.h.b16 %v2539
      %v2875 = vunpack.c.l.b16 %v2540
      %v2876 = vunpack.c.h.b16 %v2540
      %v2877 = vunpack.c.l.b16 %v2541
      %v2878 = vunpack.c.h.b16 %v2541
      %v2879 = vunpack.c.l.b16 %v2542
      %v2880 = vunpack.c.l.b16 %v2543
      %v2881 = vunpack.c.h.b16 %v2543
      %v2882 = vunpack.c.l.b16 %v2544
      %v2883 = vunpack.c.h.b16 %v2544
      %v2884 = vunpack.c.l.b16 %v2545
      %v2885 = vunpack.c.h.b16 %v2545
      %v2886 = vunpack.c.l.b16 %v2546
      %v2887 = vunpack.c.h.b16 %v2546
      %v2888 = vunpack.c.l.b16 %v2547
      %v2889 = vunpack.c.h.b16 %v2547
      %v2890 = vunpack.c.l.b16 %v2548
      %v2891 = vunpack.c.l.b16 %v2549
      %v2892 = vunpack.c.h.b16 %v2549
      %v2893 = vunpack.c.l.b16 %v2550
      %v2894 = vunpack.c.h.b16 %v2550
      %v2895 = vunpack.c.l.b16 %v2551
      %v2896 = vunpack.c.h.b16 %v2551
      %v2897 = vunpack.c.l.b16 %v2552
      %v2898 = vunpack.c.h.b16 %v2552
      %v2899 = vunpack.c.l.b16 %v2553
      %v2900 = vunpack.c.h.b16 %v2553
      %v2901 = vunpack.c.l.b16 %v2554
      %v2902 = vunpack.c.l.b16 %v2555
      %v2903 = vunpack.c.h.b16 %v2555
      %v2904 = vunpack.c.l.b16 %v2556
      %v2905 = vunpack.c.h.b16 %v2556
      %v2906 = vunpack.c.l.b16 %v2557
      %v2907 = vunpack.c.h.b16 %v2557
      %v2908 = vunpack.c.l.b16 %v2558
      %v2909 = vunpack.c.h.b16 %v2558
      %v2910 = vunpack.c.l.b16 %v2559
      %v2911 = vunpack.c.h.b16 %v2559
      %v2912 = vunpack.c.l.b16 %v2560
      %v2913 = vunpack.c.l.b16 %v2561
      %v2914 = vunpack.c.h.b16 %v2561
      %v2915 = vunpack.c.l.b16 %v2562
      %v2916 = vunpack.c.h.b16 %v2562
      %v2917 = vunpack.c.l.b16 %v2563
      %v2918 = vunpack.c.h.b16 %v2563
      %v2919 = vunpack.c.l.b16 %v2564
      %v2920 = vunpack.c.h.b16 %v2564
      %v2921 = vunpack.c.l.b16 %v2565
      %v2922 = vunpack.c.h.b16 %v2565
      %v2923 = vunpack.c.l.b16 %v2566
      %v2924 = vunpack.c.l.b16 %v2567
      %v2925 = vunpack.c.h.b16 %v2567
      %v2926 = vunpack.c.l.b16 %v2568
      %v2927 = vunpack.c.h.b16 %v2568
      %v2928 = vunpack.c.l.b16 %v2569
      %v2929 = vunpack.c.h.b16 %v2569
      %v2930 = vunpack.c.l.b16 %v2570
      %v2931 = vunpack.c.h.b16 %v2570
      %v2932 = vunpack.c.l.b16 %v2571
      %v2933 = vunpack.c.h.b16 %v2571
      %v2934 = vunpack.c.l.b16 %v2572
      %v2935 = vunpack.c.l.b16 %v2573
      %v2936 = vunpack.c.h.b16 %v2573
      %v2937 = vunpack.c.l.b16 %v2574
      %v2938 = vunpack.c.h.b16 %v2574
      %v2939 = vunpack.c.l.b16 %v2575
      %v2940 = vunpack.c.h.b16 %v2575
      %v2941 = vunpack.c.l.b16 %v2576
      %v2942 = vunpack.c.h.b16 %v2576
      %v2943 = vunpack.c.l.b16 %v2577
      %v2944 = vunpack.c.h.b16 %v2577
      %v2945 = vunpack.c.l.b16 %v2578
      %v2946 = vunpack.c.l.b16 %v2579
      %v2947 = vunpack.c.h.b16 %v2579
      %v2948 = vunpack.c.l.b16 %v2580
      %v2949 = vunpack.c.h.b16 %v2580
      %v2950 = vunpack.c.l.b16 %v2581
      %v2951 = vunpack.c.h.b16 %v2581
      %v2952 = vunpack.c.l.b16 %v2582
      %v2953 = vunpack.c.h.b16 %v2582
      %v2954 = vunpack.c.l.b16 %v2583
      %v2955 = vunpack.c.h.b16 %v2583
      %v2956 = vunpack.c.l.b16 %v2584
      %v2957 = vpack.c.b16 %v2836, %v2825
      %v2958 = vpack.c.b16 %v2837, %v2826
      %v2959 = vpack.c.b16 %v2838, %v2827
      %v2960 = vpack.c.b16 %v2839, %v2828
      %v2961 = vpack.c.b16 %v2840, %v2829
      %v2962 = vpack.c.b16 %v2841, %v2830
      %v2963 = vpack.c.b16 %v2842, %v2831
      %v2964 = vpack.c.b16 %v2843, %v2832
      %v2965 = vpack.c.b16 %v2844, %v2833
      %v2966 = vpack.c.b16 %v2845, %v2834
      %v2967 = vpack.c.b16 %v2846, %v2835
      %v2968 = vpack.c.b16 %v2858, %v2847
      %v2969 = vpack.c.b16 %v2859, %v2848
      %v2970 = vpack.c.b16 %v2860, %v2849
      %v2971 = vpack.c.b16 %v2861, %v2850
      %v2972 = vpack.c.b16 %v2862, %v2851
      %v2973 = vpack.c.b16 %v2863, %v2852
      %v2974 = vpack.c.b16 %v2864, %v2853
      %v2975 = vpack.c.b16 %v2865, %v2854
      %v2976 = vpack.c.b16 %v2866, %v2855
      %v2977 = vpack.c.b16 %v2867, %v2856
      %v2978 = vpack.c.b16 %v2868, %v2857
      %v2979 = vpack.c.b16 %v2880, %v2869
      %v2980 = vpack.c.b16 %v2881, %v2870
      %v2981 = vpack.c.b16 %v2882, %v2871
      %v2982 = vpack.c.b16 %v2883, %v2872
      %v2983 = vpack.c.b16 %v2884, %v2873
      %v2984 = vpack.c.b16 %v2885, %v2874
      %v2985 = vpack.c.b16 %v2886, %v2875
      %v2986 = vpack.c.b16 %v2887, %v2876
      %v2987 = vpack.c.b16 %v2888, %v2877
      %v2988 = vpack.c.b16 %v2889, %v2878
      %v2989 = vpack.c.b16 %v2890, %v2879
      %v2990 = vpack.c.b16 %v2902, %v2891
      %v2991 = vpack.c.b16 %v2903, %v2892
      %v2992 = vpack.c.b16 %v2904, %v2893
      %v2993 = vpack.c.b16 %v2905, %v2894
      %v2994 = vpack.c.b16 %v2906, %v2895
      %v2995 = vpack.c.b16 %v2907, %v2896
      %v2996 = vpack.c.b16 %v2908, %v2897
      %v2997 = vpack.c.b16 %v2909, %v2898
      %v2998 = vpack.c.b16 %v2910, %v2899
      %v2999 = vpack.c.b16 %v2911, %v2900
      %v3000 = vpack.c.b16 %v2912, %v2901
      %v3001 = vpack.c.b16 %v2924, %v2913
      %v3002 = vpack.c.b16 %v2925, %v2914
      %v3003 = vpack.c.b16 %v2926, %v2915
      %v3004 = vpack.c.b16 %v2927, %v2916
      %v3005 = vpack.c.b16 %v2928, %v2917
      %v3006 = vpack.c.b16 %v2929, %v2918
      %v3007 = vpack.c.b16 %v2930, %v2919
      %v3008 = vpack.c.b16 %v2931, %v2920
      %v3009 = vpack.c.b16 %v2932, %v2921
      %v3010 = vpack.c.b16 %v2933, %v2922
      %v3011 = vpack.c.b16 %v2934, %v2923
      %v3012 = vpack.c.b16 %v2946, %v2935
      %v3013 = vpack.c.b16 %v2947, %v2936
      %v3014 = vpack.c.b16 %v2948, %v2937
      %v3015 = vpack.c.b16 %v2949, %v2938
      %v3016 = vpack.c.b16 %v2950, %v2939
      %v3017 = vpack.c.b16 %v2951, %v2940
      %v3018 = vpack.c.b16 %v2952, %v2941
      %v3019 = vpack.c.b16 %v2953, %v2942
      %v3020 = vpack.c.b16 %v2954, %v2943
      %v3021 = vpack.c.b16 %v2955, %v2944
      %v3022 = vpack.c.b16 %v2956, %v2945
      %vm3083 = vcmask 523264
      %v3085 = vsel %vm3083, %v2967, 0
      %v3088 = vsel %vm3083, %v2978, 0
      %v3091 = vsel %vm3083, %v2989, 0
      %v3094 = vsel %vm3083, %v3000, 0
      %v3097 = vsel %vm3083, %v3011, 0
      %v3100 = vsel %vm3083, %v3022, 0
      %3102 = vmatprep.subr.bf16.mxu0 %v2586
      %3103 = vmatpush1.bf16.msra.mxu0 %v2585
      %3104 = vmatprep.subr.bf16.mxu0 %v2588
      %3105 = vmatpush1.bf16.msra.mxu0 %v2587
      %3106 = vmatprep.subr.bf16.mxu0 %v2590
      %3107 = vmatpush1.bf16.msra.mxu0 %v2589
      %3108 = vmatprep.subr.bf16.mxu0 %v2592
      %3109 = vmatpush1.bf16.msra.mxu0 %v2591
      %3110 = vmatprep.subr.bf16.mxu0 %v2594
      %3111 = vmatpush1.bf16.msra.mxu0 %v2593
      %3112 = vmatprep.subr.bf16.mxu0 %v2596
      %3113 = vmatpush1.bf16.msra.mxu0 %v2595
      %3114 = vmatprep.subr.bf16.mxu0 %v2598
      %3115 = vmatpush1.bf16.msra.mxu0 %v2597
      %3116 = vmatprep.subr.bf16.mxu0 %v2600
      %3117 = vmatpush1.bf16.msra.mxu0 %v2599
      %3118 = vmatprep.subr.bf16.mxu0 %v2602
      %3119 = vmatpush1.bf16.msra.mxu0 %v2601
      %3120 = vmatprep.subr.bf16.mxu0 %v2604
      %3121 = vmatpush1.bf16.msra.mxu0 %v2603
      %3122 = vmatprep.subr.bf16.mxu0 %v2606
      %3123 = vmatpush1.bf16.msra.mxu0 %v2605
      %3124 = vmatprep.subr.bf16.mxu0 %v2608
      %3125 = vmatpush1.bf16.msra.mxu0 %v2607
      %3126 = vmatprep.subr.bf16.mxu0 %v2610
      %3127 = vmatpush1.bf16.msra.mxu0 %v2609
      %3128 = vmatprep.subr.bf16.mxu0 %v2612
      %3129 = vmatpush1.bf16.msra.mxu0 %v2611
      %3130 = vmatprep.subr.bf16.mxu0 %v2614
      %3131 = vmatpush1.bf16.msra.mxu0 %v2613
      %3132 = vmatprep.subr.bf16.mxu0 %v2616
      %3133 = vmatpush1.bf16.msra.mxu0 %v2615
      %3134 = vmatprep.mubr.bf16.mxu0 %v2958
      %3135 = vmatmul.mubr.bf16.gmra.mrb[0].mxu0 %v2957
      %v3136 = vpop.f32.mrb[0].mxu0
      %v3137 = vadd.f32 0.0, %v3136
      %v3138 = vpop.f32.mrb[0].mxu0
      %v3139 = vadd.f32 0.0, %v3138
      %v3140 = vpop.f32.mrb[0].mxu0
      %v3141 = vadd.f32 0.0, %v3140
      %v3142 = vpop.f32.mrb[0].mxu0
      %v3143 = vadd.f32 0.0, %v3142
      %3144 = vmatprep.mubr.bf16.mxu0 %v2969
      %3145 = vmatmul.mubr.bf16.gmra.mrb[0].mxu0 %v2968
      %v3146 = vpop.f32.mrb[0].mxu0
      %v3147 = vadd.f32 0.0, %v3146
      %v3148 = vpop.f32.mrb[0].mxu0
      %v3149 = vadd.f32 0.0, %v3148
      %v3150 = vpop.f32.mrb[0].mxu0
      %v3151 = vadd.f32 0.0, %v3150
      %v3152 = vpop.f32.mrb[0].mxu0
      %v3153 = vadd.f32 0.0, %v3152
      %3154 = vmatprep.mubr.bf16.mxu0 %v2980
      %3155 = vmatmul.mubr.bf16.gmra.mrb[0].mxu0 %v2979
      %v3156 = vpop.f32.mrb[0].mxu0
      %v3157 = vadd.f32 0.0, %v3156
      %v3158 = vpop.f32.mrb[0].mxu0
      %v3159 = vadd.f32 0.0, %v3158
      %v3160 = vpop.f32.mrb[0].mxu0
      %v3161 = vadd.f32 0.0, %v3160
      %v3162 = vpop.f32.mrb[0].mxu0
      %v3163 = vadd.f32 0.0, %v3162
      %3164 = vmatprep.mubr.bf16.mxu0 %v2991
      %3165 = vmatmul.mubr.bf16.gmra.mrb[0].mxu0 %v2990
      %v3166 = vpop.f32.mrb[0].mxu0
      %v3167 = vadd.f32 0.0, %v3166
      %v3168 = vpop.f32.mrb[0].mxu0
      %v3169 = vadd.f32 0.0, %v3168
      %v3170 = vpop.f32.mrb[0].mxu0
      %v3171 = vadd.f32 0.0, %v3170
      %v3172 = vpop.f32.mrb[0].mxu0
      %v3173 = vadd.f32 0.0, %v3172
      %3174 = vmatprep.mubr.bf16.mxu0 %v3002
      %3175 = vmatmul.mubr.bf16.gmra.mrb[0].mxu0 %v3001
      %v3176 = vpop.f32.mrb[0].mxu0
      %v3177 = vadd.f32 0.0, %v3176
      %v3178 = vpop.f32.mrb[0].mxu0
      %v3179 = vadd.f32 0.0, %v3178
      %v3180 = vpop.f32.mrb[0].mxu0
      %v3181 = vadd.f32 0.0, %v3180
      %v3182 = vpop.f32.mrb[0].mxu0
      %v3183 = vadd.f32 0.0, %v3182
      %3184 = vmatprep.mubr.bf16.mxu0 %v3013
      %3185 = vmatmul.mubr.bf16.gmra.mrb[0].mxu0 %v3012
      %v3186 = vpop.f32.mrb[0].mxu0
      %v3187 = vadd.f32 0.0, %v3186
      %v3188 = vpop.f32.mrb[0].mxu0
      %v3189 = vadd.f32 0.0, %v3188
      %v3190 = vpop.f32.mrb[0].mxu0
      %v3191 = vadd.f32 0.0, %v3190
      %v3192 = vpop.f32.mrb[0].mxu0
      %v3193 = vadd.f32 0.0, %v3192
      %3194 = vdwg.mxu0
      %3195 = vmatprep.subr.bf16.mxu0 %v2618
      %3196 = vmatpush1.bf16.msra.mxu0 %v2617
      %3197 = vmatprep.subr.bf16.mxu0 %v2620
      %3198 = vmatpush1.bf16.msra.mxu0 %v2619
      %3199 = vmatprep.subr.bf16.mxu0 %v2622
      %3200 = vmatpush1.bf16.msra.mxu0 %v2621
      %3201 = vmatprep.subr.bf16.mxu0 %v2624
      %3202 = vmatpush1.bf16.msra.mxu0 %v2623
      %3203 = vmatprep.subr.bf16.mxu0 %v2626
      %3204 = vmatpush1.bf16.msra.mxu0 %v2625
      %3205 = vmatprep.subr.bf16.mxu0 %v2628
      %3206 = vmatpush1.bf16.msra.mxu0 %v2627
      %3207 = vmatprep.subr.bf16.mxu0 %v2630
      %3208 = vmatpush1.bf16.msra.mxu0 %v2629
      %3209 = vmatprep.subr.bf16.mxu0 %v2632
      %3210 = vmatpush1.bf16.msra.mxu0 %v2631
      %3211 = vmatprep.subr.bf16.mxu0 %v2634
      %3212 = vmatpush1.bf16.msra.mxu0 %v2633
      %3213 = vmatprep.subr.bf16.mxu0 %v2636
      %3214 = vmatpush1.bf16.msra.mxu0 %v2635
      %3215 = vmatprep.subr.bf16.mxu0 %v2638
      %3216 = vmatpush1.bf16.msra.mxu0 %v2637
      %3217 = vmatprep.subr.bf16.mxu0 %v2640
      %3218 = vmatpush1.bf16.msra.mxu0 %v2639
      %3219 = vmatprep.subr.bf16.mxu0 %v2642
      %3220 = vmatpush1.bf16.msra.mxu0 %v2641
      %3221 = vmatprep.subr.bf16.mxu0 %v2644
      %3222 = vmatpush1.bf16.msra.mxu0 %v2643
      %3223 = vmatprep.subr.bf16.mxu0 %v2646
      %3224 = vmatpush1.bf16.msra.mxu0 %v2645
      %3225 = vmatprep.subr.bf16.mxu0 %v2648
      %3226 = vmatpush1.bf16.msra.mxu0 %v2647
      %3227 = vmatprep.mubr.bf16.mxu0 %v2960
      %3228 = vmatmul.mubr.bf16.gmra.mrb[0].mxu0 %v2959
      %v3229 = vpop.f32.mrb[0].mxu0
      %v3230 = vadd.f32 %v3137, %v3229
      %v3231 = vpop.f32.mrb[0].mxu0
      %v3232 = vadd.f32 %v3139, %v3231
      %v3233 = vpop.f32.mrb[0].mxu0
      %v3234 = vadd.f32 %v3141, %v3233
      %v3235 = vpop.f32.mrb[0].mxu0
      %v3236 = vadd.f32 %v3143, %v3235
      %3237 = vmatprep.mubr.bf16.mxu0 %v2971
      %3238 = vmatmul.mubr.bf16.gmra.mrb[0].mxu0 %v2970
      %v3239 = vpop.f32.mrb[0].mxu0
      %v3240 = vadd.f32 %v3147, %v3239
      %v3241 = vpop.f32.mrb[0].mxu0
      %v3242 = vadd.f32 %v3149, %v3241
      %v3243 = vpop.f32.mrb[0].mxu0
      %v3244 = vadd.f32 %v3151, %v3243
      %v3245 = vpop.f32.mrb[0].mxu0
      %v3246 = vadd.f32 %v3153, %v3245
      %3247 = vmatprep.mubr.bf16.mxu0 %v2982
      %3248 = vmatmul.mubr.bf16.gmra.mrb[0].mxu0 %v2981
      %v3249 = vpop.f32.mrb[0].mxu0
      %v3250 = vadd.f32 %v3157, %v3249
      %v3251 = vpop.f32.mrb[0].mxu0
      %v3252 = vadd.f32 %v3159, %v3251
      %v3253 = vpop.f32.mrb[0].mxu0
      %v3254 = vadd.f32 %v3161, %v3253
      %v3255 = vpop.f32.mrb[0].mxu0
      %v3256 = vadd.f32 %v3163, %v3255
      %3257 = vmatprep.mubr.bf16.mxu0 %v2993
      %3258 = vmatmul.mubr.bf16.gmra.mrb[0].mxu0 %v2992
      %v3259 = vpop.f32.mrb[0].mxu0
      %v3260 = vadd.f32 %v3167, %v3259
      %v3261 = vpop.f32.mrb[0].mxu0
      %v3262 = vadd.f32 %v3169, %v3261
      %v3263 = vpop.f32.mrb[0].mxu0
      %v3264 = vadd.f32 %v3171, %v3263
      %v3265 = vpop.f32.mrb[0].mxu0
      %v3266 = vadd.f32 %v3173, %v3265
      %3267 = vmatprep.mubr.bf16.mxu0 %v3004
      %3268 = vmatmul.mubr.bf16.gmra.mrb[0].mxu0 %v3003
      %v3269 = vpop.f32.mrb[0].mxu0
      %v3270 = vadd.f32 %v3177, %v3269
      %v3271 = vpop.f32.mrb[0].mxu0
      %v3272 = vadd.f32 %v3179, %v3271
      %v3273 = vpop.f32.mrb[0].mxu0
      %v3274 = vadd.f32 %v3181, %v3273
      %v3275 = vpop.f32.mrb[0].mxu0
      %v3276 = vadd.f32 %v3183, %v3275
      %3277 = vmatprep.mubr.bf16.mxu0 %v3015
      %3278 = vmatmul.mubr.bf16.gmra.mrb[0].mxu0 %v3014
      %v3279 = vpop.f32.mrb[0].mxu0
      %v3280 = vadd.f32 %v3187, %v3279
      %v3281 = vpop.f32.mrb[0].mxu0
      %v3282 = vadd.f32 %v3189, %v3281
      %v3283 = vpop.f32.mrb[0].mxu0
      %v3284 = vadd.f32 %v3191, %v3283
      %v3285 = vpop.f32.mrb[0].mxu0
      %v3286 = vadd.f32 %v3193, %v3285
      %3287 = vdwg.mxu0
      %3288 = vmatprep.subr.bf16.mxu0 %v2650
      %3289 = vmatpush1.bf16.msra.mxu0 %v2649
      %3290 = vmatprep.subr.bf16.mxu0 %v2652
      %3291 = vmatpush1.bf16.msra.mxu0 %v2651
      %3292 = vmatprep.subr.bf16.mxu0 %v2654
      %3293 = vmatpush1.bf16.msra.mxu0 %v2653
      %3294 = vmatprep.subr.bf16.mxu0 %v2656
      %3295 = vmatpush1.bf16.msra.mxu0 %v2655
      %3296 = vmatprep.subr.bf16.mxu0 %v2658
      %3297 = vmatpush1.bf16.msra.mxu0 %v2657
      %3298 = vmatprep.subr.bf16.mxu0 %v2660
      %3299 = vmatpush1.bf16.msra.mxu0 %v2659
      %3300 = vmatprep.subr.bf16.mxu0 %v2662
      %3301 = vmatpush1.bf16.msra.mxu0 %v2661
      %3302 = vmatprep.subr.bf16.mxu0 %v2664
      %3303 = vmatpush1.bf16.msra.mxu0 %v2663
      %3304 = vmatprep.subr.bf16.mxu0 %v2666
      %3305 = vmatpush1.bf16.msra.mxu0 %v2665
      %3306 = vmatprep.subr.bf16.mxu0 %v2668
      %3307 = vmatpush1.bf16.msra.mxu0 %v2667
      %3308 = vmatprep.subr.bf16.mxu0 %v2670
      %3309 = vmatpush1.bf16.msra.mxu0 %v2669
      %3310 = vmatprep.subr.bf16.mxu0 %v2672
      %3311 = vmatpush1.bf16.msra.mxu0 %v2671
      %3312 = vmatprep.subr.bf16.mxu0 %v2674
      %3313 = vmatpush1.bf16.msra.mxu0 %v2673
      %3314 = vmatprep.subr.bf16.mxu0 %v2676
      %3315 = vmatpush1.bf16.msra.mxu0 %v2675
      %3316 = vmatprep.subr.bf16.mxu0 %v2678
      %3317 = vmatpush1.bf16.msra.mxu0 %v2677
      %3318 = vmatprep.subr.bf16.mxu0 %v2680
      %3319 = vmatpush1.bf16.msra.mxu0 %v2679
      %3320 = vmatprep.mubr.bf16.mxu0 %v2962
      %3321 = vmatmul.mubr.bf16.gmra.mrb[0].mxu0 %v2961
      %v3322 = vpop.f32.mrb[0].mxu0
      %v3323 = vadd.f32 %v3230, %v3322
      %v3324 = vpop.f32.mrb[0].mxu0
      %v3325 = vadd.f32 %v3232, %v3324
      %v3326 = vpop.f32.mrb[0].mxu0
      %v3327 = vadd.f32 %v3234, %v3326
      %v3328 = vpop.f32.mrb[0].mxu0
      %v3329 = vadd.f32 %v3236, %v3328
      %3330 = vmatprep.mubr.bf16.mxu0 %v2973
      %3331 = vmatmul.mubr.bf16.gmra.mrb[0].mxu0 %v2972
      %v3332 = vpop.f32.mrb[0].mxu0
      %v3333 = vadd.f32 %v3240, %v3332
      %v3334 = vpop.f32.mrb[0].mxu0
      %v3335 = vadd.f32 %v3242, %v3334
      %v3336 = vpop.f32.mrb[0].mxu0
      %v3337 = vadd.f32 %v3244, %v3336
      %v3338 = vpop.f32.mrb[0].mxu0
      %v3339 = vadd.f32 %v3246, %v3338
      %3340 = vmatprep.mubr.bf16.mxu0 %v2984
      %3341 = vmatmul.mubr.bf16.gmra.mrb[0].mxu0 %v2983
      %v3342 = vpop.f32.mrb[0].mxu0
      %v3343 = vadd.f32 %v3250, %v3342
      %v3344 = vpop.f32.mrb[0].mxu0
      %v3345 = vadd.f32 %v3252, %v3344
      %v3346 = vpop.f32.mrb[0].mxu0
      %v3347 = vadd.f32 %v3254, %v3346
      %v3348 = vpop.f32.mrb[0].mxu0
      %v3349 = vadd.f32 %v3256, %v3348
      %3350 = vmatprep.mubr.bf16.mxu0 %v2995
      %3351 = vmatmul.mubr.bf16.gmra.mrb[0].mxu0 %v2994
      %v3352 = vpop.f32.mrb[0].mxu0
      %v3353 = vadd.f32 %v3260, %v3352
      %v3354 = vpop.f32.mrb[0].mxu0
      %v3355 = vadd.f32 %v3262, %v3354
      %v3356 = vpop.f32.mrb[0].mxu0
      %v3357 = vadd.f32 %v3264, %v3356
      %v3358 = vpop.f32.mrb[0].mxu0
      %v3359 = vadd.f32 %v3266, %v3358
      %3360 = vmatprep.mubr.bf16.mxu0 %v3006
      %3361 = vmatmul.mubr.bf16.gmra.mrb[0].mxu0 %v3005
      %v3362 = vpop.f32.mrb[0].mxu0
      %v3363 = vadd.f32 %v3270, %v3362
      %v3364 = vpop.f32.mrb[0].mxu0
      %v3365 = vadd.f32 %v3272, %v3364
      %v3366 = vpop.f32.mrb[0].mxu0
      %v3367 = vadd.f32 %v3274, %v3366
      %v3368 = vpop.f32.mrb[0].mxu0
      %v3369 = vadd.f32 %v3276, %v3368
      %3370 = vmatprep.mubr.bf16.mxu0 %v3017
      %3371 = vmatmul.mubr.bf16.gmra.mrb[0].mxu0 %v3016
      %v3372 = vpop.f32.mrb[0].mxu0
      %v3373 = vadd.f32 %v3280, %v3372
      %v3374 = vpop.f32.mrb[0].mxu0
      %v3375 = vadd.f32 %v3282, %v3374
      %v3376 = vpop.f32.mrb[0].mxu0
      %v3377 = vadd.f32 %v3284, %v3376
      %v3378 = vpop.f32.mrb[0].mxu0
      %v3379 = vadd.f32 %v3286, %v3378
      %3380 = vdwg.mxu0
      %3381 = vmatprep.subr.bf16.mxu0 %v2682
      %3382 = vmatpush1.bf16.msra.mxu0 %v2681
      %3383 = vmatprep.subr.bf16.mxu0 %v2684
      %3384 = vmatpush1.bf16.msra.mxu0 %v2683
      %3385 = vmatprep.subr.bf16.mxu0 %v2686
      %3386 = vmatpush1.bf16.msra.mxu0 %v2685
      %3387 = vmatprep.subr.bf16.mxu0 %v2688
      %3388 = vmatpush1.bf16.msra.mxu0 %v2687
      %3389 = vmatprep.subr.bf16.mxu0 %v2690
      %3390 = vmatpush1.bf16.msra.mxu0 %v2689
      %3391 = vmatprep.subr.bf16.mxu0 %v2692
      %3392 = vmatpush1.bf16.msra.mxu0 %v2691
      %3393 = vmatprep.subr.bf16.mxu0 %v2694
      %3394 = vmatpush1.bf16.msra.mxu0 %v2693
      %3395 = vmatprep.subr.bf16.mxu0 %v2696
      %3396 = vmatpush1.bf16.msra.mxu0 %v2695
      %3397 = vmatprep.subr.bf16.mxu0 %v2698
      %3398 = vmatpush1.bf16.msra.mxu0 %v2697
      %3399 = vmatprep.subr.bf16.mxu0 %v2700
      %3400 = vmatpush1.bf16.msra.mxu0 %v2699
      %3401 = vmatprep.subr.bf16.mxu0 %v2702
      %3402 = vmatpush1.bf16.msra.mxu0 %v2701
      %3403 = vmatprep.subr.bf16.mxu0 %v2704
      %3404 = vmatpush1.bf16.msra.mxu0 %v2703
      %3405 = vmatprep.subr.bf16.mxu0 %v2706
      %3406 = vmatpush1.bf16.msra.mxu0 %v2705
      %3407 = vmatprep.subr.bf16.mxu0 %v2708
      %3408 = vmatpush1.bf16.msra.mxu0 %v2707
      %3409 = vmatprep.subr.bf16.mxu0 %v2710
      %3410 = vmatpush1.bf16.msra.mxu0 %v2709
      %3411 = vmatprep.subr.bf16.mxu0 %v2712
      %3412 = vmatpush1.bf16.msra.mxu0 %v2711
      %3413 = vmatprep.mubr.bf16.mxu0 %v2964
      %3414 = vmatmul.mubr.bf16.gmra.mrb[0].mxu0 %v2963
      %v3415 = vpop.f32.mrb[0].mxu0
      %v3416 = vadd.f32 %v3323, %v3415
      %v3417 = vpop.f32.mrb[0].mxu0
      %v3418 = vadd.f32 %v3325, %v3417
      %v3419 = vpop.f32.mrb[0].mxu0
      %v3420 = vadd.f32 %v3327, %v3419
      %v3421 = vpop.f32.mrb[0].mxu0
      %v3422 = vadd.f32 %v3329, %v3421
      %3423 = vmatprep.mubr.bf16.mxu0 %v2975
      %3424 = vmatmul.mubr.bf16.gmra.mrb[0].mxu0 %v2974
      %v3425 = vpop.f32.mrb[0].mxu0
      %v3426 = vadd.f32 %v3333, %v3425
      %v3427 = vpop.f32.mrb[0].mxu0
      %v3428 = vadd.f32 %v3335, %v3427
      %v3429 = vpop.f32.mrb[0].mxu0
      %v3430 = vadd.f32 %v3337, %v3429
      %v3431 = vpop.f32.mrb[0].mxu0
      %v3432 = vadd.f32 %v3339, %v3431
      %3433 = vmatprep.mubr.bf16.mxu0 %v2986
      %3434 = vmatmul.mubr.bf16.gmra.mrb[0].mxu0 %v2985
      %v3435 = vpop.f32.mrb[0].mxu0
      %v3436 = vadd.f32 %v3343, %v3435
      %v3437 = vpop.f32.mrb[0].mxu0
      %v3438 = vadd.f32 %v3345, %v3437
      %v3439 = vpop.f32.mrb[0].mxu0
      %v3440 = vadd.f32 %v3347, %v3439
      %v3441 = vpop.f32.mrb[0].mxu0
      %v3442 = vadd.f32 %v3349, %v3441
      %3443 = vmatprep.mubr.bf16.mxu0 %v2997
      %3444 = vmatmul.mubr.bf16.gmra.mrb[0].mxu0 %v2996
      %v3445 = vpop.f32.mrb[0].mxu0
      %v3446 = vadd.f32 %v3353, %v3445
      %v3447 = vpop.f32.mrb[0].mxu0
      %v3448 = vadd.f32 %v3355, %v3447
      %v3449 = vpop.f32.mrb[0].mxu0
      %v3450 = vadd.f32 %v3357, %v3449
      %v3451 = vpop.f32.mrb[0].mxu0
      %v3452 = vadd.f32 %v3359, %v3451
      %3453 = vmatprep.mubr.bf16.mxu0 %v3008
      %3454 = vmatmul.mubr.bf16.gmra.mrb[0].mxu0 %v3007
      %v3455 = vpop.f32.mrb[0].mxu0
      %v3456 = vadd.f32 %v3363, %v3455
      %v3457 = vpop.f32.mrb[0].mxu0
      %v3458 = vadd.f32 %v3365, %v3457
      %v3459 = vpop.f32.mrb[0].mxu0
      %v3460 = vadd.f32 %v3367, %v3459
      %v3461 = vpop.f32.mrb[0].mxu0
      %v3462 = vadd.f32 %v3369, %v3461
      %3463 = vmatprep.mubr.bf16.mxu0 %v3019
      %3464 = vmatmul.mubr.bf16.gmra.mrb[0].mxu0 %v3018
      %v3465 = vpop.f32.mrb[0].mxu0
      %v3466 = vadd.f32 %v3373, %v3465
      %v3467 = vpop.f32.mrb[0].mxu0
      %v3468 = vadd.f32 %v3375, %v3467
      %v3469 = vpop.f32.mrb[0].mxu0
      %v3470 = vadd.f32 %v3377, %v3469
      %v3471 = vpop.f32.mrb[0].mxu0
      %v3472 = vadd.f32 %v3379, %v3471
      %3473 = vdwg.mxu0
      %3474 = vmatprep.subr.bf16.mxu0 %v2714
      %3475 = vmatpush1.bf16.msra.mxu0 %v2713
      %3476 = vmatprep.subr.bf16.mxu0 %v2716
      %3477 = vmatpush1.bf16.msra.mxu0 %v2715
      %3478 = vmatprep.subr.bf16.mxu0 %v2718
      %3479 = vmatpush1.bf16.msra.mxu0 %v2717
      %3480 = vmatprep.subr.bf16.mxu0 %v2720
      %3481 = vmatpush1.bf16.msra.mxu0 %v2719
      %3482 = vmatprep.subr.bf16.mxu0 %v2722
      %3483 = vmatpush1.bf16.msra.mxu0 %v2721
      %3484 = vmatprep.subr.bf16.mxu0 %v2724
      %3485 = vmatpush1.bf16.msra.mxu0 %v2723
      %3486 = vmatprep.subr.bf16.mxu0 %v2726
      %3487 = vmatpush1.bf16.msra.mxu0 %v2725
      %3488 = vmatprep.subr.bf16.mxu0 %v2728
      %3489 = vmatpush1.bf16.msra.mxu0 %v2727
      %3490 = vmatprep.subr.bf16.mxu0 %v2730
      %3491 = vmatpush1.bf16.msra.mxu0 %v2729
      %3492 = vmatprep.subr.bf16.mxu0 %v2732
      %3493 = vmatpush1.bf16.msra.mxu0 %v2731
      %3494 = vmatprep.subr.bf16.mxu0 %v2734
      %3495 = vmatpush1.bf16.msra.mxu0 %v2733
      %3496 = vmatprep.subr.bf16.mxu0 %v2736
      %3497 = vmatpush1.bf16.msra.mxu0 %v2735
      %3498 = vmatprep.subr.bf16.mxu0 %v2738
      %3499 = vmatpush1.bf16.msra.mxu0 %v2737
      %3500 = vmatprep.subr.bf16.mxu0 %v2740
      %3501 = vmatpush1.bf16.msra.mxu0 %v2739
      %3502 = vmatprep.subr.bf16.mxu0 %v2742
      %3503 = vmatpush1.bf16.msra.mxu0 %v2741
      %3504 = vmatprep.subr.bf16.mxu0 %v2744
      %3505 = vmatpush1.bf16.msra.mxu0 %v2743
      %3506 = vmatprep.mubr.bf16.mxu0 %v2966
      %3507 = vmatmul.mubr.bf16.gmra.mrb[0].mxu0 %v2965
      %v3508 = vpop.f32.mrb[0].mxu0
      %v3509 = vadd.f32 %v3416, %v3508
      %v3510 = vpop.f32.mrb[0].mxu0
      %v3511 = vadd.f32 %v3418, %v3510
      %v3512 = vpop.f32.mrb[0].mxu0
      %v3513 = vadd.f32 %v3420, %v3512
      %v3514 = vpop.f32.mrb[0].mxu0
      %v3515 = vadd.f32 %v3422, %v3514
      %3516 = vmatprep.mubr.bf16.mxu0 %v2977
      %3517 = vmatmul.mubr.bf16.gmra.mrb[0].mxu0 %v2976
      %v3518 = vpop.f32.mrb[0].mxu0
      %v3519 = vadd.f32 %v3426, %v3518
      %v3520 = vpop.f32.mrb[0].mxu0
      %v3521 = vadd.f32 %v3428, %v3520
      %v3522 = vpop.f32.mrb[0].mxu0
      %v3523 = vadd.f32 %v3430, %v3522
      %v3524 = vpop.f32.mrb[0].mxu0
      %v3525 = vadd.f32 %v3432, %v3524
      %3526 = vmatprep.mubr.bf16.mxu0 %v2988
      %3527 = vmatmul.mubr.bf16.gmra.mrb[0].mxu0 %v2987
      %v3528 = vpop.f32.mrb[0].mxu0
      %v3529 = vadd.f32 %v3436, %v3528
      %v3530 = vpop.f32.mrb[0].mxu0
      %v3531 = vadd.f32 %v3438, %v3530
      %v3532 = vpop.f32.mrb[0].mxu0
      %v3533 = vadd.f32 %v3440, %v3532
      %v3534 = vpop.f32.mrb[0].mxu0
      %v3535 = vadd.f32 %v3442, %v3534
      %3536 = vmatprep.mubr.bf16.mxu0 %v2999
      %3537 = vmatmul.mubr.bf16.gmra.mrb[0].mxu0 %v2998
      %v3538 = vpop.f32.mrb[0].mxu0
      %v3539 = vadd.f32 %v3446, %v3538
      %v3540 = vpop.f32.mrb[0].mxu0
      %v3541 = vadd.f32 %v3448, %v3540
      %v3542 = vpop.f32.mrb[0].mxu0
      %v3543 = vadd.f32 %v3450, %v3542
      %v3544 = vpop.f32.mrb[0].mxu0
      %v3545 = vadd.f32 %v3452, %v3544
      %3546 = vmatprep.mubr.bf16.mxu0 %v3010
      %3547 = vmatmul.mubr.bf16.gmra.mrb[0].mxu0 %v3009
      %v3548 = vpop.f32.mrb[0].mxu0
      %v3549 = vadd.f32 %v3456, %v3548
      %v3550 = vpop.f32.mrb[0].mxu0
      %v3551 = vadd.f32 %v3458, %v3550
      %v3552 = vpop.f32.mrb[0].mxu0
      %v3553 = vadd.f32 %v3460, %v3552
      %v3554 = vpop.f32.mrb[0].mxu0
      %v3555 = vadd.f32 %v3462, %v3554
      %3556 = vmatprep.mubr.bf16.mxu0 %v3021
      %3557 = vmatmul.mubr.bf16.gmra.mrb[0].mxu0 %v3020
      %v3558 = vpop.f32.mrb[0].mxu0
      %v3559 = vadd.f32 %v3466, %v3558
      %v3560 = vpop.f32.mrb[0].mxu0
      %v3561 = vadd.f32 %v3468, %v3560
      %v3562 = vpop.f32.mrb[0].mxu0
      %v3563 = vadd.f32 %v3470, %v3562
      %v3564 = vpop.f32.mrb[0].mxu0
      %v3565 = vadd.f32 %v3472, %v3564
      %3566 = vdwg.mxu0
      %3567 = vmatprep.subr.bf16.mxu0 %v2746
      %3568 = vmatpush1.bf16.msra.mxu0 %v2745
      %3569 = vmatprep.subr.bf16.mxu0 %v2748
      %3570 = vmatpush1.bf16.msra.mxu0 %v2747
      %3571 = vmatprep.subr.bf16.mxu0 %v2750
      %3572 = vmatpush1.bf16.msra.mxu0 %v2749
      %3573 = vmatprep.subr.bf16.mxu0 %v2752
      %3574 = vmatpush1.bf16.msra.mxu0 %v2751
      %3575 = vmatprep.subr.bf16.mxu0 0
      %3576 = vmatpush1.bf16.msra.mxu0 0
      %3577 = vmatprep.subr.bf16.mxu0 0
      %3578 = vmatpush1.bf16.msra.mxu0 0
      %3579 = vmatprep.subr.bf16.mxu0 0
      %3580 = vmatpush1.bf16.msra.mxu0 0
      %3581 = vmatprep.subr.bf16.mxu0 0
      %3582 = vmatpush1.bf16.msra.mxu0 0
      %3583 = vmatprep.subr.bf16.mxu0 0
      %3584 = vmatpush1.bf16.msra.mxu0 0
      %3585 = vmatprep.subr.bf16.mxu0 0
      %3586 = vmatpush1.bf16.msra.mxu0 0
      %3587 = vmatprep.subr.bf16.mxu0 0
      %3588 = vmatpush1.bf16.msra.mxu0 0
      %3589 = vmatprep.subr.bf16.mxu0 0
      %3590 = vmatpush1.bf16.msra.mxu0 0
      %3591 = vmatprep.subr.bf16.mxu0 0
      %3592 = vmatpush1.bf16.msra.mxu0 0
      %3593 = vmatprep.subr.bf16.mxu0 0
      %3594 = vmatpush1.bf16.msra.mxu0 0
      %3595 = vmatprep.subr.bf16.mxu0 0
      %3596 = vmatpush1.bf16.msra.mxu0 0
      %3597 = vmatprep.subr.bf16.mxu0 0
      %3598 = vmatpush1.bf16.msra.mxu0 0
      %3599 = vmatprep.mubr.bf16.mxu0 0
      %3600 = vmatmul.mubr.bf16.gmra.mrb[0].mxu0 %v3085
      %v3601 = vpop.f32.mrb[0].mxu0
      %v3602 = vadd.f32 %v3509, %v3601
      %v3603 = vpop.f32.mrb[0].mxu0
      %v3604 = vadd.f32 %v3511, %v3603
      %v3605 = vpop.f32.mrb[0].mxu0
      %v3606 = vadd.f32 %v3513, %v3605
      %v3607 = vpop.f32.mrb[0].mxu0
      %v3608 = vadd.f32 %v3515, %v3607
      %3609 = vmatprep.mubr.bf16.mxu0 0
      %3610 = vmatmul.mubr.bf16.gmra.mrb[0].mxu0 %v3088
      %v3611 = vpop.f32.mrb[0].mxu0
      %v3612 = vadd.f32 %v3519, %v3611
      %v3613 = vpop.f32.mrb[0].mxu0
      %v3614 = vadd.f32 %v3521, %v3613
      %v3615 = vpop.f32.mrb[0].mxu0
      %v3616 = vadd.f32 %v3523, %v3615
      %v3617 = vpop.f32.mrb[0].mxu0
      %v3618 = vadd.f32 %v3525, %v3617
      %3619 = vmatprep.mubr.bf16.mxu0 0
      %3620 = vmatmul.mubr.bf16.gmra.mrb[0].mxu0 %v3091
      %v3621 = vpop.f32.mrb[0].mxu0
      %v3622 = vadd.f32 %v3529, %v3621
      %v3623 = vpop.f32.mrb[0].mxu0
      %v3624 = vadd.f32 %v3531, %v3623
      %v3625 = vpop.f32.mrb[0].mxu0
      %v3626 = vadd.f32 %v3533, %v3625
      %v3627 = vpop.f32.mrb[0].mxu0
      %v3628 = vadd.f32 %v3535, %v3627
      %3629 = vmatprep.mubr.bf16.mxu0 0
      %3630 = vmatmul.mubr.bf16.gmra.mrb[0].mxu0 %v3094
      %v3631 = vpop.f32.mrb[0].mxu0
      %v3632 = vadd.f32 %v3539, %v3631
      %v3633 = vpop.f32.mrb[0].mxu0
      %v3634 = vadd.f32 %v3541, %v3633
      %v3635 = vpop.f32.mrb[0].mxu0
      %v3636 = vadd.f32 %v3543, %v3635
      %v3637 = vpop.f32.mrb[0].mxu0
      %v3638 = vadd.f32 %v3545, %v3637
      %3639 = vmatprep.mubr.bf16.mxu0 0
      %3640 = vmatmul.mubr.bf16.gmra.mrb[0].mxu0 %v3097
      %v3641 = vpop.f32.mrb[0].mxu0
      %v3642 = vadd.f32 %v3549, %v3641
      %v3643 = vpop.f32.mrb[0].mxu0
      %v3644 = vadd.f32 %v3551, %v3643
      %v3645 = vpop.f32.mrb[0].mxu0
      %v3646 = vadd.f32 %v3553, %v3645
      %v3647 = vpop.f32.mrb[0].mxu0
      %v3648 = vadd.f32 %v3555, %v3647
      %3649 = vmatprep.mubr.bf16.mxu0 0
      %3650 = vmatmul.mubr.bf16.gmra.mrb[0].mxu0 %v3100
      %v3651 = vpop.f32.mrb[0].mxu0
      %v3652 = vadd.f32 %v3559, %v3651
      %v3653 = vpop.f32.mrb[0].mxu0
      %v3654 = vadd.f32 %v3561, %v3653
      %v3655 = vpop.f32.mrb[0].mxu0
      %v3656 = vadd.f32 %v3563, %v3655
      %v3657 = vpop.f32.mrb[0].mxu0
      %v3658 = vadd.f32 %v3565, %v3657
      %3659 = vdwg.mxu0
      %v3660 = vlaneseq
      %v3661 = vand.u32 %v3660, 127
      %v3662 = vadd.s32 %v3661, 128
      %vm3663 = vcmp.lt.s32.totalorder %v3661, 144
      %vm3664 = vcmp.lt.s32.totalorder %v3662, 144
      %v3665 = vsel %vm3663, 1, 0
      %v3666 = vsel %vm3664, 1, 0
      %v3667 = vcvt.s32.f32 %v3665
      %v3668 = vcvt.s32.f32 %v3666
      %v3669 = vmul.f32 %v3602, %v3667
      %v3670 = vmul.f32 %v3604, %v3668
      %v3671 = vmul.f32 %v3606, %v3667
      %v3672 = vmul.f32 %v3608, %v3668
      %v3673 = vmul.f32 %v3612, %v3667
      %v3674 = vmul.f32 %v3614, %v3668
      %v3675 = vmul.f32 %v3616, %v3667
      %v3676 = vmul.f32 %v3618, %v3668
      %v3677 = vmul.f32 %v3622, %v3667
      %v3678 = vmul.f32 %v3624, %v3668
      %v3679 = vmul.f32 %v3626, %v3667
      %v3680 = vmul.f32 %v3628, %v3668
      %v3681 = vmul.f32 %v3632, %v3667
      %v3682 = vmul.f32 %v3634, %v3668
      %v3683 = vmul.f32 %v3636, %v3667
      %v3684 = vmul.f32 %v3638, %v3668
      %v3685 = vmul.f32 %v3642, %v3667
      %v3686 = vmul.f32 %v3644, %v3668
      %v3687 = vmul.f32 %v3646, %v3667
      %v3688 = vmul.f32 %v3648, %v3668
      %v3689 = vmul.f32 %v3652, %v3667
      %v3690 = vmul.f32 %v3654, %v3668
      %v3691 = vmul.f32 %v3656, %v3667
      %v3692 = vmul.f32 %v3658, %v3668
      %v3693 = vadd.f32 %v3669, %v3670
      %3694 = vadd.xlane.f32.xlu0 %v3693
      %v3695 = vpop.xlane.xlu0 %3694
      %v3696 = vadd.f32 %v3671, %v3672
      %3697 = vadd.xlane.f32.xlu0 %v3696
      %v3698 = vpop.xlane.xlu0 %3697
      %v3699 = vadd.f32 %v3673, %v3674
      %3700 = vadd.xlane.f32.xlu0 %v3699
      %v3701 = vpop.xlane.xlu0 %3700
      %v3702 = vadd.f32 %v3675, %v3676
      %3703 = vadd.xlane.f32.xlu0 %v3702
      %v3704 = vpop.xlane.xlu0 %3703
      %v3705 = vadd.f32 %v3677, %v3678
      %3706 = vadd.xlane.f32.xlu0 %v3705
      %v3707 = vpop.xlane.xlu0 %3706
      %v3708 = vadd.f32 %v3679, %v3680
      %3709 = vadd.xlane.f32.xlu0 %v3708
      %v3710 = vpop.xlane.xlu0 %3709
      %v3711 = vadd.f32 %v3681, %v3682
      %3712 = vadd.xlane.f32.xlu0 %v3711
      %v3713 = vpop.xlane.xlu0 %3712
      %v3714 = vadd.f32 %v3683, %v3684
      %3715 = vadd.xlane.f32.xlu0 %v3714
      %v3716 = vpop.xlane.xlu0 %3715
      %v3717 = vadd.f32 %v3685, %v3686
      %3718 = vadd.xlane.f32.xlu0 %v3717
      %v3719 = vpop.xlane.xlu0 %3718
      %v3720 = vadd.f32 %v3687, %v3688
      %3721 = vadd.xlane.f32.xlu0 %v3720
      %v3722 = vpop.xlane.xlu0 %3721
      %v3723 = vadd.f32 %v3689, %v3690
      %3724 = vadd.xlane.f32.xlu0 %v3723
      %v3725 = vpop.xlane.xlu0 %3724
      %v3726 = vadd.f32 %v3691, %v3692
      %3727 = vadd.xlane.f32.xlu0 %v3726
      %v3728 = vpop.xlane.xlu0 %3727
      %v3729 = vmul.f32 %v3669, %v3602
      %v3730 = vmul.f32 %v3670, %v3604
      %v3731 = vmul.f32 %v3671, %v3606
      %v3732 = vmul.f32 %v3672, %v3608
      %v3733 = vmul.f32 %v3673, %v3612
      %v3734 = vmul.f32 %v3674, %v3614
      %v3735 = vmul.f32 %v3675, %v3616
      %v3736 = vmul.f32 %v3676, %v3618
      %v3737 = vmul.f32 %v3677, %v3622
      %v3738 = vmul.f32 %v3678, %v3624
      %v3739 = vmul.f32 %v3679, %v3626
      %v3740 = vmul.f32 %v3680, %v3628
      %v3741 = vmul.f32 %v3681, %v3632
      %v3742 = vmul.f32 %v3682, %v3634
      %v3743 = vmul.f32 %v3683, %v3636
      %v3744 = vmul.f32 %v3684, %v3638
      %v3745 = vmul.f32 %v3685, %v3642
      %v3746 = vmul.f32 %v3686, %v3644
      %v3747 = vmul.f32 %v3687, %v3646
      %v3748 = vmul.f32 %v3688, %v3648
      %v3749 = vmul.f32 %v3689, %v3652
      %v3750 = vmul.f32 %v3690, %v3654
      %v3751 = vmul.f32 %v3691, %v3656
      %v3752 = vmul.f32 %v3692, %v3658
      %v3753 = vadd.f32 %v3729, %v3730
      %3754 = vadd.xlane.f32.xlu0 %v3753
      %v3755 = vpop.xlane.xlu0 %3754
      %v3756 = vadd.f32 %v3731, %v3732
      %3757 = vadd.xlane.f32.xlu0 %v3756
      %v3758 = vpop.xlane.xlu0 %3757
      %v3759 = vadd.f32 %v3733, %v3734
      %3760 = vadd.xlane.f32.xlu0 %v3759
      %v3761 = vpop.xlane.xlu0 %3760
      %v3762 = vadd.f32 %v3735, %v3736
      %3763 = vadd.xlane.f32.xlu0 %v3762
      %v3764 = vpop.xlane.xlu0 %3763
      %v3765 = vadd.f32 %v3737, %v3738
      %3766 = vadd.xlane.f32.xlu0 %v3765
      %v3767 = vpop.xlane.xlu0 %3766
      %v3768 = vadd.f32 %v3739, %v3740
      %3769 = vadd.xlane.f32.xlu0 %v3768
      %v3770 = vpop.xlane.xlu0 %3769
      %v3771 = vadd.f32 %v3741, %v3742
      %3772 = vadd.xlane.f32.xlu0 %v3771
      %v3773 = vpop.xlane.xlu0 %3772
      %v3774 = vadd.f32 %v3743, %v3744
      %3775 = vadd.xlane.f32.xlu0 %v3774
      %v3776 = vpop.xlane.xlu0 %3775
      %v3777 = vadd.f32 %v3745, %v3746
      %3778 = vadd.xlane.f32.xlu0 %v3777
      %v3779 = vpop.xlane.xlu0 %3778
      %v3780 = vadd.f32 %v3747, %v3748
      %3781 = vadd.xlane.f32.xlu0 %v3780
      %v3782 = vpop.xlane.xlu0 %3781
      %v3783 = vadd.f32 %v3749, %v3750
      %3784 = vadd.xlane.f32.xlu0 %v3783
      %v3785 = vpop.xlane.xlu0 %3784
      %v3786 = vadd.f32 %v3751, %v3752
      %3787 = vadd.xlane.f32.xlu0 %v3786
      %v3788 = vpop.xlane.xlu0 %3787
      %v3789 = vmul.f32 %v3695, 0.0069444445
      %v3790 = vmul.f32 %v3698, 0.0069444445
      %v3791 = vmul.f32 %v3701, 0.0069444445
      %v3792 = vmul.f32 %v3704, 0.0069444445
      %v3793 = vmul.f32 %v3707, 0.0069444445
      %v3794 = vmul.f32 %v3710, 0.0069444445
      %v3795 = vmul.f32 %v3713, 0.0069444445
      %v3796 = vmul.f32 %v3716, 0.0069444445
      %v3797 = vmul.f32 %v3719, 0.0069444445
      %v3798 = vmul.f32 %v3722, 0.0069444445
      %v3799 = vmul.f32 %v3725, 0.0069444445
      %v3800 = vmul.f32 %v3728, 0.0069444445
      %v3801 = vmul.f32 %v3755, 0.0069444445
      %v3802 = vmul.f32 %v3758, 0.0069444445
      %v3803 = vmul.f32 %v3761, 0.0069444445
      %v3804 = vmul.f32 %v3764, 0.0069444445
      %v3805 = vmul.f32 %v3767, 0.0069444445
      %v3806 = vmul.f32 %v3770, 0.0069444445
      %v3807 = vmul.f32 %v3773, 0.0069444445
      %v3808 = vmul.f32 %v3776, 0.0069444445
      %v3809 = vmul.f32 %v3779, 0.0069444445
      %v3810 = vmul.f32 %v3782, 0.0069444445
      %v3811 = vmul.f32 %v3785, 0.0069444445
      %v3812 = vmul.f32 %v3788, 0.0069444445
      %v3813 = vmul.f32 %v3789, %v3789
      %v3814 = vmul.f32 %v3790, %v3790
      %v3815 = vmul.f32 %v3791, %v3791
      %v3816 = vmul.f32 %v3792, %v3792
      %v3817 = vmul.f32 %v3793, %v3793
      %v3818 = vmul.f32 %v3794, %v3794
      %v3819 = vmul.f32 %v3795, %v3795
      %v3820 = vmul.f32 %v3796, %v3796
      %v3821 = vmul.f32 %v3797, %v3797
      %v3822 = vmul.f32 %v3798, %v3798
      %v3823 = vmul.f32 %v3799, %v3799
      %v3824 = vmul.f32 %v3800, %v3800
      %v3825 = vsub.f32 %v3801, %v3813
      %v3826 = vsub.f32 %v3802, %v3814
      %v3827 = vsub.f32 %v3803, %v3815
      %v3828 = vsub.f32 %v3804, %v3816
      %v3829 = vsub.f32 %v3805, %v3817
      %v3830 = vsub.f32 %v3806, %v3818
      %v3831 = vsub.f32 %v3807, %v3819
      %v3832 = vsub.f32 %v3808, %v3820
      %v3833 = vsub.f32 %v3809, %v3821
      %v3834 = vsub.f32 %v3810, %v3822
      %v3835 = vsub.f32 %v3811, %v3823
      %v3836 = vsub.f32 %v3812, %v3824
      %v3837 = vadd.f32 %v3825, 0.001
      %v3838 = vadd.f32 %v3826, 0.001
      %v3839 = vadd.f32 %v3827, 0.001
      %v3840 = vadd.f32 %v3828, 0.001
      %v3841 = vadd.f32 %v3829, 0.001
      %v3842 = vadd.f32 %v3830, 0.001
      %v3843 = vadd.f32 %v3831, 0.001
      %v3844 = vadd.f32 %v3832, 0.001
      %v3845 = vadd.f32 %v3833, 0.001
      %v3846 = vadd.f32 %v3834, 0.001
      %v3847 = vadd.f32 %v3835, 0.001
      %v3848 = vadd.f32 %v3836, 0.001
      %v3849 = vrsqrt.pop %v3837
      %v3850 = vrsqrt.pop %v3838
      %v3851 = vrsqrt.pop %v3839
      %v3852 = vrsqrt.pop %v3840
      %v3853 = vrsqrt.pop %v3841
      %v3854 = vrsqrt.pop %v3842
      %v3855 = vrsqrt.pop %v3843
      %v3856 = vrsqrt.pop %v3844
      %v3857 = vrsqrt.pop %v3845
      %v3858 = vrsqrt.pop %v3846
      %v3859 = vrsqrt.pop %v3847
      %v3860 = vrsqrt.pop %v3848
      %v3861 = vld [vmem:[%s235] sm:$0xff]
      %v3862 = vld [vmem:[%s235 + $0x8] sm:$0xff]
      %v3863 = vld [vmem:[%s235 + $0x10] sm:$0xff]
      %v3864 = vld [vmem:[%s235 + $0x18] sm:$0xff]
      %v3865 = vld [vmem:[%s235 + $0x20] sm:$0xff]
      %v3866 = vld [vmem:[%s235 + $0x28] sm:$0xff]
      %v3867 = vld [vmem:[%s235 + $0x30] sm:$0xff]
      %v3868 = vld [vmem:[%s235 + $0x38] sm:$0xff]
      %v3869 = vld [vmem:[%s235 + $0x40] sm:$0xff]
      %v3870 = vld [vmem:[%s235 + $0x48] sm:$0xff]
      %v3871 = vld [vmem:[%s235 + $0x50] sm:$0xff]
      %v3872 = vld [vmem:[%s235 + $0x58] sm:$0xff]
      %v3873 = vmul.f32 %v3861, %v3849
      %v3874 = vmul.f32 %v3862, %v3850
      %v3875 = vmul.f32 %v3863, %v3851
      %v3876 = vmul.f32 %v3864, %v3852
      %v3877 = vmul.f32 %v3865, %v3853
      %v3878 = vmul.f32 %v3866, %v3854
      %v3879 = vmul.f32 %v3867, %v3855
      %v3880 = vmul.f32 %v3868, %v3856
      %v3881 = vmul.f32 %v3869, %v3857
      %v3882 = vmul.f32 %v3870, %v3858
      %v3883 = vmul.f32 %v3871, %v3859
      %v3884 = vmul.f32 %v3872, %v3860
      %v3885 = vld [vmem:[%s241] sm:$0xff]
      %v3886 = vld [vmem:[%s241 + $0x8] sm:$0xff]
      %v3887 = vld [vmem:[%s241 + $0x10] sm:$0xff]
      %v3888 = vld [vmem:[%s241 + $0x18] sm:$0xff]
      %v3889 = vld [vmem:[%s241 + $0x20] sm:$0xff]
      %v3890 = vld [vmem:[%s241 + $0x28] sm:$0xff]
      %v3891 = vld [vmem:[%s241 + $0x30] sm:$0xff]
      %v3892 = vld [vmem:[%s241 + $0x38] sm:$0xff]
      %v3893 = vld [vmem:[%s241 + $0x40] sm:$0xff]
      %v3894 = vld [vmem:[%s241 + $0x48] sm:$0xff]
      %v3895 = vld [vmem:[%s241 + $0x50] sm:$0xff]
      %v3896 = vld [vmem:[%s241 + $0x58] sm:$0xff]
      %v3897 = vmul.f32 %v3789, %v3873
      %v3898 = vmul.f32 %v3790, %v3874
      %v3899 = vmul.f32 %v3791, %v3875
      %v3900 = vmul.f32 %v3792, %v3876
      %v3901 = vmul.f32 %v3793, %v3877
      %v3902 = vmul.f32 %v3794, %v3878
      %v3903 = vmul.f32 %v3795, %v3879
      %v3904 = vmul.f32 %v3796, %v3880
      %v3905 = vmul.f32 %v3797, %v3881
      %v3906 = vmul.f32 %v3798, %v3882
      %v3907 = vmul.f32 %v3799, %v3883
      %v3908 = vmul.f32 %v3800, %v3884
      %v3909 = vsub.f32 %v3885, %v3897
      %v3910 = vsub.f32 %v3886, %v3898
      %v3911 = vsub.f32 %v3887, %v3899
      %v3912 = vsub.f32 %v3888, %v3900
      %v3913 = vsub.f32 %v3889, %v3901
      %v3914 = vsub.f32 %v3890, %v3902
      %v3915 = vsub.f32 %v3891, %v3903
      %v3916 = vsub.f32 %v3892, %v3904
      %v3917 = vsub.f32 %v3893, %v3905
      %v3918 = vsub.f32 %v3894, %v3906
      %v3919 = vsub.f32 %v3895, %v3907
      %v3920 = vsub.f32 %v3896, %v3908
      %3922 = vset.pattern.permute.xlu0 0
      %3923 = vperm.xlu0 %3922, %v3873
      %v3924 = vpop.permute.xlu0 %3923
      %3927 = vset.pattern.permute.xlu0 0
      %3928 = vperm.xlu0 %3927, %v3874
      %v3929 = vpop.permute.xlu0 %3928
      %3932 = vset.pattern.permute.xlu0 0
      %3933 = vperm.xlu0 %3932, %v3875
      %v3934 = vpop.permute.xlu0 %3933
      %3937 = vset.pattern.permute.xlu0 0
      %3938 = vperm.xlu0 %3937, %v3876
      %v3939 = vpop.permute.xlu0 %3938
      %3942 = vset.pattern.permute.xlu0 0
      %3943 = vperm.xlu0 %3942, %v3877
      %v3944 = vpop.permute.xlu0 %3943
      %3947 = vset.pattern.permute.xlu0 0
      %3948 = vperm.xlu0 %3947, %v3878
      %v3949 = vpop.permute.xlu0 %3948
      %3952 = vset.pattern.permute.xlu0 0
      %3953 = vperm.xlu0 %3952, %v3879
      %v3954 = vpop.permute.xlu0 %3953
      %3957 = vset.pattern.permute.xlu0 0
      %3958 = vperm.xlu0 %3957, %v3880
      %v3959 = vpop.permute.xlu0 %3958
      %3962 = vset.pattern.permute.xlu0 0
      %3963 = vperm.xlu0 %3962, %v3881
      %v3964 = vpop.permute.xlu0 %3963
      %3967 = vset.pattern.permute.xlu0 0
      %3968 = vperm.xlu0 %3967, %v3882
      %v3969 = vpop.permute.xlu0 %3968
      %3972 = vset.pattern.permute.xlu0 0
      %3973 = vperm.xlu0 %3972, %v3883
      %v3974 = vpop.permute.xlu0 %3973
      %3977 = vset.pattern.permute.xlu0 0
      %3978 = vperm.xlu0 %3977, %v3884
      %v3979 = vpop.permute.xlu0 %3978
      %v3981 = vmul.f32 %v3602, %v3924
      %v3982 = vmul.f32 %v3604, %v3924
      %v3983 = vmul.f32 %v3606, %v3929
      %v3984 = vmul.f32 %v3608, %v3929
      %v3985 = vmul.f32 %v3612, %v3934
      %v3986 = vmul.f32 %v3614, %v3934
      %v3987 = vmul.f32 %v3616, %v3939
      %v3988 = vmul.f32 %v3618, %v3939
      %v3989 = vmul.f32 %v3622, %v3944
      %v3990 = vmul.f32 %v3624, %v3944
      %v3991 = vmul.f32 %v3626, %v3949
      %v3992 = vmul.f32 %v3628, %v3949
      %v3993 = vmul.f32 %v3632, %v3954
      %v3994 = vmul.f32 %v3634, %v3954
      %v3995 = vmul.f32 %v3636, %v3959
      %v3996 = vmul.f32 %v3638, %v3959
      %v3997 = vmul.f32 %v3642, %v3964
      %v3998 = vmul.f32 %v3644, %v3964
      %v3999 = vmul.f32 %v3646, %v3969
      %v4000 = vmul.f32 %v3648, %v3969
      %v4001 = vmul.f32 %v3652, %v3974
      %v4002 = vmul.f32 %v3654, %v3974
      %v4003 = vmul.f32 %v3656, %v3979
      %v4004 = vmul.f32 %v3658, %v3979
      %4006 = vset.pattern.permute.xlu0 0
      %4007 = vperm.xlu0 %4006, %v3909
      %v4008 = vpop.permute.xlu0 %4007
      %4011 = vset.pattern.permute.xlu0 0
      %4012 = vperm.xlu0 %4011, %v3910
      %v4013 = vpop.permute.xlu0 %4012
      %4016 = vset.pattern.permute.xlu0 0
      %4017 = vperm.xlu0 %4016, %v3911
      %v4018 = vpop.permute.xlu0 %4017
      %4021 = vset.pattern.permute.xlu0 0
      %4022 = vperm.xlu0 %4021, %v3912
      %v4023 = vpop.permute.xlu0 %4022
      %4026 = vset.pattern.permute.xlu0 0
      %4027 = vperm.xlu0 %4026, %v3913
      %v4028 = vpop.permute.xlu0 %4027
      %4031 = vset.pattern.permute.xlu0 0
      %4032 = vperm.xlu0 %4031, %v3914
      %v4033 = vpop.permute.xlu0 %4032
      %4036 = vset.pattern.permute.xlu0 0
      %4037 = vperm.xlu0 %4036, %v3915
      %v4038 = vpop.permute.xlu0 %4037
      %4041 = vset.pattern.permute.xlu0 0
      %4042 = vperm.xlu0 %4041, %v3916
      %v4043 = vpop.permute.xlu0 %4042
      %4046 = vset.pattern.permute.xlu0 0
      %4047 = vperm.xlu0 %4046, %v3917
      %v4048 = vpop.permute.xlu0 %4047
      %4051 = vset.pattern.permute.xlu0 0
      %4052 = vperm.xlu0 %4051, %v3918
      %v4053 = vpop.permute.xlu0 %4052
      %4056 = vset.pattern.permute.xlu0 0
      %4057 = vperm.xlu0 %4056, %v3919
      %v4058 = vpop.permute.xlu0 %4057
      %4061 = vset.pattern.permute.xlu0 0
      %4062 = vperm.xlu0 %4061, %v3920
      %v4063 = vpop.permute.xlu0 %4062
      %v4065 = vadd.f32 %v3981, %v4008
      %v4066 = vadd.f32 %v3982, %v4008
      %v4067 = vadd.f32 %v3983, %v4013
      %v4068 = vadd.f32 %v3984, %v4013
      %v4069 = vadd.f32 %v3985, %v4018
      %v4070 = vadd.f32 %v3986, %v4018
      %v4071 = vadd.f32 %v3987, %v4023
      %v4072 = vadd.f32 %v3988, %v4023
      %v4073 = vadd.f32 %v3989, %v4028
      %v4074 = vadd.f32 %v3990, %v4028
      %v4075 = vadd.f32 %v3991, %v4033
      %v4076 = vadd.f32 %v3992, %v4033
      %v4077 = vadd.f32 %v3993, %v4038
      %v4078 = vadd.f32 %v3994, %v4038
      %v4079 = vadd.f32 %v3995, %v4043
      %v4080 = vadd.f32 %v3996, %v4043
      %v4081 = vadd.f32 %v3997, %v4048
      %v4082 = vadd.f32 %v3998, %v4048
      %v4083 = vadd.f32 %v3999, %v4053
      %v4084 = vadd.f32 %v4000, %v4053
      %v4085 = vadd.f32 %v4001, %v4058
      %v4086 = vadd.f32 %v4002, %v4058
      %v4087 = vadd.f32 %v4003, %v4063
      %v4088 = vadd.f32 %v4004, %v4063
      %4089 = vst [vmem:[%s248] sm:$0xff] %v4065
      %4090 = vst [vmem:[%s248 + $0x8] sm:$0xff] %v4066
      %4091 = vst [vmem:[%s248 + $0x10] sm:$0xff] %v4067
      %4092 = vst [vmem:[%s248 + $0x18] sm:$0xff] %v4068
      %4093 = vst [vmem:[%s248 + $0x20] sm:$0xff] %v4069
      %4094 = vst [vmem:[%s248 + $0x28] sm:$0xff] %v4070
      %4095 = vst [vmem:[%s248 + $0x30] sm:$0xff] %v4071
      %4096 = vst [vmem:[%s248 + $0x38] sm:$0xff] %v4072
      %4097 = vst [vmem:[%s248 + $0x40] sm:$0xff] %v4073
      %4098 = vst [vmem:[%s248 + $0x48] sm:$0xff] %v4074
      %4099 = vst [vmem:[%s248 + $0x50] sm:$0xff] %v4075
      %4100 = vst [vmem:[%s248 + $0x58] sm:$0xff] %v4076
      %4101 = vst [vmem:[%s248 + $0x60] sm:$0xff] %v4077
      %4102 = vst [vmem:[%s248 + $0x68] sm:$0xff] %v4078
      %4103 = vst [vmem:[%s248 + $0x70] sm:$0xff] %v4079
      %4104 = vst [vmem:[%s248 + $0x78] sm:$0xff] %v4080
      %4105 = vst [vmem:[%s248 + $0x80] sm:$0xff] %v4081
      %4106 = vst [vmem:[%s248 + $0x88] sm:$0xff] %v4082
      %4107 = vst [vmem:[%s248 + $0x90] sm:$0xff] %v4083
      %4108 = vst [vmem:[%s248 + $0x98] sm:$0xff] %v4084
      %4109 = vst [vmem:[%s248 + $0xa0] sm:$0xff] %v4085
      %4110 = vst [vmem:[%s248 + $0xa8] sm:$0xff] %v4086
      %4111 = vst [vmem:[%s248 + $0xb0] sm:$0xff] %v4087
      %4112 = vst [vmem:[%s248 + $0xb8] sm:$0xff] %v4088
      %s4113 = smul.u32 12, %s15
      %p4114 = scmp.lt.s32.totalorder %s4113, 23
      %s4115 = scalar_select %p4114, %s4113, 23
      %s4116 = smul.addr %s4115, 2
      %s4117 = smul.addr %s4116, 8
      %s4118 = scalar_lea.vmem %s4, %s4117
      // Predicated region
      $region37: #{conv2d_batchnorm.1} parent=35 // pred_check
        %p4119 = pneg %p132
      $region38: #{conv2d_batchnorm.1} parent=35 // pred_check_branch
        %4121 = sbr.rel (%p4119) target = $region40
      $region39: #{conv2d_batchnorm.1} parent=35 // pred_region
        %s4122 = smul.u32 12, %s15
      $region40: #{conv2d_batchnorm.1} parent=35 // pred_fallthru
        _
    $region36: #{conv2d_batchnorm.1} parent=5 // pred_fallthru
      _
    %p4123 = scmp.le.s32.totalorder 2, %s10
    // Predicated region
    $region41: #{conv2d_batchnorm.1} parent=5 // pred_check
      %p4124 = pneg %p4123
    $region42: #{conv2d_batchnorm.1} parent=5 // pred_check_branch
      %4126 = sbr.rel (%p4124) target = $region44
    $region43: #{conv2d_batchnorm.1} parent=5 // pred_region
      %s4127 = ssub.s32 %s10, 2
      // Predicated region
      $region45: #{conv2d_batchnorm.1} parent=43 // pred_check
        %p4128 = pneg %p138
      $region46: #{conv2d_batchnorm.1} parent=43 // pred_check_branch
        %4130 = sbr.rel (%p4128) target = $region48
      $region47: #{conv2d_batchnorm.1} parent=43 // pred_region
        %s4131 = smul.u32 12, %s16
        %p4132 = scmp.lt.s32.totalorder %s4131, 23
        %s4133 = scalar_select %p4132, %s4131, 23
        %s4134 = smul.addr %s4133, 2
        %s4135 = smul.addr %s4134, 8
        %s4136 = scalar_lea.vmem %s4, %s4135
      $region48: #{conv2d_batchnorm.1} parent=43 // pred_fallthru
        _
    $region44: #{conv2d_batchnorm.1} parent=5 // pred_fallthru
      _
  $region6: #{conv2d_batchnorm.1} parent=0 // loop_footer
    %s14 = sadd.s32 1, %s10
  $region7: #{conv2d_batchnorm.1} parent=0 // loop_footer_branch
    %9 = sbr.rel target = $region3
  $region8: #{conv2d_batchnorm.1} parent=0 // loop_exit
    _

</llo_original>
